<compile_context>
chip_gen: v7x
topology: tpu7x:2x2x1
jax: 0.10.0
libtpu: 0.0.40
codegen_flags: <defaults>
</compile_context>

<pallas_src>
import functools

import jax
import jax.numpy as jnp
from jax.experimental import pallas as pl
from jax.experimental.pallas import tpu as pltpu


# MXU operand dtype (f32 accumulation everywhere). Set to jnp.float32 for exact f32 parity.
MATMUL_DTYPE = jnp.bfloat16
MLP_HIDDEN_CHUNK = 512     # lane-aligned slab width for the MLP hidden dimension


# ----------------------------------------------------------------------------
# Shared math (used by both the Pallas kernel and the pure-JAX reference)
# ----------------------------------------------------------------------------
def mdot(a, b):
    """a @ b with bf16 MXU operands and f32 accumulation."""
    return jnp.dot(a.astype(MATMUL_DTYPE), b.astype(MATMUL_DTYPE),
                   preferred_element_type=jnp.float32)


def mdot_nt(a, b):
    """a @ b.T (contract last dims) with bf16 MXU operands and f32 accumulation."""
    return jax.lax.dot_general(a.astype(MATMUL_DTYPE), b.astype(MATMUL_DTYPE),
                               (((1,), (1,)), ((), ())),
                               preferred_element_type=jnp.float32)


def layer_norm(x, g, b, eps=1e-5):
    # PyTorch LayerNorm semantics (biased variance, eps=1e-5); f32 throughout.
    mu = jnp.mean(x, axis=-1, keepdims=True)
    var = jnp.mean((x - mu) ** 2, axis=-1, keepdims=True)
    return (x - mu) * jax.lax.rsqrt(var + eps) * g + b


def quick_gelu(x):
    return x * jax.nn.sigmoid(1.702 * x)


def mlp(t, wfc_t, bfc, wpr_t, bpr):
    """QuickGELU MLP, hidden dim computed in lane-aligned chunks.
    wfc_t/wpr_t/bfc/bpr may be Pallas refs (kernel) or arrays (reference)."""
    H = wfc_t.shape[1]
    step = H if H <= MLP_HIDDEN_CHUNK else MLP_HIDDEN_CHUNK
    acc = None
    for c0 in range(0, H, step):
        cw = min(step, H - c0)
        h = quick_gelu(mdot(t, wfc_t[:, c0:c0 + cw]) + bfc[:, c0:c0 + cw])
        part = mdot(h, wpr_t[c0:c0 + cw, :])
        acc = part if acc is None else acc + part
    return acc + bpr[...]


def v_branch(x_in, v2, wout_t, bout, g2, b2, wfc_t, bfc, wpr_t, bpr):
    """LoCoOp v-branch: out_proj(v) + residual + MLP (only needed on the last layer)."""
    v_out = mdot(v2, wout_t[...]) + bout[...]
    v_res = v_out + x_in
    return v_res + mlp(layer_norm(v_res, g2[...], b2[...]), wfc_t, bfc, wpr_t, bpr)


def attention_heads(qkv, num_heads, Bt, Lp, key_mask, recip, store_group):
    """Per-sample multi-head attention on the flat (Bt*Lp, 3C) qkv.
    Heads are processed in 128-lane groups; each group's output is stored immediately."""
    C = qkv.shape[1] // 3
    dh = C // num_heads
    scale = 1.0 / float(dh) ** 0.5
    hpg = max(1, min(num_heads, 128 // dh))
    while num_heads % hpg:
        hpg -= 1
    gw = hpg * dh
    for b in range(Bt):
        r0 = b * Lp
        for g in range(num_heads // hpg):
            c0 = g * gw
            qg = qkv[r0:r0 + Lp, c0:c0 + gw]
            kg = qkv[r0:r0 + Lp, C + c0:C + c0 + gw]
            vg = qkv[r0:r0 + Lp, 2 * C + c0:2 * C + c0 + gw]
            outs = []
            for h in range(hpg):
                s0 = h * dh
                s = mdot_nt(qg[:, s0:s0 + dh] * scale, kg[:, s0:s0 + dh])   # (Lp, Lp)
                if key_mask is not None:
                    s = s + key_mask                                        # mask padded keys
                s = s - jnp.max(s, axis=-1, keepdims=True)
                e = jnp.exp(s)
                a = e * recip(jnp.sum(e, axis=-1, keepdims=True))
                outs.append(mdot(a, vg[:, s0:s0 + dh]))                     # (Lp, dh)
            grp = outs[0] if hpg == 1 else jnp.concatenate(outs, axis=-1)   # (Lp, gw)
            store_group(r0, c0, grp)                                        # aligned slab store


def block_standard(x, g1, b1, win_t, bin_, wout_t, bout, g2, b2, wfc_t, bfc, wpr_t, bpr,
                   num_heads, Bt, Lp, key_mask, recip, store_group, read_attn):
    """Standard residual branch of one ResidualAttentionBlock on the flat (Bt*Lp, C) tokens."""
    ln1x = layer_norm(x, g1[...], b1[...])
    qkv = mdot(ln1x, win_t[...]) + bin_[...]                  # (M, 3C)
    attention_heads(qkv, num_heads, Bt, Lp, key_mask, recip, store_group)
    attn_out = mdot(read_attn(), wout_t[...]) + bout[...]     # single K=C output projection
    x_new = x + attn_out
    x_new = x_new + mlp(layer_norm(x_new, g2[...], b2[...]), wfc_t, bfc, wpr_t, bpr)
    return x_new, qkv


# ----------------------------------------------------------------------------
# Fused Pallas kernel: grid = (batch_tiles, layers)
# ----------------------------------------------------------------------------
def vit_kernel(num_heads, n_tokens, Lp, Bt,
               patches_ref, w1t_ref, pos_ref, gpre_ref, bpre_ref,
               g1_ref, b1_ref, wint_ref, bin_ref, woutt_ref, bout_ref,
               g2_ref, b2_ref, wfct_ref, bfc_ref, wprt_ref, bpr_ref,
               gpost_ref, bpost_ref, proj_ref,
               xcls_ref, feat_ref,
               x_carry, attn_buf):
    l = pl.program_id(1)
    n_layers = pl.num_programs(1)
    C = x_carry.shape[1]

    # First layer step of each batch tile: fused patch embedding + class token (augmented
    # matmul column) + positional embedding + ln_pre, one dense full-block store.
    @pl.when(l == 0)
    def _():
        x0 = mdot(patches_ref[...], w1t_ref[...])             # (Bt*Lp, C)
        pos = pos_ref[...]
        if Bt > 1:
            pos = jnp.concatenate([pos] * Bt, axis=0)
        x_carry[...] = layer_norm(x0 + pos, gpre_ref[...], bpre_ref[...])

    x = x_carry[...]

    # Padded-key mask (hoisted once; padded tokens never influence real tokens).
    if Lp > n_tokens:
        kidx = jax.lax.broadcasted_iota(jnp.int32, (Lp, Lp), 1)
        key_mask = jnp.where(kidx < n_tokens, 0.0, -1e30).astype(jnp.float32)
    else:
        key_mask = None

    def store_group(r0, c0, val):
        attn_buf[r0:r0 + val.shape[0], c0:c0 + val.shape[1]] = val.astype(attn_buf.dtype)

    x_new, qkv = block_standard(
        x, g1_ref, b1_ref, wint_ref, bin_ref, woutt_ref, bout_ref,
        g2_ref, b2_ref, wfct_ref, bfc_ref, wprt_ref, bpr_ref,
        num_heads, Bt, Lp, key_mask,
        recip=lambda d: pl.reciprocal(d, approx=True),
        store_group=store_group,
        read_attn=lambda: attn_buf[...])
    x_carry[...] = x_new

    # Last layer: LoCoOp v-branch + head (ln_post + projection). Earlier layers skip this.
    @pl.when(l == n_layers - 1)
    def _():
        v2 = qkv[:, 2 * C:3 * C]
        v_res = v_branch(x, v2, woutt_ref, bout_ref, g2_ref, b2_ref,
                         wfct_ref, bfc_ref, wprt_ref, bpr_ref)
        gpost = gpost_ref[...]
        bpost = bpost_ref[...]
        proj = proj_ref[...]
        # One dense (M, D) store; the wrapper drops cls / pad rows.
        feat_ref[...] = mdot(layer_norm(v_res, gpost, bpost), proj).astype(feat_ref.dtype)
        cls_rows = []
        for b in range(Bt):
            r = b * Lp + (n_tokens - 1)                       # class token is the LAST real row
            cls_rows.append(mdot(layer_norm(x_new[r:r + 1, :], gpost, bpost), proj))
        xc = cls_rows[0] if Bt == 1 else jnp.concatenate(cls_rows, axis=0)
        xcls_ref[...] = xc.astype(xcls_ref.dtype)


# ----------------------------------------------------------------------------
# Wrapper
# ----------------------------------------------------------------------------
def extract_patches(x_nchw, p):
    """Conv2d(stride=kernel=p, no bias) as patch flattening (pure layout)."""
    B, Cin, H, W = x_nchw.shape
    Hp, Wp = H // p, W // p
    x = x_nchw.reshape(B, Cin, Hp, p, Wp, p)
    x = x.transpose(0, 2, 4, 1, 3, 5)                 # (B, Hp, Wp, Cin, p, p)
    return x.reshape(B, Hp * Wp, Cin * p * p)         # flatten order matches conv weight layout


def build_patches_padded(x_nchw, p, Lp):
    """(B, Lp, Din+1): patches in rows [0..Np-1], class-token indicator row at Np, zero padding.
    The indicator column makes the class embedding fall out of the same single matmul."""
    patches = extract_patches(x_nchw, p)              # (B, Np, Din)
    B, Np, Din = patches.shape
    rows = jnp.zeros((B, Lp, Din + 1), jnp.float32)
    rows = rows.at[:, :Np, :Din].set(patches)
    rows = rows.at[:, Np, Din].set(1.0)
    return rows


def _pick_batch_tile(B, cap=8):
    bt = min(B, cap)
    while B % bt:
        bt -= 1
    return bt


def _pick_vmem_limit():
    try:
        cap = pltpu.get_tpu_info().vmem_capacity_bytes
    except Exception:
        cap = 64 * 1024 * 1024
    return int(min(max(cap - 16 * 1024 * 1024, 32 * 1024 * 1024), 112 * 1024 * 1024))


def _cost_estimate(B, Bt, Lp, C, D, Din1, n_layers, heads):
    M = Bt * Lp
    num_bt = B // Bt
    per_layer_flops = 24 * M * C * C + 4 * Bt * Lp * Lp * C
    embed_flops = 2 * M * Din1 * C
    head_flops = 18 * M * C * C + 2 * M * C * D + 2 * Bt * C * D
    flops = num_bt * (n_layers * per_layer_flops + embed_flops + head_flops)
    transcendentals = num_bt * n_layers * (Bt * heads * Lp * Lp + 4 * M * C)
    w_bytes_layer = 2 * 12 * C * C + 4 * 16 * C
    bytes_accessed = (num_bt * n_layers * w_bytes_layer
                      + B * Lp * (Din1 + D + 1) * 4 + 2 * (Din1 + Lp + C + D) * C * 4)
    return pl.CostEstimate(flops=int(flops), transcendentals=int(transcendentals),
                           bytes_accessed=int(bytes_accessed))


def vit_forward_pallas(x_nchw, params, *, patch_size, heads, batch_tile=None):
    B, _, H, W = x_nchw.shape
    Np = (H // patch_size) * (W // patch_size)
    n_tokens = Np + 1
    Lp, C = params['pos'].shape
    D = params['proj'].shape[1]
    n_layers = params['win_t'].shape[0]

    Bt = _pick_batch_tile(B) if batch_tile is None else batch_tile
    assert B % Bt == 0
    num_bt = B // Bt
    M = Bt * Lp

    patches = build_patches_padded(x_nchw, patch_size, Lp)        # (B, Lp, Din+1)
    Din1 = patches.shape[-1]
    patches_flat = patches.reshape(num_bt, M, Din1)               # flat per batch tile

    def full(shape):
        nd = len(shape)
        return pl.BlockSpec(shape, lambda bt, l, _nd=nd: (0,) * _nd)

    def per_layer(shape2d):
        return pl.BlockSpec((None,) + shape2d, lambda bt, l: (l, 0, 0))

    in_specs = [
        pl.BlockSpec((None, M, Din1), lambda bt, l: (bt, 0, 0)),  # patches (per batch tile)
        full((Din1, C)),                                          # w1t_aug (incl. class embedding)
        full((Lp, C)),                                            # positional embedding (cls last)
        full((1, C)), full((1, C)),                               # ln_pre g, b
        per_layer((1, C)), per_layer((1, C)),                     # ln_1 g, b
        per_layer((C, 3 * C)), per_layer((1, 3 * C)),             # attn in_proj W^T, b
        per_layer((C, C)), per_layer((1, C)),                     # attn out_proj W^T, b
        per_layer((1, C)), per_layer((1, C)),                     # ln_2 g, b
        per_layer((C, 4 * C)), per_layer((1, 4 * C)),             # mlp c_fc W^T, b
        per_layer((4 * C, C)), per_layer((1, C)),                 # mlp c_proj W^T, b
        full((1, C)), full((1, C)),                               # ln_post g, b
        full((C, D)),                                             # proj
    ]
    out_specs = (
        pl.BlockSpec((None, Bt, D), lambda bt, l: (bt, 0, 0)),    # class-token projection
        pl.BlockSpec((None, M, D), lambda bt, l: (bt, 0, 0)),     # padded patch features
    )
    out_shape = (jax.ShapeDtypeStruct((num_bt, Bt, D), jnp.float32),
                 jax.ShapeDtypeStruct((num_bt, M, D), jnp.float32))

    x_cls, feat_pad = pl.pallas_call(
        functools.partial(vit_kernel, heads, n_tokens, Lp, Bt),
        grid=(num_bt, n_layers),
        in_specs=in_specs,
        out_specs=out_specs,
        out_shape=out_shape,
        scratch_shapes=[pltpu.VMEM((M, C), jnp.float32),          # activation carry across layers
                        pltpu.VMEM((M, C), MATMUL_DTYPE)],        # per-group attention assembly
        compiler_params=pltpu.CompilerParams(
            dimension_semantics=("parallel", "arbitrary"),
            vmem_limit_bytes=_pick_vmem_limit()),
        cost_estimate=_cost_estimate(B, Bt, Lp, C, D, Din1, n_layers, heads),
    )(patches_flat, params['w1t_aug'], params['pos'], params['ln_pre_g'], params['ln_pre_b'],
      params['g1'], params['b1'], params['win_t'], params['bin'], params['wout_t'], params['bout'],
      params['g2'], params['b2'], params['wfc_t'], params['bfc'], params['wpr_t'], params['bpr'],
      params['ln_post_g'], params['ln_post_b'], params['proj'])

    x_cls = x_cls.reshape(B, D)
    feat = feat_pad.reshape(B, Lp, D)[:, :Np, :]
    return x_cls, feat


# ----------------------------------------------------------------------------
# Pure-JAX reference (per-sample, un-padded, exact softmax division; same bf16 matmul casts)
# ----------------------------------------------------------------------------
def vit_forward_ref(x_nchw, params, *, patch_size, heads):
    B, _, H, W = x_nchw.shape
    Np = (H // patch_size) * (W // patch_size)
    n_tokens = Np + 1
    Lp, C = params['pos'].shape
    n_layers = params['win_t'].shape[0]
    dh = C // heads

    patches = build_patches_padded(x_nchw, patch_size, Lp)[:, :n_tokens, :]
    pos = params['pos'][:n_tokens]
    keys = ('g1', 'b1', 'win_t', 'bin', 'wout_t', 'bout', 'g2', 'b2', 'wfc_t', 'bfc', 'wpr_t', 'bpr')
    xcls_list, feat_list = [], []
    for bi in range(B):
        x = layer_norm(mdot(patches[bi], params['w1t_aug']) + pos,
                       params['ln_pre_g'], params['ln_pre_b'])
        v_res = None
        for li in range(n_layers):
            lp = {k: params[k][li] for k in keys}
            ln1x = layer_norm(x, lp['g1'], lp['b1'])
            qkv = mdot(ln1x, lp['win_t']) + lp['bin']
            q, k, v = qkv[:, :C], qkv[:, C:2 * C], qkv[:, 2 * C:]
            outs = []
            for h in range(heads):
                sl = slice(h * dh, (h + 1) * dh)
                s = mdot_nt(q[:, sl] * dh ** -0.5, k[:, sl])
                e = jnp.exp(s - jnp.max(s, axis=-1, keepdims=True))
                a = e / jnp.sum(e, axis=-1, keepdims=True)
                outs.append(mdot(a, v[:, sl]))
            attn_out = mdot(jnp.concatenate(outs, axis=-1), lp['wout_t']) + lp['bout']
            x_new = x + attn_out
            x_new = x_new + mlp(layer_norm(x_new, lp['g2'], lp['b2']),
                                lp['wfc_t'], lp['bfc'], lp['wpr_t'], lp['bpr'])
            if li == n_layers - 1:
                v_res = v_branch(x, v, lp['wout_t'], lp['bout'], lp['g2'], lp['b2'],
                                 lp['wfc_t'], lp['bfc'], lp['wpr_t'], lp['bpr'])
            x = x_new
        v_ln = layer_norm(v_res, params['ln_post_g'], params['ln_post_b'])
        feat_list.append(mdot(v_ln[:Np], params['proj']))
        x_cls = layer_norm(x[Np:Np + 1], params['ln_post_g'], params['ln_post_b'])
        xcls_list.append(mdot(x_cls, params['proj']))
    return jnp.concatenate(xcls_list, axis=0), jnp.stack(feat_list, axis=0)


# ----------------------------------------------------------------------------
# Deterministic synthetic parameters (shapes from the PyTorch module __init__),
# pre-laid-out for the kernel: class token LAST, tokens zero-padded to a multiple of 8.
# ----------------------------------------------------------------------------
def init_params(key, *, width, layers, patch_size, input_resolution, output_dim):
    C = width
    Din = 3 * patch_size * patch_size
    Np = (input_resolution // patch_size) ** 2
    n_tokens = Np + 1
    Lp = ((n_tokens + 7) // 8) * 8
    scale = C ** -0.5
    ks = jax.random.split(key, 6 + layers)

    def nrm(k, shape, s):
        return (s * jax.random.normal(k, shape)).astype(jnp.float32)

    conv_w = nrm(ks[0], (C, 3, patch_size, patch_size), Din ** -0.5)      # Conv2d weight
    w1t = jnp.transpose(conv_w.reshape(C, Din))                           # (Din, C)
    cls = nrm(ks[1], (1, C), scale)                                       # class_embedding
    pos_torch = nrm(ks[2], (n_tokens, C), scale)                          # row 0 = cls (torch order)
    pos = jnp.concatenate([pos_torch[1:], pos_torch[0:1],
                           jnp.zeros((Lp - n_tokens, C), jnp.float32)], axis=0)
    k_pre = jax.random.split(ks[3], 2)
    k_post = jax.random.split(ks[4], 2)
    params = dict(
        w1t_aug=jnp.concatenate([w1t, cls], axis=0).astype(MATMUL_DTYPE),  # (Din+1, C)
        pos=pos,
        ln_pre_g=(1.0 + 0.1 * jax.random.normal(k_pre[0], (1, C))).astype(jnp.float32),
        ln_pre_b=(0.1 * jax.random.normal(k_pre[1], (1, C))).astype(jnp.float32),
        ln_post_g=(1.0 + 0.1 * jax.random.normal(k_post[0], (1, C))).astype(jnp.float32),
        ln_post_b=(0.1 * jax.random.normal(k_post[1], (1, C))).astype(jnp.float32),
        proj=nrm(ks[5], (C, output_dim), scale).astype(MATMUL_DTYPE),
    )

    g1s, b1s, wins, bins, wouts, bouts, g2s, b2s, wfcs, bfcs, wprs, bprs = ([] for _ in range(12))
    for i in range(layers):
        bk = jax.random.split(ks[6 + i], 10)
        g1s.append((1.0 + 0.1 * jax.random.normal(bk[0], (1, C))).astype(jnp.float32))
        b1s.append((0.1 * jax.random.normal(bk[1], (1, C))).astype(jnp.float32))
        wins.append(jnp.transpose(nrm(bk[2], (3 * C, C), scale)))            # attn.in_proj_weight^T
        bins.append(nrm(bk[3], (1, 3 * C), 0.02))                            # attn.in_proj_bias
        wouts.append(jnp.transpose(nrm(bk[4], (C, C), scale)))               # attn.out_proj.weight^T
        bouts.append(nrm(bk[5], (1, C), 0.02))                               # attn.out_proj.bias
        g2s.append((1.0 + 0.1 * jax.random.normal(bk[6], (1, C))).astype(jnp.float32))
        b2s.append((0.1 * jax.random.normal(bk[7], (1, C))).astype(jnp.float32))
        wfcs.append(jnp.transpose(nrm(bk[8], (4 * C, C), scale)))            # mlp.c_fc.weight^T
        bfcs.append(jnp.zeros((1, 4 * C), jnp.float32))
        wprs.append(jnp.transpose(nrm(bk[9], (C, 4 * C), (4 * C) ** -0.5)))  # mlp.c_proj.weight^T
        bprs.append(jnp.zeros((1, C), jnp.float32))

    params.update(
        g1=jnp.stack(g1s), b1=jnp.stack(b1s),
        win_t=jnp.stack(wins).astype(MATMUL_DTYPE), bin=jnp.stack(bins),
        wout_t=jnp.stack(wouts).astype(MATMUL_DTYPE), bout=jnp.stack(bouts),
        g2=jnp.stack(g2s), b2=jnp.stack(b2s),
        wfc_t=jnp.stack(wfcs).astype(MATMUL_DTYPE), bfc=jnp.stack(bfcs),
        wpr_t=jnp.stack(wprs).astype(MATMUL_DTYPE), bpr=jnp.stack(bprs),
    )
    return params


# ----------------------------------------------------------------------------
if __name__ == "__main__":
    B = 2
    input_resolution = 16
    patch_size = 4            # -> 16 patches + 1 class token = 17 tokens (padded to 24)
    width = 32
    layers = 2
    heads = 4                 # head_dim = 8
    output_dim = 16

    key = jax.random.PRNGKey(0)
    kx, kp = jax.random.split(key)
    x = jax.random.normal(kx, (B, 3, input_resolution, input_resolution), jnp.float32)  # NCHW

    params = init_params(kp, width=width, layers=layers, patch_size=patch_size,
                         input_resolution=input_resolution, output_dim=output_dim)

    fwd = jax.jit(functools.partial(vit_forward_pallas, patch_size=patch_size, heads=heads))
    x_out, feat = fwd(x, params)
    jax.block_until_ready((x_out, feat))

    # sanity-check against a pure-JAX reference doing the same math (same bf16 matmul casts);
    # intended divergences: EUP approximate reciprocal in the kernel softmax, padded-key zeros.
    ref = jax.jit(functools.partial(vit_forward_ref, patch_size=patch_size, heads=heads))
    x_ref, feat_ref = ref(x, params)
    Np = (input_resolution // patch_size) ** 2
    assert x_out.shape == (B, output_dim) and feat.shape == (B, Np, output_dim)
    assert jnp.allclose(x_out, x_ref, atol=2e-2, rtol=2e-2), float(jnp.max(jnp.abs(x_out - x_ref)))
    assert jnp.allclose(feat, feat_ref, atol=2e-2, rtol=2e-2), float(jnp.max(jnp.abs(feat - feat_ref)))

    print("KERNEL_OK")
</pallas_src>

<mosaic_0001>
module attributes {stable_mosaic.version = 11 : i64} {
  func.func @vit_kernel(%arg0: i32, %arg1: i32, %arg2: memref<1x48x49xf32, #tpu.memory_space<vmem>>, %arg3: memref<49x32xbf16, #tpu.memory_space<vmem>>, %arg4: memref<24x32xf32, #tpu.memory_space<vmem>>, %arg5: memref<1x32xf32, #tpu.memory_space<vmem>>, %arg6: memref<1x32xf32, #tpu.memory_space<vmem>>, %arg7: memref<1x1x32xf32, #tpu.memory_space<vmem>>, %arg8: memref<1x1x32xf32, #tpu.memory_space<vmem>>, %arg9: memref<1x32x96xbf16, #tpu.memory_space<vmem>>, %arg10: memref<1x1x96xf32, #tpu.memory_space<vmem>>, %arg11: memref<1x32x32xbf16, #tpu.memory_space<vmem>>, %arg12: memref<1x1x32xf32, #tpu.memory_space<vmem>>, %arg13: memref<1x1x32xf32, #tpu.memory_space<vmem>>, %arg14: memref<1x1x32xf32, #tpu.memory_space<vmem>>, %arg15: memref<1x32x128xbf16, #tpu.memory_space<vmem>>, %arg16: memref<1x1x128xf32, #tpu.memory_space<vmem>>, %arg17: memref<1x128x32xbf16, #tpu.memory_space<vmem>>, %arg18: memref<1x1x32xf32, #tpu.memory_space<vmem>>, %arg19: memref<1x32xf32, #tpu.memory_space<vmem>>, %arg20: memref<1x32xf32, #tpu.memory_space<vmem>>, %arg21: memref<32x16xbf16, #tpu.memory_space<vmem>>, %arg22: memref<1x2x16xf32, #tpu.memory_space<vmem>>, %arg23: memref<1x48x16xf32, #tpu.memory_space<vmem>>, %arg24: memref<48x32xf32, #tpu.memory_space<vmem>>, %arg25: memref<48x32xbf16, #tpu.memory_space<vmem>>) attributes {dimension_semantics = [#tpu.dimension_semantics<parallel>, #tpu.dimension_semantics<arbitrary>], iteration_bounds = array<i64: 1, 2>, scalar_prefetch = 0 : i64, scratch_operands = 2 : i64, tpu.core_type = #tpu.core_type<tc>, window_params = [{transform_indices = @transform_0, window_bounds = array<i64: 1, 48, 49>}, {pipeline_mode = #tpu.pipeline_mode<synchronous>, transform_indices = @transform_1, window_bounds = array<i64: 49, 32>}, {pipeline_mode = #tpu.pipeline_mode<synchronous>, transform_indices = @transform_2, window_bounds = array<i64: 24, 32>}, {pipeline_mode = #tpu.pipeline_mode<synchronous>, transform_indices = @transform_3, window_bounds = array<i64: 1, 32>}, {pipeline_mode = #tpu.pipeline_mode<synchronous>, transform_indices = @transform_4, window_bounds = array<i64: 1, 32>}, {transform_indices = @transform_5, window_bounds = array<i64: 1, 1, 32>}, {transform_indices = @transform_6, window_bounds = array<i64: 1, 1, 32>}, {transform_indices = @transform_7, window_bounds = array<i64: 1, 32, 96>}, {transform_indices = @transform_8, window_bounds = array<i64: 1, 1, 96>}, {transform_indices = @transform_9, window_bounds = array<i64: 1, 32, 32>}, {transform_indices = @transform_10, window_bounds = array<i64: 1, 1, 32>}, {transform_indices = @transform_11, window_bounds = array<i64: 1, 1, 32>}, {transform_indices = @transform_12, window_bounds = array<i64: 1, 1, 32>}, {transform_indices = @transform_13, window_bounds = array<i64: 1, 32, 128>}, {transform_indices = @transform_14, window_bounds = array<i64: 1, 1, 128>}, {transform_indices = @transform_15, window_bounds = array<i64: 1, 128, 32>}, {transform_indices = @transform_16, window_bounds = array<i64: 1, 1, 32>}, {pipeline_mode = #tpu.pipeline_mode<synchronous>, transform_indices = @transform_17, window_bounds = array<i64: 1, 32>}, {pipeline_mode = #tpu.pipeline_mode<synchronous>, transform_indices = @transform_18, window_bounds = array<i64: 1, 32>}, {pipeline_mode = #tpu.pipeline_mode<synchronous>, transform_indices = @transform_19, window_bounds = array<i64: 32, 16>}, {transform_indices = @transform_20, window_bounds = array<i64: 1, 2, 16>}, {transform_indices = @transform_21, window_bounds = array<i64: 1, 48, 16>}]} {
    %c0_i32 = arith.constant 0 : i32
    %0 = arith.cmpi eq, %arg1, %c0_i32 : i32
    %1 = arith.extui %0 : i1 to i32
    %c0_i32_0 = arith.constant 0 : i32
    %2 = arith.cmpi ne, %1, %c0_i32_0 : i32
    scf.if %2 {
      %c0_103 = arith.constant 0 : index
      %c0_104 = arith.constant 0 : index
      %c0_105 = arith.constant 0 : index
      %296 = vector.load %arg2[%c0_103, %c0_104, %c0_105] : memref<1x48x49xf32, #tpu.memory_space<vmem>>, vector<1x48x49xf32>
      %297 = vector.shape_cast %296 : vector<1x48x49xf32> to vector<48x49xf32>
      %c0_106 = arith.constant 0 : index
      %c0_107 = arith.constant 0 : index
      %298 = vector.load %arg3[%c0_106, %c0_107] : memref<49x32xbf16, #tpu.memory_space<vmem>>, vector<49x32xbf16>
      %299 = arith.truncf %297 : vector<48x49xf32> to vector<48x49xbf16>
      %cst_108 = arith.constant dense<0.000000e+00> : vector<48x32xf32>
      %300 = tpu.matmul %299, %298, %cst_108 {dimension_numbers = #tpu.dot_dimension_numbers<[1], [0], [0], [1], [0, 0, 1, 1], [], []>} : vector<48x49xbf16>, vector<49x32xbf16>, vector<48x32xf32> -> vector<48x32xf32>
      %c0_109 = arith.constant 0 : index
      %c0_110 = arith.constant 0 : index
      %301 = vector.load %arg4[%c0_109, %c0_110] : memref<24x32xf32, #tpu.memory_space<vmem>>, vector<24x32xf32>
      %302 = tpu.concatenate %301, %301 in 0 : vector<24x32xf32>, vector<24x32xf32> -> vector<48x32xf32>
      %303 = arith.addf %300, %302 : vector<48x32xf32>
      %c0_111 = arith.constant 0 : index
      %c0_112 = arith.constant 0 : index
      %304 = vector.load %arg5[%c0_111, %c0_112] : memref<1x32xf32, #tpu.memory_space<vmem>>, vector<1x32xf32>
      %c0_113 = arith.constant 0 : index
      %c0_114 = arith.constant 0 : index
      %305 = vector.load %arg6[%c0_113, %c0_114] : memref<1x32xf32, #tpu.memory_space<vmem>>, vector<1x32xf32>
      %cst_115 = arith.constant dense<0.000000e+00> : vector<48xf32>
      %306 = vector.multi_reduction <add>, %303, %cst_115 [1] : vector<48x32xf32> to vector<48xf32>
      %307 = vector.shape_cast %306 : vector<48xf32> to vector<48x1xf32>
      %cst_116 = arith.constant 3.200000e+01 : f32
      %308 = vector.broadcast %cst_116 : f32 to vector<48x1xf32>
      %309 = arith.divf %307, %308 : vector<48x1xf32>
      %310 = vector.broadcast %309 : vector<48x1xf32> to vector<48x32xf32>
      %311 = arith.subf %303, %310 : vector<48x32xf32>
      %312 = arith.mulf %311, %311 : vector<48x32xf32>
      %cst_117 = arith.constant dense<0.000000e+00> : vector<48xf32>
      %313 = vector.multi_reduction <add>, %312, %cst_117 [1] : vector<48x32xf32> to vector<48xf32>
      %314 = vector.shape_cast %313 : vector<48xf32> to vector<48x1xf32>
      %cst_118 = arith.constant 3.200000e+01 : f32
      %315 = vector.broadcast %cst_118 : f32 to vector<48x1xf32>
      %316 = arith.divf %314, %315 : vector<48x1xf32>
      %317 = vector.broadcast %309 : vector<48x1xf32> to vector<48x32xf32>
      %318 = arith.subf %303, %317 : vector<48x32xf32>
      %cst_119 = arith.constant 9.99999974E-6 : f32
      %319 = vector.broadcast %cst_119 : f32 to vector<48x1xf32>
      %320 = arith.addf %316, %319 : vector<48x1xf32>
      %321 = math.rsqrt %320 : vector<48x1xf32>
      %322 = vector.broadcast %321 : vector<48x1xf32> to vector<48x32xf32>
      %323 = arith.mulf %318, %322 : vector<48x32xf32>
      %324 = vector.broadcast %304 : vector<1x32xf32> to vector<48x32xf32>
      %325 = arith.mulf %323, %324 : vector<48x32xf32>
      %326 = vector.broadcast %305 : vector<1x32xf32> to vector<48x32xf32>
      %327 = arith.addf %325, %326 : vector<48x32xf32>
      %c0_120 = arith.constant 0 : index
      %c0_121 = arith.constant 0 : index
      %328 = vector.load %arg24[%c0_120, %c0_121] : memref<48x32xf32, #tpu.memory_space<vmem>>, vector<48x32xf32>
      tpu.vector_store %arg24[%c0_120, %c0_121], %327 {strides = array<i32>} : memref<48x32xf32, #tpu.memory_space<vmem>>, vector<48x32xf32>,
    } else {
    }
    %c0 = arith.constant 0 : index
    %c0_1 = arith.constant 0 : index
    %3 = vector.load %arg24[%c0, %c0_1] : memref<48x32xf32, #tpu.memory_space<vmem>>, vector<48x32xf32>
    %4 = tpu.iota {dimensions = array<i32: 1>} : vector<24x24xi32>
    %c17_i32 = arith.constant 17 : i32
    %5 = vector.broadcast %c17_i32 : i32 to vector<24x24xi32>
    %6 = arith.cmpi slt, %4, %5 : vector<24x24xi32>
    %cst = arith.constant 0.000000e+00 : f32
    %cst_2 = arith.constant -1.000000e+30 : f32
    %7 = vector.broadcast %cst : f32 to vector<24x24xf32>
    %8 = vector.broadcast %cst_2 : f32 to vector<24x24xf32>
    %9 = arith.select %6, %7, %8 : vector<24x24xi1>, vector<24x24xf32>
    %c0_3 = arith.constant 0 : index
    %c0_4 = arith.constant 0 : index
    %c0_5 = arith.constant 0 : index
    %10 = vector.load %arg7[%c0_3, %c0_4, %c0_5] : memref<1x1x32xf32, #tpu.memory_space<vmem>>, vector<1x1x32xf32>
    %11 = vector.shape_cast %10 : vector<1x1x32xf32> to vector<1x32xf32>
    %c0_6 = arith.constant 0 : index
    %c0_7 = arith.constant 0 : index
    %c0_8 = arith.constant 0 : index
    %12 = vector.load %arg8[%c0_6, %c0_7, %c0_8] : memref<1x1x32xf32, #tpu.memory_space<vmem>>, vector<1x1x32xf32>
    %13 = vector.shape_cast %12 : vector<1x1x32xf32> to vector<1x32xf32>
    %cst_9 = arith.constant dense<0.000000e+00> : vector<48xf32>
    %14 = vector.multi_reduction <add>, %3, %cst_9 [1] : vector<48x32xf32> to vector<48xf32>
    %15 = vector.shape_cast %14 : vector<48xf32> to vector<48x1xf32>
    %cst_10 = arith.constant 3.200000e+01 : f32
    %16 = vector.broadcast %cst_10 : f32 to vector<48x1xf32>
    %17 = arith.divf %15, %16 : vector<48x1xf32>
    %18 = vector.broadcast %17 : vector<48x1xf32> to vector<48x32xf32>
    %19 = arith.subf %3, %18 : vector<48x32xf32>
    %20 = arith.mulf %19, %19 : vector<48x32xf32>
    %cst_11 = arith.constant dense<0.000000e+00> : vector<48xf32>
    %21 = vector.multi_reduction <add>, %20, %cst_11 [1] : vector<48x32xf32> to vector<48xf32>
    %22 = vector.shape_cast %21 : vector<48xf32> to vector<48x1xf32>
    %cst_12 = arith.constant 3.200000e+01 : f32
    %23 = vector.broadcast %cst_12 : f32 to vector<48x1xf32>
    %24 = arith.divf %22, %23 : vector<48x1xf32>
    %25 = vector.broadcast %17 : vector<48x1xf32> to vector<48x32xf32>
    %26 = arith.subf %3, %25 : vector<48x32xf32>
    %cst_13 = arith.constant 9.99999974E-6 : f32
    %27 = vector.broadcast %cst_13 : f32 to vector<48x1xf32>
    %28 = arith.addf %24, %27 : vector<48x1xf32>
    %29 = math.rsqrt %28 : vector<48x1xf32>
    %30 = vector.broadcast %29 : vector<48x1xf32> to vector<48x32xf32>
    %31 = arith.mulf %26, %30 : vector<48x32xf32>
    %32 = vector.broadcast %11 : vector<1x32xf32> to vector<48x32xf32>
    %33 = arith.mulf %31, %32 : vector<48x32xf32>
    %34 = vector.broadcast %13 : vector<1x32xf32> to vector<48x32xf32>
    %35 = arith.addf %33, %34 : vector<48x32xf32>
    %c0_14 = arith.constant 0 : index
    %c0_15 = arith.constant 0 : index
    %c0_16 = arith.constant 0 : index
    %36 = vector.load %arg9[%c0_14, %c0_15, %c0_16] : memref<1x32x96xbf16, #tpu.memory_space<vmem>>, vector<1x32x96xbf16>
    %37 = vector.shape_cast %36 : vector<1x32x96xbf16> to vector<32x96xbf16>
    %38 = arith.truncf %35 : vector<48x32xf32> to vector<48x32xbf16>
    %cst_17 = arith.constant dense<0.000000e+00> : vector<48x96xf32>
    %39 = tpu.matmul %38, %37, %cst_17 {dimension_numbers = #tpu.dot_dimension_numbers<[1], [0], [0], [1], [0, 0, 1, 1], [], []>} : vector<48x32xbf16>, vector<32x96xbf16>, vector<48x96xf32> -> vector<48x96xf32>
    %c0_18 = arith.constant 0 : index
    %c0_19 = arith.constant 0 : index
    %c0_20 = arith.constant 0 : index
    %40 = vector.load %arg10[%c0_18, %c0_19, %c0_20] : memref<1x1x96xf32, #tpu.memory_space<vmem>>, vector<1x1x96xf32>
    %41 = vector.shape_cast %40 : vector<1x1x96xf32> to vector<1x96xf32>
    %42 = vector.broadcast %41 : vector<1x96xf32> to vector<48x96xf32>
    %43 = arith.addf %39, %42 : vector<48x96xf32>
    %44 = vector.extract_strided_slice %43 {offsets = [0, 0], sizes = [24, 32], strides = [1, 1]} : vector<48x96xf32> to vector<24x32xf32>
    %45 = vector.extract_strided_slice %43 {offsets = [0, 32], sizes = [24, 32], strides = [1, 1]} : vector<48x96xf32> to vector<24x32xf32>
    %46 = vector.extract_strided_slice %43 {offsets = [0, 64], sizes = [24, 32], strides = [1, 1]} : vector<48x96xf32> to vector<24x32xf32>
    %47 = vector.extract_strided_slice %44 {offsets = [0, 0], sizes = [24, 8], strides = [1, 1]} : vector<24x32xf32> to vector<24x8xf32>
    %cst_21 = arith.constant 0.353553385 : f32
    %48 = vector.broadcast %cst_21 : f32 to vector<24x8xf32>
    %49 = arith.mulf %47, %48 : vector<24x8xf32>
    %50 = vector.extract_strided_slice %45 {offsets = [0, 0], sizes = [24, 8], strides = [1, 1]} : vector<24x32xf32> to vector<24x8xf32>
    %51 = arith.truncf %49 : vector<24x8xf32> to vector<24x8xbf16>
    %52 = arith.truncf %50 : vector<24x8xf32> to vector<24x8xbf16>
    %cst_22 = arith.constant dense<0.000000e+00> : vector<24x24xf32>
    %53 = tpu.matmul %51, %52, %cst_22 {dimension_numbers = #tpu.dot_dimension_numbers<[1], [1], [0], [0], [0, 0, 1, 0], [], []>} : vector<24x8xbf16>, vector<24x8xbf16>, vector<24x24xf32> -> vector<24x24xf32>
    %54 = arith.addf %53, %9 : vector<24x24xf32>
    %cst_23 = arith.constant dense<0xFF800000> : vector<24xf32>
    %55 = vector.multi_reduction <maximumf>, %54, %cst_23 [1] : vector<24x24xf32> to vector<24xf32>
    %56 = vector.shape_cast %55 : vector<24xf32> to vector<24x1xf32>
    %57 = vector.broadcast %56 : vector<24x1xf32> to vector<24x24xf32>
    %58 = arith.subf %54, %57 : vector<24x24xf32>
    %59 = math.exp %58 : vector<24x24xf32>
    %cst_24 = arith.constant dense<0.000000e+00> : vector<24xf32>
    %60 = vector.multi_reduction <add>, %59, %cst_24 [1] : vector<24x24xf32> to vector<24xf32>
    %61 = vector.shape_cast %60 : vector<24xf32> to vector<24x1xf32>
    %62 = tpu.reciprocal %61 {approx = true} : vector<24x1xf32> -> vector<24x1xf32>
    %63 = vector.broadcast %62 : vector<24x1xf32> to vector<24x24xf32>
    %64 = arith.mulf %59, %63 : vector<24x24xf32>
    %65 = vector.extract_strided_slice %46 {offsets = [0, 0], sizes = [24, 8], strides = [1, 1]} : vector<24x32xf32> to vector<24x8xf32>
    %66 = arith.truncf %64 : vector<24x24xf32> to vector<24x24xbf16>
    %67 = arith.truncf %65 : vector<24x8xf32> to vector<24x8xbf16>
    %cst_25 = arith.constant dense<0.000000e+00> : vector<24x8xf32>
    %68 = tpu.matmul %66, %67, %cst_25 {dimension_numbers = #tpu.dot_dimension_numbers<[1], [0], [0], [1], [0, 0, 1, 1], [], []>} : vector<24x24xbf16>, vector<24x8xbf16>, vector<24x8xf32> -> vector<24x8xf32>
    %69 = vector.extract_strided_slice %44 {offsets = [0, 8], sizes = [24, 8], strides = [1, 1]} : vector<24x32xf32> to vector<24x8xf32>
    %cst_26 = arith.constant 0.353553385 : f32
    %70 = vector.broadcast %cst_26 : f32 to vector<24x8xf32>
    %71 = arith.mulf %69, %70 : vector<24x8xf32>
    %72 = vector.extract_strided_slice %45 {offsets = [0, 8], sizes = [24, 8], strides = [1, 1]} : vector<24x32xf32> to vector<24x8xf32>
    %73 = arith.truncf %71 : vector<24x8xf32> to vector<24x8xbf16>
    %74 = arith.truncf %72 : vector<24x8xf32> to vector<24x8xbf16>
    %cst_27 = arith.constant dense<0.000000e+00> : vector<24x24xf32>
    %75 = tpu.matmul %73, %74, %cst_27 {dimension_numbers = #tpu.dot_dimension_numbers<[1], [1], [0], [0], [0, 0, 1, 0], [], []>} : vector<24x8xbf16>, vector<24x8xbf16>, vector<24x24xf32> -> vector<24x24xf32>
    %76 = arith.addf %75, %9 : vector<24x24xf32>
    %cst_28 = arith.constant dense<0xFF800000> : vector<24xf32>
    %77 = vector.multi_reduction <maximumf>, %76, %cst_28 [1] : vector<24x24xf32> to vector<24xf32>
    %78 = vector.shape_cast %77 : vector<24xf32> to vector<24x1xf32>
    %79 = vector.broadcast %78 : vector<24x1xf32> to vector<24x24xf32>
    %80 = arith.subf %76, %79 : vector<24x24xf32>
    %81 = math.exp %80 : vector<24x24xf32>
    %cst_29 = arith.constant dense<0.000000e+00> : vector<24xf32>
    %82 = vector.multi_reduction <add>, %81, %cst_29 [1] : vector<24x24xf32> to vector<24xf32>
    %83 = vector.shape_cast %82 : vector<24xf32> to vector<24x1xf32>
    %84 = tpu.reciprocal %83 {approx = true} : vector<24x1xf32> -> vector<24x1xf32>
    %85 = vector.broadcast %84 : vector<24x1xf32> to vector<24x24xf32>
    %86 = arith.mulf %81, %85 : vector<24x24xf32>
    %87 = vector.extract_strided_slice %46 {offsets = [0, 8], sizes = [24, 8], strides = [1, 1]} : vector<24x32xf32> to vector<24x8xf32>
    %88 = arith.truncf %86 : vector<24x24xf32> to vector<24x24xbf16>
    %89 = arith.truncf %87 : vector<24x8xf32> to vector<24x8xbf16>
    %cst_30 = arith.constant dense<0.000000e+00> : vector<24x8xf32>
    %90 = tpu.matmul %88, %89, %cst_30 {dimension_numbers = #tpu.dot_dimension_numbers<[1], [0], [0], [1], [0, 0, 1, 1], [], []>} : vector<24x24xbf16>, vector<24x8xbf16>, vector<24x8xf32> -> vector<24x8xf32>
    %91 = vector.extract_strided_slice %44 {offsets = [0, 16], sizes = [24, 8], strides = [1, 1]} : vector<24x32xf32> to vector<24x8xf32>
    %cst_31 = arith.constant 0.353553385 : f32
    %92 = vector.broadcast %cst_31 : f32 to vector<24x8xf32>
    %93 = arith.mulf %91, %92 : vector<24x8xf32>
    %94 = vector.extract_strided_slice %45 {offsets = [0, 16], sizes = [24, 8], strides = [1, 1]} : vector<24x32xf32> to vector<24x8xf32>
    %95 = arith.truncf %93 : vector<24x8xf32> to vector<24x8xbf16>
    %96 = arith.truncf %94 : vector<24x8xf32> to vector<24x8xbf16>
    %cst_32 = arith.constant dense<0.000000e+00> : vector<24x24xf32>
    %97 = tpu.matmul %95, %96, %cst_32 {dimension_numbers = #tpu.dot_dimension_numbers<[1], [1], [0], [0], [0, 0, 1, 0], [], []>} : vector<24x8xbf16>, vector<24x8xbf16>, vector<24x24xf32> -> vector<24x24xf32>
    %98 = arith.addf %97, %9 : vector<24x24xf32>
    %cst_33 = arith.constant dense<0xFF800000> : vector<24xf32>
    %99 = vector.multi_reduction <maximumf>, %98, %cst_33 [1] : vector<24x24xf32> to vector<24xf32>
    %100 = vector.shape_cast %99 : vector<24xf32> to vector<24x1xf32>
    %101 = vector.broadcast %100 : vector<24x1xf32> to vector<24x24xf32>
    %102 = arith.subf %98, %101 : vector<24x24xf32>
    %103 = math.exp %102 : vector<24x24xf32>
    %cst_34 = arith.constant dense<0.000000e+00> : vector<24xf32>
    %104 = vector.multi_reduction <add>, %103, %cst_34 [1] : vector<24x24xf32> to vector<24xf32>
    %105 = vector.shape_cast %104 : vector<24xf32> to vector<24x1xf32>
    %106 = tpu.reciprocal %105 {approx = true} : vector<24x1xf32> -> vector<24x1xf32>
    %107 = vector.broadcast %106 : vector<24x1xf32> to vector<24x24xf32>
    %108 = arith.mulf %103, %107 : vector<24x24xf32>
    %109 = vector.extract_strided_slice %46 {offsets = [0, 16], sizes = [24, 8], strides = [1, 1]} : vector<24x32xf32> to vector<24x8xf32>
    %110 = arith.truncf %108 : vector<24x24xf32> to vector<24x24xbf16>
    %111 = arith.truncf %109 : vector<24x8xf32> to vector<24x8xbf16>
    %cst_35 = arith.constant dense<0.000000e+00> : vector<24x8xf32>
    %112 = tpu.matmul %110, %111, %cst_35 {dimension_numbers = #tpu.dot_dimension_numbers<[1], [0], [0], [1], [0, 0, 1, 1], [], []>} : vector<24x24xbf16>, vector<24x8xbf16>, vector<24x8xf32> -> vector<24x8xf32>
    %113 = vector.extract_strided_slice %44 {offsets = [0, 24], sizes = [24, 8], strides = [1, 1]} : vector<24x32xf32> to vector<24x8xf32>
    %cst_36 = arith.constant 0.353553385 : f32
    %114 = vector.broadcast %cst_36 : f32 to vector<24x8xf32>
    %115 = arith.mulf %113, %114 : vector<24x8xf32>
    %116 = vector.extract_strided_slice %45 {offsets = [0, 24], sizes = [24, 8], strides = [1, 1]} : vector<24x32xf32> to vector<24x8xf32>
    %117 = arith.truncf %115 : vector<24x8xf32> to vector<24x8xbf16>
    %118 = arith.truncf %116 : vector<24x8xf32> to vector<24x8xbf16>
    %cst_37 = arith.constant dense<0.000000e+00> : vector<24x24xf32>
    %119 = tpu.matmul %117, %118, %cst_37 {dimension_numbers = #tpu.dot_dimension_numbers<[1], [1], [0], [0], [0, 0, 1, 0], [], []>} : vector<24x8xbf16>, vector<24x8xbf16>, vector<24x24xf32> -> vector<24x24xf32>
    %120 = arith.addf %119, %9 : vector<24x24xf32>
    %cst_38 = arith.constant dense<0xFF800000> : vector<24xf32>
    %121 = vector.multi_reduction <maximumf>, %120, %cst_38 [1] : vector<24x24xf32> to vector<24xf32>
    %122 = vector.shape_cast %121 : vector<24xf32> to vector<24x1xf32>
    %123 = vector.broadcast %122 : vector<24x1xf32> to vector<24x24xf32>
    %124 = arith.subf %120, %123 : vector<24x24xf32>
    %125 = math.exp %124 : vector<24x24xf32>
    %cst_39 = arith.constant dense<0.000000e+00> : vector<24xf32>
    %126 = vector.multi_reduction <add>, %125, %cst_39 [1] : vector<24x24xf32> to vector<24xf32>
    %127 = vector.shape_cast %126 : vector<24xf32> to vector<24x1xf32>
    %128 = tpu.reciprocal %127 {approx = true} : vector<24x1xf32> -> vector<24x1xf32>
    %129 = vector.broadcast %128 : vector<24x1xf32> to vector<24x24xf32>
    %130 = arith.mulf %125, %129 : vector<24x24xf32>
    %131 = vector.extract_strided_slice %46 {offsets = [0, 24], sizes = [24, 8], strides = [1, 1]} : vector<24x32xf32> to vector<24x8xf32>
    %132 = arith.truncf %130 : vector<24x24xf32> to vector<24x24xbf16>
    %133 = arith.truncf %131 : vector<24x8xf32> to vector<24x8xbf16>
    %cst_40 = arith.constant dense<0.000000e+00> : vector<24x8xf32>
    %134 = tpu.matmul %132, %133, %cst_40 {dimension_numbers = #tpu.dot_dimension_numbers<[1], [0], [0], [1], [0, 0, 1, 1], [], []>} : vector<24x24xbf16>, vector<24x8xbf16>, vector<24x8xf32> -> vector<24x8xf32>
    %135 = tpu.concatenate %68, %90, %112, %134 in 1 : vector<24x8xf32>, vector<24x8xf32>, vector<24x8xf32>, vector<24x8xf32> -> vector<24x32xf32>
    %136 = arith.truncf %135 : vector<24x32xf32> to vector<24x32xbf16>
    %c0_41 = arith.constant 0 : index
    %c0_42 = arith.constant 0 : index
    %137 = vector.load %arg25[%c0_41, %c0_42] : memref<48x32xbf16, #tpu.memory_space<vmem>>, vector<24x32xbf16>
    tpu.vector_store %arg25[%c0_41, %c0_42], %136 {strides = array<i32>} : memref<48x32xbf16, #tpu.memory_space<vmem>>, vector<24x32xbf16>,
    %138 = vector.extract_strided_slice %43 {offsets = [24, 0], sizes = [24, 32], strides = [1, 1]} : vector<48x96xf32> to vector<24x32xf32>
    %139 = vector.extract_strided_slice %43 {offsets = [24, 32], sizes = [24, 32], strides = [1, 1]} : vector<48x96xf32> to vector<24x32xf32>
    %140 = vector.extract_strided_slice %43 {offsets = [24, 64], sizes = [24, 32], strides = [1, 1]} : vector<48x96xf32> to vector<24x32xf32>
    %141 = vector.extract_strided_slice %138 {offsets = [0, 0], sizes = [24, 8], strides = [1, 1]} : vector<24x32xf32> to vector<24x8xf32>
    %cst_43 = arith.constant 0.353553385 : f32
    %142 = vector.broadcast %cst_43 : f32 to vector<24x8xf32>
    %143 = arith.mulf %141, %142 : vector<24x8xf32>
    %144 = vector.extract_strided_slice %139 {offsets = [0, 0], sizes = [24, 8], strides = [1, 1]} : vector<24x32xf32> to vector<24x8xf32>
    %145 = arith.truncf %143 : vector<24x8xf32> to vector<24x8xbf16>
    %146 = arith.truncf %144 : vector<24x8xf32> to vector<24x8xbf16>
    %cst_44 = arith.constant dense<0.000000e+00> : vector<24x24xf32>
    %147 = tpu.matmul %145, %146, %cst_44 {dimension_numbers = #tpu.dot_dimension_numbers<[1], [1], [0], [0], [0, 0, 1, 0], [], []>} : vector<24x8xbf16>, vector<24x8xbf16>, vector<24x24xf32> -> vector<24x24xf32>
    %148 = arith.addf %147, %9 : vector<24x24xf32>
    %cst_45 = arith.constant dense<0xFF800000> : vector<24xf32>
    %149 = vector.multi_reduction <maximumf>, %148, %cst_45 [1] : vector<24x24xf32> to vector<24xf32>
    %150 = vector.shape_cast %149 : vector<24xf32> to vector<24x1xf32>
    %151 = vector.broadcast %150 : vector<24x1xf32> to vector<24x24xf32>
    %152 = arith.subf %148, %151 : vector<24x24xf32>
    %153 = math.exp %152 : vector<24x24xf32>
    %cst_46 = arith.constant dense<0.000000e+00> : vector<24xf32>
    %154 = vector.multi_reduction <add>, %153, %cst_46 [1] : vector<24x24xf32> to vector<24xf32>
    %155 = vector.shape_cast %154 : vector<24xf32> to vector<24x1xf32>
    %156 = tpu.reciprocal %155 {approx = true} : vector<24x1xf32> -> vector<24x1xf32>
    %157 = vector.broadcast %156 : vector<24x1xf32> to vector<24x24xf32>
    %158 = arith.mulf %153, %157 : vector<24x24xf32>
    %159 = vector.extract_strided_slice %140 {offsets = [0, 0], sizes = [24, 8], strides = [1, 1]} : vector<24x32xf32> to vector<24x8xf32>
    %160 = arith.truncf %158 : vector<24x24xf32> to vector<24x24xbf16>
    %161 = arith.truncf %159 : vector<24x8xf32> to vector<24x8xbf16>
    %cst_47 = arith.constant dense<0.000000e+00> : vector<24x8xf32>
    %162 = tpu.matmul %160, %161, %cst_47 {dimension_numbers = #tpu.dot_dimension_numbers<[1], [0], [0], [1], [0, 0, 1, 1], [], []>} : vector<24x24xbf16>, vector<24x8xbf16>, vector<24x8xf32> -> vector<24x8xf32>
    %163 = vector.extract_strided_slice %138 {offsets = [0, 8], sizes = [24, 8], strides = [1, 1]} : vector<24x32xf32> to vector<24x8xf32>
    %cst_48 = arith.constant 0.353553385 : f32
    %164 = vector.broadcast %cst_48 : f32 to vector<24x8xf32>
    %165 = arith.mulf %163, %164 : vector<24x8xf32>
    %166 = vector.extract_strided_slice %139 {offsets = [0, 8], sizes = [24, 8], strides = [1, 1]} : vector<24x32xf32> to vector<24x8xf32>
    %167 = arith.truncf %165 : vector<24x8xf32> to vector<24x8xbf16>
    %168 = arith.truncf %166 : vector<24x8xf32> to vector<24x8xbf16>
    %cst_49 = arith.constant dense<0.000000e+00> : vector<24x24xf32>
    %169 = tpu.matmul %167, %168, %cst_49 {dimension_numbers = #tpu.dot_dimension_numbers<[1], [1], [0], [0], [0, 0, 1, 0], [], []>} : vector<24x8xbf16>, vector<24x8xbf16>, vector<24x24xf32> -> vector<24x24xf32>
    %170 = arith.addf %169, %9 : vector<24x24xf32>
    %cst_50 = arith.constant dense<0xFF800000> : vector<24xf32>
    %171 = vector.multi_reduction <maximumf>, %170, %cst_50 [1] : vector<24x24xf32> to vector<24xf32>
    %172 = vector.shape_cast %171 : vector<24xf32> to vector<24x1xf32>
    %173 = vector.broadcast %172 : vector<24x1xf32> to vector<24x24xf32>
    %174 = arith.subf %170, %173 : vector<24x24xf32>
    %175 = math.exp %174 : vector<24x24xf32>
    %cst_51 = arith.constant dense<0.000000e+00> : vector<24xf32>
    %176 = vector.multi_reduction <add>, %175, %cst_51 [1] : vector<24x24xf32> to vector<24xf32>
    %177 = vector.shape_cast %176 : vector<24xf32> to vector<24x1xf32>
    %178 = tpu.reciprocal %177 {approx = true} : vector<24x1xf32> -> vector<24x1xf32>
    %179 = vector.broadcast %178 : vector<24x1xf32> to vector<24x24xf32>
    %180 = arith.mulf %175, %179 : vector<24x24xf32>
    %181 = vector.extract_strided_slice %140 {offsets = [0, 8], sizes = [24, 8], strides = [1, 1]} : vector<24x32xf32> to vector<24x8xf32>
    %182 = arith.truncf %180 : vector<24x24xf32> to vector<24x24xbf16>
    %183 = arith.truncf %181 : vector<24x8xf32> to vector<24x8xbf16>
    %cst_52 = arith.constant dense<0.000000e+00> : vector<24x8xf32>
    %184 = tpu.matmul %182, %183, %cst_52 {dimension_numbers = #tpu.dot_dimension_numbers<[1], [0], [0], [1], [0, 0, 1, 1], [], []>} : vector<24x24xbf16>, vector<24x8xbf16>, vector<24x8xf32> -> vector<24x8xf32>
    %185 = vector.extract_strided_slice %138 {offsets = [0, 16], sizes = [24, 8], strides = [1, 1]} : vector<24x32xf32> to vector<24x8xf32>
    %cst_53 = arith.constant 0.353553385 : f32
    %186 = vector.broadcast %cst_53 : f32 to vector<24x8xf32>
    %187 = arith.mulf %185, %186 : vector<24x8xf32>
    %188 = vector.extract_strided_slice %139 {offsets = [0, 16], sizes = [24, 8], strides = [1, 1]} : vector<24x32xf32> to vector<24x8xf32>
    %189 = arith.truncf %187 : vector<24x8xf32> to vector<24x8xbf16>
    %190 = arith.truncf %188 : vector<24x8xf32> to vector<24x8xbf16>
    %cst_54 = arith.constant dense<0.000000e+00> : vector<24x24xf32>
    %191 = tpu.matmul %189, %190, %cst_54 {dimension_numbers = #tpu.dot_dimension_numbers<[1], [1], [0], [0], [0, 0, 1, 0], [], []>} : vector<24x8xbf16>, vector<24x8xbf16>, vector<24x24xf32> -> vector<24x24xf32>
    %192 = arith.addf %191, %9 : vector<24x24xf32>
    %cst_55 = arith.constant dense<0xFF800000> : vector<24xf32>
    %193 = vector.multi_reduction <maximumf>, %192, %cst_55 [1] : vector<24x24xf32> to vector<24xf32>
    %194 = vector.shape_cast %193 : vector<24xf32> to vector<24x1xf32>
    %195 = vector.broadcast %194 : vector<24x1xf32> to vector<24x24xf32>
    %196 = arith.subf %192, %195 : vector<24x24xf32>
    %197 = math.exp %196 : vector<24x24xf32>
    %cst_56 = arith.constant dense<0.000000e+00> : vector<24xf32>
    %198 = vector.multi_reduction <add>, %197, %cst_56 [1] : vector<24x24xf32> to vector<24xf32>
    %199 = vector.shape_cast %198 : vector<24xf32> to vector<24x1xf32>
    %200 = tpu.reciprocal %199 {approx = true} : vector<24x1xf32> -> vector<24x1xf32>
    %201 = vector.broadcast %200 : vector<24x1xf32> to vector<24x24xf32>
    %202 = arith.mulf %197, %201 : vector<24x24xf32>
    %203 = vector.extract_strided_slice %140 {offsets = [0, 16], sizes = [24, 8], strides = [1, 1]} : vector<24x32xf32> to vector<24x8xf32>
    %204 = arith.truncf %202 : vector<24x24xf32> to vector<24x24xbf16>
    %205 = arith.truncf %203 : vector<24x8xf32> to vector<24x8xbf16>
    %cst_57 = arith.constant dense<0.000000e+00> : vector<24x8xf32>
    %206 = tpu.matmul %204, %205, %cst_57 {dimension_numbers = #tpu.dot_dimension_numbers<[1], [0], [0], [1], [0, 0, 1, 1], [], []>} : vector<24x24xbf16>, vector<24x8xbf16>, vector<24x8xf32> -> vector<24x8xf32>
    %207 = vector.extract_strided_slice %138 {offsets = [0, 24], sizes = [24, 8], strides = [1, 1]} : vector<24x32xf32> to vector<24x8xf32>
    %cst_58 = arith.constant 0.353553385 : f32
    %208 = vector.broadcast %cst_58 : f32 to vector<24x8xf32>
    %209 = arith.mulf %207, %208 : vector<24x8xf32>
    %210 = vector.extract_strided_slice %139 {offsets = [0, 24], sizes = [24, 8], strides = [1, 1]} : vector<24x32xf32> to vector<24x8xf32>
    %211 = arith.truncf %209 : vector<24x8xf32> to vector<24x8xbf16>
    %212 = arith.truncf %210 : vector<24x8xf32> to vector<24x8xbf16>
    %cst_59 = arith.constant dense<0.000000e+00> : vector<24x24xf32>
    %213 = tpu.matmul %211, %212, %cst_59 {dimension_numbers = #tpu.dot_dimension_numbers<[1], [1], [0], [0], [0, 0, 1, 0], [], []>} : vector<24x8xbf16>, vector<24x8xbf16>, vector<24x24xf32> -> vector<24x24xf32>
    %214 = arith.addf %213, %9 : vector<24x24xf32>
    %cst_60 = arith.constant dense<0xFF800000> : vector<24xf32>
    %215 = vector.multi_reduction <maximumf>, %214, %cst_60 [1] : vector<24x24xf32> to vector<24xf32>
    %216 = vector.shape_cast %215 : vector<24xf32> to vector<24x1xf32>
    %217 = vector.broadcast %216 : vector<24x1xf32> to vector<24x24xf32>
    %218 = arith.subf %214, %217 : vector<24x24xf32>
    %219 = math.exp %218 : vector<24x24xf32>
    %cst_61 = arith.constant dense<0.000000e+00> : vector<24xf32>
    %220 = vector.multi_reduction <add>, %219, %cst_61 [1] : vector<24x24xf32> to vector<24xf32>
    %221 = vector.shape_cast %220 : vector<24xf32> to vector<24x1xf32>
    %222 = tpu.reciprocal %221 {approx = true} : vector<24x1xf32> -> vector<24x1xf32>
    %223 = vector.broadcast %222 : vector<24x1xf32> to vector<24x24xf32>
    %224 = arith.mulf %219, %223 : vector<24x24xf32>
    %225 = vector.extract_strided_slice %140 {offsets = [0, 24], sizes = [24, 8], strides = [1, 1]} : vector<24x32xf32> to vector<24x8xf32>
    %226 = arith.truncf %224 : vector<24x24xf32> to vector<24x24xbf16>
    %227 = arith.truncf %225 : vector<24x8xf32> to vector<24x8xbf16>
    %cst_62 = arith.constant dense<0.000000e+00> : vector<24x8xf32>
    %228 = tpu.matmul %226, %227, %cst_62 {dimension_numbers = #tpu.dot_dimension_numbers<[1], [0], [0], [1], [0, 0, 1, 1], [], []>} : vector<24x24xbf16>, vector<24x8xbf16>, vector<24x8xf32> -> vector<24x8xf32>
    %229 = tpu.concatenate %162, %184, %206, %228 in 1 : vector<24x8xf32>, vector<24x8xf32>, vector<24x8xf32>, vector<24x8xf32> -> vector<24x32xf32>
    %230 = arith.truncf %229 : vector<24x32xf32> to vector<24x32xbf16>
    %c24 = arith.constant 24 : index
    %c0_63 = arith.constant 0 : index
    %231 = vector.load %arg25[%c24, %c0_63] : memref<48x32xbf16, #tpu.memory_space<vmem>>, vector<24x32xbf16>
    tpu.vector_store %arg25[%c24, %c0_63], %230 {strides = array<i32>} : memref<48x32xbf16, #tpu.memory_space<vmem>>, vector<24x32xbf16>,
    %c0_64 = arith.constant 0 : index
    %c0_65 = arith.constant 0 : index
    %232 = vector.load %arg25[%c0_64, %c0_65] : memref<48x32xbf16, #tpu.memory_space<vmem>>, vector<48x32xbf16>
    %c0_66 = arith.constant 0 : index
    %c0_67 = arith.constant 0 : index
    %c0_68 = arith.constant 0 : index
    %233 = vector.load %arg11[%c0_66, %c0_67, %c0_68] : memref<1x32x32xbf16, #tpu.memory_space<vmem>>, vector<1x32x32xbf16>
    %234 = vector.shape_cast %233 : vector<1x32x32xbf16> to vector<32x32xbf16>
    %cst_69 = arith.constant dense<0.000000e+00> : vector<48x32xf32>
    %235 = tpu.matmul %232, %234, %cst_69 {dimension_numbers = #tpu.dot_dimension_numbers<[1], [0], [0], [1], [0, 0, 1, 1], [], []>} : vector<48x32xbf16>, vector<32x32xbf16>, vector<48x32xf32> -> vector<48x32xf32>
    %c0_70 = arith.constant 0 : index
    %c0_71 = arith.constant 0 : index
    %c0_72 = arith.constant 0 : index
    %236 = vector.load %arg12[%c0_70, %c0_71, %c0_72] : memref<1x1x32xf32, #tpu.memory_space<vmem>>, vector<1x1x32xf32>
    %237 = vector.shape_cast %236 : vector<1x1x32xf32> to vector<1x32xf32>
    %238 = vector.broadcast %237 : vector<1x32xf32> to vector<48x32xf32>
    %239 = arith.addf %235, %238 : vector<48x32xf32>
    %240 = arith.addf %3, %239 : vector<48x32xf32>
    %c0_73 = arith.constant 0 : index
    %c0_74 = arith.constant 0 : index
    %c0_75 = arith.constant 0 : index
    %241 = vector.load %arg13[%c0_73, %c0_74, %c0_75] : memref<1x1x32xf32, #tpu.memory_space<vmem>>, vector<1x1x32xf32>
    %242 = vector.shape_cast %241 : vector<1x1x32xf32> to vector<1x32xf32>
    %c0_76 = arith.constant 0 : index
    %c0_77 = arith.constant 0 : index
    %c0_78 = arith.constant 0 : index
    %243 = vector.load %arg14[%c0_76, %c0_77, %c0_78] : memref<1x1x32xf32, #tpu.memory_space<vmem>>, vector<1x1x32xf32>
    %244 = vector.shape_cast %243 : vector<1x1x32xf32> to vector<1x32xf32>
    %cst_79 = arith.constant dense<0.000000e+00> : vector<48xf32>
    %245 = vector.multi_reduction <add>, %240, %cst_79 [1] : vector<48x32xf32> to vector<48xf32>
    %246 = vector.shape_cast %245 : vector<48xf32> to vector<48x1xf32>
    %cst_80 = arith.constant 3.200000e+01 : f32
    %247 = vector.broadcast %cst_80 : f32 to vector<48x1xf32>
    %248 = arith.divf %246, %247 : vector<48x1xf32>
    %249 = vector.broadcast %248 : vector<48x1xf32> to vector<48x32xf32>
    %250 = arith.subf %240, %249 : vector<48x32xf32>
    %251 = arith.mulf %250, %250 : vector<48x32xf32>
    %cst_81 = arith.constant dense<0.000000e+00> : vector<48xf32>
    %252 = vector.multi_reduction <add>, %251, %cst_81 [1] : vector<48x32xf32> to vector<48xf32>
    %253 = vector.shape_cast %252 : vector<48xf32> to vector<48x1xf32>
    %cst_82 = arith.constant 3.200000e+01 : f32
    %254 = vector.broadcast %cst_82 : f32 to vector<48x1xf32>
    %255 = arith.divf %253, %254 : vector<48x1xf32>
    %256 = vector.broadcast %248 : vector<48x1xf32> to vector<48x32xf32>
    %257 = arith.subf %240, %256 : vector<48x32xf32>
    %cst_83 = arith.constant 9.99999974E-6 : f32
    %258 = vector.broadcast %cst_83 : f32 to vector<48x1xf32>
    %259 = arith.addf %255, %258 : vector<48x1xf32>
    %260 = math.rsqrt %259 : vector<48x1xf32>
    %261 = vector.broadcast %260 : vector<48x1xf32> to vector<48x32xf32>
    %262 = arith.mulf %257, %261 : vector<48x32xf32>
    %263 = vector.broadcast %242 : vector<1x32xf32> to vector<48x32xf32>
    %264 = arith.mulf %262, %263 : vector<48x32xf32>
    %265 = vector.broadcast %244 : vector<1x32xf32> to vector<48x32xf32>
    %266 = arith.addf %264, %265 : vector<48x32xf32>
    %c0_84 = arith.constant 0 : index
    %c0_85 = arith.constant 0 : index
    %c0_86 = arith.constant 0 : index
    %267 = vector.load %arg15[%c0_84, %c0_85, %c0_86] : memref<1x32x128xbf16, #tpu.memory_space<vmem>>, vector<1x32x128xbf16>
    %268 = vector.shape_cast %267 : vector<1x32x128xbf16> to vector<32x128xbf16>
    %269 = arith.truncf %266 : vector<48x32xf32> to vector<48x32xbf16>
    %cst_87 = arith.constant dense<0.000000e+00> : vector<48x128xf32>
    %270 = tpu.matmul %269, %268, %cst_87 {dimension_numbers = #tpu.dot_dimension_numbers<[1], [0], [0], [1], [0, 0, 1, 1], [], []>} : vector<48x32xbf16>, vector<32x128xbf16>, vector<48x128xf32> -> vector<48x128xf32>
    %c0_88 = arith.constant 0 : index
    %c0_89 = arith.constant 0 : index
    %c0_90 = arith.constant 0 : index
    %271 = vector.load %arg16[%c0_88, %c0_89, %c0_90] : memref<1x1x128xf32, #tpu.memory_space<vmem>>, vector<1x1x128xf32>
    %272 = vector.shape_cast %271 : vector<1x1x128xf32> to vector<1x128xf32>
    %273 = vector.broadcast %272 : vector<1x128xf32> to vector<48x128xf32>
    %274 = arith.addf %270, %273 : vector<48x128xf32>
    %cst_91 = arith.constant 1.702000e+00 : f32
    %275 = vector.broadcast %cst_91 : f32 to vector<48x128xf32>
    %276 = arith.mulf %275, %274 : vector<48x128xf32>
    %277 = arith.negf %276 : vector<48x128xf32>
    %278 = math.exp %277 : vector<48x128xf32>
    %cst_92 = arith.constant 1.000000e+00 : f32
    %279 = vector.broadcast %cst_92 : f32 to vector<48x128xf32>
    %280 = arith.addf %279, %278 : vector<48x128xf32>
    %281 = arith.divf %279, %280 : vector<48x128xf32>
    %282 = arith.mulf %274, %281 : vector<48x128xf32>
    %c0_93 = arith.constant 0 : index
    %c0_94 = arith.constant 0 : index
    %c0_95 = arith.constant 0 : index
    %283 = vector.load %arg17[%c0_93, %c0_94, %c0_95] : memref<1x128x32xbf16, #tpu.memory_space<vmem>>, vector<1x128x32xbf16>
    %284 = vector.shape_cast %283 : vector<1x128x32xbf16> to vector<128x32xbf16>
    %285 = arith.truncf %282 : vector<48x128xf32> to vector<48x128xbf16>
    %cst_96 = arith.constant dense<0.000000e+00> : vector<48x32xf32>
    %286 = tpu.matmul %285, %284, %cst_96 {dimension_numbers = #tpu.dot_dimension_numbers<[1], [0], [0], [1], [0, 0, 1, 1], [], []>} : vector<48x128xbf16>, vector<128x32xbf16>, vector<48x32xf32> -> vector<48x32xf32>
    %c0_97 = arith.constant 0 : index
    %c0_98 = arith.constant 0 : index
    %c0_99 = arith.constant 0 : index
    %287 = vector.load %arg18[%c0_97, %c0_98, %c0_99] : memref<1x1x32xf32, #tpu.memory_space<vmem>>, vector<1x1x32xf32>
    %288 = vector.shape_cast %287 : vector<1x1x32xf32> to vector<1x32xf32>
    %289 = vector.broadcast %288 : vector<1x32xf32> to vector<48x32xf32>
    %290 = arith.addf %286, %289 : vector<48x32xf32>
    %291 = arith.addf %240, %290 : vector<48x32xf32>
    %c0_100 = arith.constant 0 : index
    %c0_101 = arith.constant 0 : index
    %292 = vector.load %arg24[%c0_100, %c0_101] : memref<48x32xf32, #tpu.memory_space<vmem>>, vector<48x32xf32>
    tpu.vector_store %arg24[%c0_100, %c0_101], %291 {strides = array<i32>} : memref<48x32xf32, #tpu.memory_space<vmem>>, vector<48x32xf32>,
    %c1_i32 = arith.constant 1 : i32
    %293 = arith.cmpi eq, %arg1, %c1_i32 : i32
    %294 = arith.extui %293 : i1 to i32
    %c0_i32_102 = arith.constant 0 : i32
    %295 = arith.cmpi ne, %294, %c0_i32_102 : i32
    scf.if %295 {
      %296 = vector.extract_strided_slice %43 {offsets = [0, 64], sizes = [48, 32], strides = [1, 1]} : vector<48x96xf32> to vector<48x32xf32>
      %c0_103 = arith.constant 0 : index
      %c0_104 = arith.constant 0 : index
      %c0_105 = arith.constant 0 : index
      %297 = vector.load %arg11[%c0_103, %c0_104, %c0_105] : memref<1x32x32xbf16, #tpu.memory_space<vmem>>, vector<1x32x32xbf16>
      %298 = vector.shape_cast %297 : vector<1x32x32xbf16> to vector<32x32xbf16>
      %299 = arith.truncf %296 : vector<48x32xf32> to vector<48x32xbf16>
      %cst_106 = arith.constant dense<0.000000e+00> : vector<48x32xf32>
      %300 = tpu.matmul %299, %298, %cst_106 {dimension_numbers = #tpu.dot_dimension_numbers<[1], [0], [0], [1], [0, 0, 1, 1], [], []>} : vector<48x32xbf16>, vector<32x32xbf16>, vector<48x32xf32> -> vector<48x32xf32>
      %c0_107 = arith.constant 0 : index
      %c0_108 = arith.constant 0 : index
      %c0_109 = arith.constant 0 : index
      %301 = vector.load %arg12[%c0_107, %c0_108, %c0_109] : memref<1x1x32xf32, #tpu.memory_space<vmem>>, vector<1x1x32xf32>
      %302 = vector.shape_cast %301 : vector<1x1x32xf32> to vector<1x32xf32>
      %303 = vector.broadcast %302 : vector<1x32xf32> to vector<48x32xf32>
      %304 = arith.addf %300, %303 : vector<48x32xf32>
      %305 = arith.addf %304, %3 : vector<48x32xf32>
      %c0_110 = arith.constant 0 : index
      %c0_111 = arith.constant 0 : index
      %c0_112 = arith.constant 0 : index
      %306 = vector.load %arg13[%c0_110, %c0_111, %c0_112] : memref<1x1x32xf32, #tpu.memory_space<vmem>>, vector<1x1x32xf32>
      %307 = vector.shape_cast %306 : vector<1x1x32xf32> to vector<1x32xf32>
      %c0_113 = arith.constant 0 : index
      %c0_114 = arith.constant 0 : index
      %c0_115 = arith.constant 0 : index
      %308 = vector.load %arg14[%c0_113, %c0_114, %c0_115] : memref<1x1x32xf32, #tpu.memory_space<vmem>>, vector<1x1x32xf32>
      %309 = vector.shape_cast %308 : vector<1x1x32xf32> to vector<1x32xf32>
      %cst_116 = arith.constant dense<0.000000e+00> : vector<48xf32>
      %310 = vector.multi_reduction <add>, %305, %cst_116 [1] : vector<48x32xf32> to vector<48xf32>
      %311 = vector.shape_cast %310 : vector<48xf32> to vector<48x1xf32>
      %cst_117 = arith.constant 3.200000e+01 : f32
      %312 = vector.broadcast %cst_117 : f32 to vector<48x1xf32>
      %313 = arith.divf %311, %312 : vector<48x1xf32>
      %314 = vector.broadcast %313 : vector<48x1xf32> to vector<48x32xf32>
      %315 = arith.subf %305, %314 : vector<48x32xf32>
      %316 = arith.mulf %315, %315 : vector<48x32xf32>
      %cst_118 = arith.constant dense<0.000000e+00> : vector<48xf32>
      %317 = vector.multi_reduction <add>, %316, %cst_118 [1] : vector<48x32xf32> to vector<48xf32>
      %318 = vector.shape_cast %317 : vector<48xf32> to vector<48x1xf32>
      %cst_119 = arith.constant 3.200000e+01 : f32
      %319 = vector.broadcast %cst_119 : f32 to vector<48x1xf32>
      %320 = arith.divf %318, %319 : vector<48x1xf32>
      %321 = vector.broadcast %313 : vector<48x1xf32> to vector<48x32xf32>
      %322 = arith.subf %305, %321 : vector<48x32xf32>
      %cst_120 = arith.constant 9.99999974E-6 : f32
      %323 = vector.broadcast %cst_120 : f32 to vector<48x1xf32>
      %324 = arith.addf %320, %323 : vector<48x1xf32>
      %325 = math.rsqrt %324 : vector<48x1xf32>
      %326 = vector.broadcast %325 : vector<48x1xf32> to vector<48x32xf32>
      %327 = arith.mulf %322, %326 : vector<48x32xf32>
      %328 = vector.broadcast %307 : vector<1x32xf32> to vector<48x32xf32>
      %329 = arith.mulf %327, %328 : vector<48x32xf32>
      %330 = vector.broadcast %309 : vector<1x32xf32> to vector<48x32xf32>
      %331 = arith.addf %329, %330 : vector<48x32xf32>
      %c0_121 = arith.constant 0 : index
      %c0_122 = arith.constant 0 : index
      %c0_123 = arith.constant 0 : index
      %332 = vector.load %arg15[%c0_121, %c0_122, %c0_123] : memref<1x32x128xbf16, #tpu.memory_space<vmem>>, vector<1x32x128xbf16>
      %333 = vector.shape_cast %332 : vector<1x32x128xbf16> to vector<32x128xbf16>
      %334 = arith.truncf %331 : vector<48x32xf32> to vector<48x32xbf16>
      %cst_124 = arith.constant dense<0.000000e+00> : vector<48x128xf32>
      %335 = tpu.matmul %334, %333, %cst_124 {dimension_numbers = #tpu.dot_dimension_numbers<[1], [0], [0], [1], [0, 0, 1, 1], [], []>} : vector<48x32xbf16>, vector<32x128xbf16>, vector<48x128xf32> -> vector<48x128xf32>
      %c0_125 = arith.constant 0 : index
      %c0_126 = arith.constant 0 : index
      %c0_127 = arith.constant 0 : index
      %336 = vector.load %arg16[%c0_125, %c0_126, %c0_127] : memref<1x1x128xf32, #tpu.memory_space<vmem>>, vector<1x1x128xf32>
      %337 = vector.shape_cast %336 : vector<1x1x128xf32> to vector<1x128xf32>
      %338 = vector.broadcast %337 : vector<1x128xf32> to vector<48x128xf32>
      %339 = arith.addf %335, %338 : vector<48x128xf32>
      %cst_128 = arith.constant 1.702000e+00 : f32
      %340 = vector.broadcast %cst_128 : f32 to vector<48x128xf32>
      %341 = arith.mulf %340, %339 : vector<48x128xf32>
      %342 = arith.negf %341 : vector<48x128xf32>
      %343 = math.exp %342 : vector<48x128xf32>
      %cst_129 = arith.constant 1.000000e+00 : f32
      %344 = vector.broadcast %cst_129 : f32 to vector<48x128xf32>
      %345 = arith.addf %344, %343 : vector<48x128xf32>
      %346 = arith.divf %344, %345 : vector<48x128xf32>
      %347 = arith.mulf %339, %346 : vector<48x128xf32>
      %c0_130 = arith.constant 0 : index
      %c0_131 = arith.constant 0 : index
      %c0_132 = arith.constant 0 : index
      %348 = vector.load %arg17[%c0_130, %c0_131, %c0_132] : memref<1x128x32xbf16, #tpu.memory_space<vmem>>, vector<1x128x32xbf16>
      %349 = vector.shape_cast %348 : vector<1x128x32xbf16> to vector<128x32xbf16>
      %350 = arith.truncf %347 : vector<48x128xf32> to vector<48x128xbf16>
      %cst_133 = arith.constant dense<0.000000e+00> : vector<48x32xf32>
      %351 = tpu.matmul %350, %349, %cst_133 {dimension_numbers = #tpu.dot_dimension_numbers<[1], [0], [0], [1], [0, 0, 1, 1], [], []>} : vector<48x128xbf16>, vector<128x32xbf16>, vector<48x32xf32> -> vector<48x32xf32>
      %c0_134 = arith.constant 0 : index
      %c0_135 = arith.constant 0 : index
      %c0_136 = arith.constant 0 : index
      %352 = vector.load %arg18[%c0_134, %c0_135, %c0_136] : memref<1x1x32xf32, #tpu.memory_space<vmem>>, vector<1x1x32xf32>
      %353 = vector.shape_cast %352 : vector<1x1x32xf32> to vector<1x32xf32>
      %354 = vector.broadcast %353 : vector<1x32xf32> to vector<48x32xf32>
      %355 = arith.addf %351, %354 : vector<48x32xf32>
      %356 = arith.addf %305, %355 : vector<48x32xf32>
      %c0_137 = arith.constant 0 : index
      %c0_138 = arith.constant 0 : index
      %357 = vector.load %arg19[%c0_137, %c0_138] : memref<1x32xf32, #tpu.memory_space<vmem>>, vector<1x32xf32>
      %c0_139 = arith.constant 0 : index
      %c0_140 = arith.constant 0 : index
      %358 = vector.load %arg20[%c0_139, %c0_140] : memref<1x32xf32, #tpu.memory_space<vmem>>, vector<1x32xf32>
      %c0_141 = arith.constant 0 : index
      %c0_142 = arith.constant 0 : index
      %359 = vector.load %arg21[%c0_141, %c0_142] : memref<32x16xbf16, #tpu.memory_space<vmem>>, vector<32x16xbf16>
      %cst_143 = arith.constant dense<0.000000e+00> : vector<48xf32>
      %360 = vector.multi_reduction <add>, %356, %cst_143 [1] : vector<48x32xf32> to vector<48xf32>
      %361 = vector.shape_cast %360 : vector<48xf32> to vector<48x1xf32>
      %cst_144 = arith.constant 3.200000e+01 : f32
      %362 = vector.broadcast %cst_144 : f32 to vector<48x1xf32>
      %363 = arith.divf %361, %362 : vector<48x1xf32>
      %364 = vector.broadcast %363 : vector<48x1xf32> to vector<48x32xf32>
      %365 = arith.subf %356, %364 : vector<48x32xf32>
      %366 = arith.mulf %365, %365 : vector<48x32xf32>
      %cst_145 = arith.constant dense<0.000000e+00> : vector<48xf32>
      %367 = vector.multi_reduction <add>, %366, %cst_145 [1] : vector<48x32xf32> to vector<48xf32>
      %368 = vector.shape_cast %367 : vector<48xf32> to vector<48x1xf32>
      %cst_146 = arith.constant 3.200000e+01 : f32
      %369 = vector.broadcast %cst_146 : f32 to vector<48x1xf32>
      %370 = arith.divf %368, %369 : vector<48x1xf32>
      %371 = vector.broadcast %363 : vector<48x1xf32> to vector<48x32xf32>
      %372 = arith.subf %356, %371 : vector<48x32xf32>
      %cst_147 = arith.constant 9.99999974E-6 : f32
      %373 = vector.broadcast %cst_147 : f32 to vector<48x1xf32>
      %374 = arith.addf %370, %373 : vector<48x1xf32>
      %375 = math.rsqrt %374 : vector<48x1xf32>
      %376 = vector.broadcast %375 : vector<48x1xf32> to vector<48x32xf32>
      %377 = arith.mulf %372, %376 : vector<48x32xf32>
      %378 = vector.broadcast %357 : vector<1x32xf32> to vector<48x32xf32>
      %379 = arith.mulf %377, %378 : vector<48x32xf32>
      %380 = vector.broadcast %358 : vector<1x32xf32> to vector<48x32xf32>
      %381 = arith.addf %379, %380 : vector<48x32xf32>
      %382 = arith.truncf %381 : vector<48x32xf32> to vector<48x32xbf16>
      %cst_148 = arith.constant dense<0.000000e+00> : vector<48x16xf32>
      %383 = tpu.matmul %382, %359, %cst_148 {dimension_numbers = #tpu.dot_dimension_numbers<[1], [0], [0], [1], [0, 0, 1, 1], [], []>} : vector<48x32xbf16>, vector<32x16xbf16>, vector<48x16xf32> -> vector<48x16xf32>
      %c0_149 = arith.constant 0 : index
      %c0_150 = arith.constant 0 : index
      %c0_151 = arith.constant 0 : index
      %384 = vector.load %arg23[%c0_149, %c0_150, %c0_151] : memref<1x48x16xf32, #tpu.memory_space<vmem>>, vector<1x48x16xf32>
      %385 = vector.shape_cast %384 : vector<1x48x16xf32> to vector<48x16xf32>
      %386 = vector.shape_cast %383 : vector<48x16xf32> to vector<1x48x16xf32>
      tpu.vector_store %arg23[%c0_149, %c0_150, %c0_151], %386 {strides = array<i32>} : memref<1x48x16xf32, #tpu.memory_space<vmem>>, vector<1x48x16xf32>,
      %387 = vector.extract_strided_slice %291 {offsets = [16, 0], sizes = [1, 32], strides = [1, 1]} : vector<48x32xf32> to vector<1x32xf32>
      %cst_152 = arith.constant dense<0.000000e+00> : vector<1xf32>
      %388 = vector.multi_reduction <add>, %387, %cst_152 [1] : vector<1x32xf32> to vector<1xf32>
      %389 = vector.shape_cast %388 : vector<1xf32> to vector<1x1xf32>
      %cst_153 = arith.constant 3.200000e+01 : f32
      %390 = vector.broadcast %cst_153 : f32 to vector<1x1xf32>
      %391 = arith.divf %389, %390 : vector<1x1xf32>
      %392 = vector.broadcast %391 : vector<1x1xf32> to vector<1x32xf32>
      %393 = arith.subf %387, %392 : vector<1x32xf32>
      %394 = arith.mulf %393, %393 : vector<1x32xf32>
      %cst_154 = arith.constant dense<0.000000e+00> : vector<1xf32>
      %395 = vector.multi_reduction <add>, %394, %cst_154 [1] : vector<1x32xf32> to vector<1xf32>
      %396 = vector.shape_cast %395 : vector<1xf32> to vector<1x1xf32>
      %cst_155 = arith.constant 3.200000e+01 : f32
      %397 = vector.broadcast %cst_155 : f32 to vector<1x1xf32>
      %398 = arith.divf %396, %397 : vector<1x1xf32>
      %399 = vector.broadcast %391 : vector<1x1xf32> to vector<1x32xf32>
      %400 = arith.subf %387, %399 : vector<1x32xf32>
      %cst_156 = arith.constant 9.99999974E-6 : f32
      %401 = vector.broadcast %cst_156 : f32 to vector<1x1xf32>
      %402 = arith.addf %398, %401 : vector<1x1xf32>
      %403 = math.rsqrt %402 : vector<1x1xf32>
      %404 = vector.broadcast %403 : vector<1x1xf32> to vector<1x32xf32>
      %405 = arith.mulf %400, %404 : vector<1x32xf32>
      %406 = arith.mulf %405, %357 : vector<1x32xf32>
      %407 = arith.addf %406, %358 : vector<1x32xf32>
      %408 = arith.truncf %407 : vector<1x32xf32> to vector<1x32xbf16>
      %cst_157 = arith.constant dense<0.000000e+00> : vector<1x16xf32>
      %409 = tpu.matmul %408, %359, %cst_157 {dimension_numbers = #tpu.dot_dimension_numbers<[1], [0], [0], [1], [0, 0, 1, 1], [], []>} : vector<1x32xbf16>, vector<32x16xbf16>, vector<1x16xf32> -> vector<1x16xf32>
      %410 = vector.extract_strided_slice %291 {offsets = [40, 0], sizes = [1, 32], strides = [1, 1]} : vector<48x32xf32> to vector<1x32xf32>
      %cst_158 = arith.constant dense<0.000000e+00> : vector<1xf32>
      %411 = vector.multi_reduction <add>, %410, %cst_158 [1] : vector<1x32xf32> to vector<1xf32>
      %412 = vector.shape_cast %411 : vector<1xf32> to vector<1x1xf32>
      %cst_159 = arith.constant 3.200000e+01 : f32
      %413 = vector.broadcast %cst_159 : f32 to vector<1x1xf32>
      %414 = arith.divf %412, %413 : vector<1x1xf32>
      %415 = vector.broadcast %414 : vector<1x1xf32> to vector<1x32xf32>
      %416 = arith.subf %410, %415 : vector<1x32xf32>
      %417 = arith.mulf %416, %416 : vector<1x32xf32>
      %cst_160 = arith.constant dense<0.000000e+00> : vector<1xf32>
      %418 = vector.multi_reduction <add>, %417, %cst_160 [1] : vector<1x32xf32> to vector<1xf32>
      %419 = vector.shape_cast %418 : vector<1xf32> to vector<1x1xf32>
      %cst_161 = arith.constant 3.200000e+01 : f32
      %420 = vector.broadcast %cst_161 : f32 to vector<1x1xf32>
      %421 = arith.divf %419, %420 : vector<1x1xf32>
      %422 = vector.broadcast %414 : vector<1x1xf32> to vector<1x32xf32>
      %423 = arith.subf %410, %422 : vector<1x32xf32>
      %cst_162 = arith.constant 9.99999974E-6 : f32
      %424 = vector.broadcast %cst_162 : f32 to vector<1x1xf32>
      %425 = arith.addf %421, %424 : vector<1x1xf32>
      %426 = math.rsqrt %425 : vector<1x1xf32>
      %427 = vector.broadcast %426 : vector<1x1xf32> to vector<1x32xf32>
      %428 = arith.mulf %423, %427 : vector<1x32xf32>
      %429 = arith.mulf %428, %357 : vector<1x32xf32>
      %430 = arith.addf %429, %358 : vector<1x32xf32>
      %431 = arith.truncf %430 : vector<1x32xf32> to vector<1x32xbf16>
      %cst_163 = arith.constant dense<0.000000e+00> : vector<1x16xf32>
      %432 = tpu.matmul %431, %359, %cst_163 {dimension_numbers = #tpu.dot_dimension_numbers<[1], [0], [0], [1], [0, 0, 1, 1], [], []>} : vector<1x32xbf16>, vector<32x16xbf16>, vector<1x16xf32> -> vector<1x16xf32>
      %433 = tpu.concatenate %409, %432 in 0 : vector<1x16xf32>, vector<1x16xf32> -> vector<2x16xf32>
      %c0_164 = arith.constant 0 : index
      %c0_165 = arith.constant 0 : index
      %c0_166 = arith.constant 0 : index
      %434 = vector.load %arg22[%c0_164, %c0_165, %c0_166] : memref<1x2x16xf32, #tpu.memory_space<vmem>>, vector<1x2x16xf32>
      %435 = vector.shape_cast %434 : vector<1x2x16xf32> to vector<2x16xf32>
      %436 = vector.shape_cast %433 : vector<2x16xf32> to vector<1x2x16xf32>
      tpu.vector_store %arg22[%c0_164, %c0_165, %c0_166], %436 {strides = array<i32>} : memref<1x2x16xf32, #tpu.memory_space<vmem>>, vector<1x2x16xf32>,
    } else {
    }
    return
  }
  func.func @transform_0(%arg0: i32, %arg1: i32) -> (i32, i32, i32) {
    %c0_i32 = arith.constant 0 : i32
    %c0_i32_0 = arith.constant 0 : i32
    %c0_i32_1 = arith.constant 0 : i32
    return %arg0, %c0_i32, %c0_i32_0 : i32, i32, i32
  }
  func.func @transform_1(%arg0: i32, %arg1: i32) -> (i32, i32) {
    %c0_i32 = arith.constant 0 : i32
    %c0_i32_0 = arith.constant 0 : i32
    %c0_i32_1 = arith.constant 0 : i32
    return %c0_i32, %c0_i32_0 : i32, i32
  }
  func.func @transform_2(%arg0: i32, %arg1: i32) -> (i32, i32) {
    %c0_i32 = arith.constant 0 : i32
    %c0_i32_0 = arith.constant 0 : i32
    %c0_i32_1 = arith.constant 0 : i32
    return %c0_i32, %c0_i32_0 : i32, i32
  }
  func.func @transform_3(%arg0: i32, %arg1: i32) -> (i32, i32) {
    %c0_i32 = arith.constant 0 : i32
    %c0_i32_0 = arith.constant 0 : i32
    %c0_i32_1 = arith.constant 0 : i32
    return %c0_i32, %c0_i32_0 : i32, i32
  }
  func.func @transform_4(%arg0: i32, %arg1: i32) -> (i32, i32) {
    %c0_i32 = arith.constant 0 : i32
    %c0_i32_0 = arith.constant 0 : i32
    %c0_i32_1 = arith.constant 0 : i32
    return %c0_i32, %c0_i32_0 : i32, i32
  }
  func.func @transform_5(%arg0: i32, %arg1: i32) -> (i32, i32, i32) {
    %c0_i32 = arith.constant 0 : i32
    %c0_i32_0 = arith.constant 0 : i32
    %c0_i32_1 = arith.constant 0 : i32
    return %arg1, %c0_i32, %c0_i32_0 : i32, i32, i32
  }
  func.func @transform_6(%arg0: i32, %arg1: i32) -> (i32, i32, i32) {
    %c0_i32 = arith.constant 0 : i32
    %c0_i32_0 = arith.constant 0 : i32
    %c0_i32_1 = arith.constant 0 : i32
    return %arg1, %c0_i32, %c0_i32_0 : i32, i32, i32
  }
  func.func @transform_7(%arg0: i32, %arg1: i32) -> (i32, i32, i32) {
    %c0_i32 = arith.constant 0 : i32
    %c0_i32_0 = arith.constant 0 : i32
    %c0_i32_1 = arith.constant 0 : i32
    return %arg1, %c0_i32, %c0_i32_0 : i32, i32, i32
  }
  func.func @transform_8(%arg0: i32, %arg1: i32) -> (i32, i32, i32) {
    %c0_i32 = arith.constant 0 : i32
    %c0_i32_0 = arith.constant 0 : i32
    %c0_i32_1 = arith.constant 0 : i32
    return %arg1, %c0_i32, %c0_i32_0 : i32, i32, i32
  }
  func.func @transform_9(%arg0: i32, %arg1: i32) -> (i32, i32, i32) {
    %c0_i32 = arith.constant 0 : i32
    %c0_i32_0 = arith.constant 0 : i32
    %c0_i32_1 = arith.constant 0 : i32
    return %arg1, %c0_i32, %c0_i32_0 : i32, i32, i32
  }
  func.func @transform_10(%arg0: i32, %arg1: i32) -> (i32, i32, i32) {
    %c0_i32 = arith.constant 0 : i32
    %c0_i32_0 = arith.constant 0 : i32
    %c0_i32_1 = arith.constant 0 : i32
    return %arg1, %c0_i32, %c0_i32_0 : i32, i32, i32
  }
  func.func @transform_11(%arg0: i32, %arg1: i32) -> (i32, i32, i32) {
    %c0_i32 = arith.constant 0 : i32
    %c0_i32_0 = arith.constant 0 : i32
    %c0_i32_1 = arith.constant 0 : i32
    return %arg1, %c0_i32, %c0_i32_0 : i32, i32, i32
  }
  func.func @transform_12(%arg0: i32, %arg1: i32) -> (i32, i32, i32) {
    %c0_i32 = arith.constant 0 : i32
    %c0_i32_0 = arith.constant 0 : i32
    %c0_i32_1 = arith.constant 0 : i32
    return %arg1, %c0_i32, %c0_i32_0 : i32, i32, i32
  }
  func.func @transform_13(%arg0: i32, %arg1: i32) -> (i32, i32, i32) {
    %c0_i32 = arith.constant 0 : i32
    %c0_i32_0 = arith.constant 0 : i32
    %c0_i32_1 = arith.constant 0 : i32
    return %arg1, %c0_i32, %c0_i32_0 : i32, i32, i32
  }
  func.func @transform_14(%arg0: i32, %arg1: i32) -> (i32, i32, i32) {
    %c0_i32 = arith.constant 0 : i32
    %c0_i32_0 = arith.constant 0 : i32
    %c0_i32_1 = arith.constant 0 : i32
    return %arg1, %c0_i32, %c0_i32_0 : i32, i32, i32
  }
  func.func @transform_15(%arg0: i32, %arg1: i32) -> (i32, i32, i32) {
    %c0_i32 = arith.constant 0 : i32
    %c0_i32_0 = arith.constant 0 : i32
    %c0_i32_1 = arith.constant 0 : i32
    return %arg1, %c0_i32, %c0_i32_0 : i32, i32, i32
  }
  func.func @transform_16(%arg0: i32, %arg1: i32) -> (i32, i32, i32) {
    %c0_i32 = arith.constant 0 : i32
    %c0_i32_0 = arith.constant 0 : i32
    %c0_i32_1 = arith.constant 0 : i32
    return %arg1, %c0_i32, %c0_i32_0 : i32, i32, i32
  }
  func.func @transform_17(%arg0: i32, %arg1: i32) -> (i32, i32) {
    %c0_i32 = arith.constant 0 : i32
    %c0_i32_0 = arith.constant 0 : i32
    %c0_i32_1 = arith.constant 0 : i32
    return %c0_i32, %c0_i32_0 : i32, i32
  }
  func.func @transform_18(%arg0: i32, %arg1: i32) -> (i32, i32) {
    %c0_i32 = arith.constant 0 : i32
    %c0_i32_0 = arith.constant 0 : i32
    %c0_i32_1 = arith.constant 0 : i32
    return %c0_i32, %c0_i32_0 : i32, i32
  }
  func.func @transform_19(%arg0: i32, %arg1: i32) -> (i32, i32) {
    %c0_i32 = arith.constant 0 : i32
    %c0_i32_0 = arith.constant 0 : i32
    %c0_i32_1 = arith.constant 0 : i32
    return %c0_i32, %c0_i32_0 : i32, i32
  }
  func.func @transform_20(%arg0: i32, %arg1: i32) -> (i32, i32, i32) {
    %c0_i32 = arith.constant 0 : i32
    %c0_i32_0 = arith.constant 0 : i32
    %c0_i32_1 = arith.constant 0 : i32
    return %arg0, %c0_i32, %c0_i32_0 : i32, i32, i32
  }
  func.func @transform_21(%arg0: i32, %arg1: i32) -> (i32, i32, i32) {
    %c0_i32 = arith.constant 0 : i32
    %c0_i32_0 = arith.constant 0 : i32
    %c0_i32_1 = arith.constant 0 : i32
    return %arg0, %c0_i32, %c0_i32_0 : i32, i32, i32
  }
}

</mosaic_0001>

<llo_original>
// kernel: vit_forward_pallas.1
$region0: #{vit_forward_pallas.1}
  #allocation0 [shape = 'u32[]', space=smem, size = 0x4, offset = 0x4, fixed_abs, tag = 'smem constant byte address 0x4 - core index']
  #allocation1 [shape = 'u32[144,128]{1,0:T(1,128)}', space=vmem, size = 0x12000, scoped, tag = 'internal scratch']
  #allocation2 [shape = 'f32[48,32]{1,0:T(8,128)}', space=vmem, size = 0x6000, scoped, tag = 'scratch operand']
  #allocation3 [shape = 'bf16[48,32]{1,0:T(16,128)(2,1)}', space=vmem, size = 0x3000, scoped, tag = 'scratch operand']
  %s0 = inlined_call_operand.vmem [shape: f32[1,48,49], index: 0, kind: input, shape index: {}]
  %s1 = inlined_call_operand.vmem [shape: bf16[49,32], index: 1, kind: input, shape index: {}]
  %s2 = inlined_call_operand.vmem [shape: f32[24,32], index: 2, kind: input, shape index: {}]
  %s3 = inlined_call_operand.vmem [shape: f32[1,32], index: 3, kind: input, shape index: {}]
  %s4 = inlined_call_operand.vmem [shape: f32[1,32], index: 4, kind: input, shape index: {}]
  %s5 = inlined_call_operand.vmem [shape: f32[2,1,32], index: 5, kind: input, shape index: {}]
  %s6 = inlined_call_operand.vmem [shape: f32[2,1,32], index: 6, kind: input, shape index: {}]
  %s7 = inlined_call_operand.vmem [shape: bf16[2,32,96], index: 7, kind: input, shape index: {}]
  %s8 = inlined_call_operand.vmem [shape: f32[2,1,96], index: 8, kind: input, shape index: {}]
  %s9 = inlined_call_operand.vmem [shape: bf16[2,32,32], index: 9, kind: input, shape index: {}]
  %s10 = inlined_call_operand.vmem [shape: f32[2,1,32], index: 10, kind: input, shape index: {}]
  %s11 = inlined_call_operand.vmem [shape: f32[2,1,32], index: 11, kind: input, shape index: {}]
  %s12 = inlined_call_operand.vmem [shape: f32[2,1,32], index: 12, kind: input, shape index: {}]
  %s13 = inlined_call_operand.vmem [shape: bf16[2,32,128], index: 13, kind: input, shape index: {}]
  %s14 = inlined_call_operand.vmem [shape: f32[2,1,128], index: 14, kind: input, shape index: {}]
  %s15 = inlined_call_operand.vmem [shape: bf16[2,128,32], index: 15, kind: input, shape index: {}]
  %s16 = inlined_call_operand.vmem [shape: f32[2,1,32], index: 16, kind: input, shape index: {}]
  %s17 = inlined_call_operand.vmem [shape: f32[1,32], index: 17, kind: input, shape index: {}]
  %s18 = inlined_call_operand.vmem [shape: f32[1,32], index: 18, kind: input, shape index: {}]
  %s19 = inlined_call_operand.vmem [shape: bf16[32,16], index: 19, kind: input, shape index: {}]
  %s20 = inlined_call_operand.hbm [shape: f32[1,2,16], index: 20, kind: output, shape index: {0}]
  %s21 = inlined_call_operand.vmem [shape: f32[1,48,16], index: 21, kind: output, shape index: {1}]
  %22 = xla_tuple %s20, %s21
  %s23 = sld [smem:[#allocation0]]
  $region129: #{vit_forward_pallas.1} parent=0
    _
  %s25 = ssub.s32 1, %s23
  %s26 = scalar_select 0, %s25, %s23
  $region1: #{vit_forward_pallas.1} parent=0
    #allocation4 [shape = 'u8[1024]{0}', space=vmem, size = 0x400, scoped, tag = 'output window, operand 0, single buffered']
    #allocation5 [shape = 's32[2]{0}', space=sflag, size = 0x8, scoped, tag = 'scoped memory for vit_forward_pallas.1']
    %27 = vsyncpa [#allocation5], 0
    loop: start=0, step=1, limit=4
    $region2: #{vit_forward_pallas.1} parent=1 // loop_pre_header
      _
    $region3: #{vit_forward_pallas.1} parent=1 // loop_header
      %s29 = sphi 0, %s33
      %p30 = scmp.ge.s32.totalorder %s29, 4
      %s36 = sphi 0, %s48
      %s37 = sphi 0, %s44
      %s38 = sphi 0, %s36
      %s39 = sphi 0, %s37
      %s40 = sphi 0, %s38
      %s41 = sphi 0, %s39
      %s51 = sphi 0, %s53
      %s54 = sphi 0, %s51
      %s55 = sphi 0, %s54
      %s71 = sphi 0, %s55
      %s75 = sphi 0, %s75
      %s77 = sphi 0, %s75
      %s78 = sphi 0, %s77
      %s92 = sphi 0, %s78
      %s96 = sphi 0, %s96
      %s98 = sphi 0, %s96
      %s99 = sphi 0, %s98
      %s113 = sphi 0, %s99
      %s117 = sphi 0, %s117
      %s119 = sphi 0, %s117
      %s120 = sphi 0, %s119
      %s134 = sphi 0, %s120
      %s138 = sphi 0, %s138
      %s140 = sphi 0, %s138
      %s141 = sphi 0, %s140
      %s155 = sphi 0, %s141
      %s161 = sphi 0, %s163
      %s164 = sphi 0, %s161
      %s165 = sphi 0, %s164
      %s181 = sphi 0, %s165
      %s187 = sphi 0, %s189
      %s190 = sphi 0, %s187
      %s191 = sphi 0, %s190
      %s207 = sphi 0, %s191
      %s213 = sphi 0, %s215
      %s216 = sphi 0, %s213
      %s217 = sphi 0, %s216
      %s233 = sphi 0, %s217
      %s239 = sphi 0, %s241
      %s242 = sphi 0, %s239
      %s243 = sphi 0, %s242
      %s259 = sphi 0, %s243
      %s265 = sphi 0, %s267
      %s268 = sphi 0, %s265
      %s269 = sphi 0, %s268
      %s285 = sphi 0, %s269
      %s291 = sphi 0, %s293
      %s294 = sphi 0, %s291
      %s295 = sphi 0, %s294
      %s311 = sphi 0, %s295
      %s317 = sphi 0, %s319
      %s320 = sphi 0, %s317
      %s321 = sphi 0, %s320
      %s337 = sphi 0, %s321
      %s343 = sphi 0, %s345
      %s346 = sphi 0, %s343
      %s347 = sphi 0, %s346
      %s363 = sphi 0, %s347
      %s369 = sphi 0, %s371
      %s372 = sphi 0, %s369
      %s373 = sphi 0, %s372
      %s389 = sphi 0, %s373
      %s395 = sphi 0, %s397
      %s398 = sphi 0, %s395
      %s399 = sphi 0, %s398
      %s415 = sphi 0, %s399
      %s421 = sphi 0, %s423
      %s424 = sphi 0, %s421
      %s425 = sphi 0, %s424
      %s441 = sphi 0, %s425
      %s447 = sphi 0, %s449
      %s450 = sphi 0, %s447
      %s451 = sphi 0, %s450
      %s467 = sphi 0, %s451
      %s471 = sphi 0, %s471
      %s473 = sphi 0, %s471
      %s474 = sphi 0, %s473
      %s488 = sphi 0, %s474
      %s492 = sphi 0, %s492
      %s494 = sphi 0, %s492
      %s495 = sphi 0, %s494
      %s509 = sphi 0, %s495
      %s513 = sphi 0, %s513
      %s515 = sphi 0, %s513
      %s516 = sphi 0, %s515
      %s530 = sphi 0, %s516
      %s536 = sphi 0, %s538
      %s539 = sphi 0, %s536
      %s540 = sphi 0, %s539
      %s556 = sphi 0, %s540
      %s562 = sphi 0, %s564
      %s565 = sphi 0, %s562
      %s566 = sphi 0, %s565
      %s582 = sphi 0, %s566
    $region4: #{vit_forward_pallas.1} parent=1 // loop_header_branch
      %32 = sbr.rel (%p30) target = $region8
    $region5: #{vit_forward_pallas.1} parent=1 // loop_body
      %s34 = ssub.s32 %s29, 1
      %s35 = ssub.s32 %s29, 2
      %s42 = sadd.s32 1, %s37
      %p43 = scmp.ge.s32.totalorder %s42, 2
      %s44 = scalar_select %p43, 0, %s42
      %s45 = sadd.s32 1, %s36
      %s46 = scalar_select %p43, %s45, %s36
      %p47 = scmp.ge.s32.totalorder %s46, 1
      %s48 = scalar_select %p47, 0, %s46
      %s49 = ssub.s32 %s36, %s48
      %p50 = scmp.eq.s32.totalorder %s49, 0
      %s52 = sadd.s32 %s51, 1
      %s53 = scalar_select %p50, %s51, %s52
      %p56 = pneg %p50
      %p57 = scmp.eq.s32.totalorder %s29, 1
      %p58 = por %p56, %p57
      %p59 = scmp.ne.s32.totalorder %s51, %s54
      %p60 = scmp.eq.s32.totalorder %s29, 0
      %p61 = por %p59, %p60
      %p62 = scmp.ne.s32.totalorder %s51, %s54
      %p63 = scmp.eq.s32.totalorder %s34, 1
      %p64 = por %p62, %p63
      %p65 = scmp.ne.s32.totalorder %s54, %s55
      %p66 = scmp.eq.s32.totalorder %s34, 0
      %p67 = por %p65, %p66
      %p68 = scmp.ne.s32.totalorder %s54, %s55
      %p69 = scmp.eq.s32.totalorder %s35, 1
      %p70 = por %p68, %p69
      %p72 = scmp.ne.s32.totalorder %s55, %s71
      %p73 = scmp.eq.s32.totalorder %s35, 0
      %p74 = por %p72, %p73
      %s76 = sadd.s32 %s75, 1
      %p79 = scmp.eq.s32.totalorder %s29, 1
      %p80 = scmp.ne.s32.totalorder %s75, %s77
      %p81 = scmp.eq.s32.totalorder %s29, 0
      %p82 = por %p80, %p81
      %p83 = scmp.ne.s32.totalorder %s75, %s77
      %p84 = scmp.eq.s32.totalorder %s34, 1
      %p85 = por %p83, %p84
      %p86 = scmp.ne.s32.totalorder %s77, %s78
      %p87 = scmp.eq.s32.totalorder %s34, 0
      %p88 = por %p86, %p87
      %p89 = scmp.ne.s32.totalorder %s77, %s78
      %p90 = scmp.eq.s32.totalorder %s35, 1
      %p91 = por %p89, %p90
      %p93 = scmp.ne.s32.totalorder %s78, %s92
      %p94 = scmp.eq.s32.totalorder %s35, 0
      %p95 = por %p93, %p94
      %s97 = sadd.s32 %s96, 1
      %p100 = scmp.eq.s32.totalorder %s29, 1
      %p101 = scmp.ne.s32.totalorder %s96, %s98
      %p102 = scmp.eq.s32.totalorder %s29, 0
      %p103 = por %p101, %p102
      %p104 = scmp.ne.s32.totalorder %s96, %s98
      %p105 = scmp.eq.s32.totalorder %s34, 1
      %p106 = por %p104, %p105
      %p107 = scmp.ne.s32.totalorder %s98, %s99
      %p108 = scmp.eq.s32.totalorder %s34, 0
      %p109 = por %p107, %p108
      %p110 = scmp.ne.s32.totalorder %s98, %s99
      %p111 = scmp.eq.s32.totalorder %s35, 1
      %p112 = por %p110, %p111
      %p114 = scmp.ne.s32.totalorder %s99, %s113
      %p115 = scmp.eq.s32.totalorder %s35, 0
      %p116 = por %p114, %p115
      %s118 = sadd.s32 %s117, 1
      %p121 = scmp.eq.s32.totalorder %s29, 1
      %p122 = scmp.ne.s32.totalorder %s117, %s119
      %p123 = scmp.eq.s32.totalorder %s29, 0
      %p124 = por %p122, %p123
      %p125 = scmp.ne.s32.totalorder %s117, %s119
      %p126 = scmp.eq.s32.totalorder %s34, 1
      %p127 = por %p125, %p126
      %p128 = scmp.ne.s32.totalorder %s119, %s120
      %p129 = scmp.eq.s32.totalorder %s34, 0
      %p130 = por %p128, %p129
      %p131 = scmp.ne.s32.totalorder %s119, %s120
      %p132 = scmp.eq.s32.totalorder %s35, 1
      %p133 = por %p131, %p132
      %p135 = scmp.ne.s32.totalorder %s120, %s134
      %p136 = scmp.eq.s32.totalorder %s35, 0
      %p137 = por %p135, %p136
      %s139 = sadd.s32 %s138, 1
      %p142 = scmp.eq.s32.totalorder %s29, 1
      %p143 = scmp.ne.s32.totalorder %s138, %s140
      %p144 = scmp.eq.s32.totalorder %s29, 0
      %p145 = por %p143, %p144
      %p146 = scmp.ne.s32.totalorder %s138, %s140
      %p147 = scmp.eq.s32.totalorder %s34, 1
      %p148 = por %p146, %p147
      %p149 = scmp.ne.s32.totalorder %s140, %s141
      %p150 = scmp.eq.s32.totalorder %s34, 0
      %p151 = por %p149, %p150
      %p152 = scmp.ne.s32.totalorder %s140, %s141
      %p153 = scmp.eq.s32.totalorder %s35, 1
      %p154 = por %p152, %p153
      %p156 = scmp.ne.s32.totalorder %s141, %s155
      %p157 = scmp.eq.s32.totalorder %s35, 0
      %p158 = por %p156, %p157
      %s159 = ssub.s32 %s37, %s44
      %p160 = scmp.eq.s32.totalorder %s159, 0
      %s162 = sadd.s32 %s161, 1
      %s163 = scalar_select %p160, %s161, %s162
      %p166 = pneg %p160
      %p167 = scmp.eq.s32.totalorder %s29, 1
      %p168 = por %p166, %p167
      %p169 = scmp.ne.s32.totalorder %s161, %s164
      %p170 = scmp.eq.s32.totalorder %s29, 0
      %p171 = por %p169, %p170
      %p172 = scmp.ne.s32.totalorder %s161, %s164
      %p173 = scmp.eq.s32.totalorder %s34, 1
      %p174 = por %p172, %p173
      %p175 = scmp.ne.s32.totalorder %s164, %s165
      %p176 = scmp.eq.s32.totalorder %s34, 0
      %p177 = por %p175, %p176
      %p178 = scmp.ne.s32.totalorder %s164, %s165
      %p179 = scmp.eq.s32.totalorder %s35, 1
      %p180 = por %p178, %p179
      %p182 = scmp.ne.s32.totalorder %s165, %s181
      %p183 = scmp.eq.s32.totalorder %s35, 0
      %p184 = por %p182, %p183
      %s185 = ssub.s32 %s37, %s44
      %p186 = scmp.eq.s32.totalorder %s185, 0
      %s188 = sadd.s32 %s187, 1
      %s189 = scalar_select %p186, %s187, %s188
      %p192 = pneg %p186
      %p193 = scmp.eq.s32.totalorder %s29, 1
      %p194 = por %p192, %p193
      %p195 = scmp.ne.s32.totalorder %s187, %s190
      %p196 = scmp.eq.s32.totalorder %s29, 0
      %p197 = por %p195, %p196
      %p198 = scmp.ne.s32.totalorder %s187, %s190
      %p199 = scmp.eq.s32.totalorder %s34, 1
      %p200 = por %p198, %p199
      %p201 = scmp.ne.s32.totalorder %s190, %s191
      %p202 = scmp.eq.s32.totalorder %s34, 0
      %p203 = por %p201, %p202
      %p204 = scmp.ne.s32.totalorder %s190, %s191
      %p205 = scmp.eq.s32.totalorder %s35, 1
      %p206 = por %p204, %p205
      %p208 = scmp.ne.s32.totalorder %s191, %s207
      %p209 = scmp.eq.s32.totalorder %s35, 0
      %p210 = por %p208, %p209
      %s211 = ssub.s32 %s37, %s44
      %p212 = scmp.eq.s32.totalorder %s211, 0
      %s214 = sadd.s32 %s213, 1
      %s215 = scalar_select %p212, %s213, %s214
      %p218 = pneg %p212
      %p219 = scmp.eq.s32.totalorder %s29, 1
      %p220 = por %p218, %p219
      %p221 = scmp.ne.s32.totalorder %s213, %s216
      %p222 = scmp.eq.s32.totalorder %s29, 0
      %p223 = por %p221, %p222
      %p224 = scmp.ne.s32.totalorder %s213, %s216
      %p225 = scmp.eq.s32.totalorder %s34, 1
      %p226 = por %p224, %p225
      %p227 = scmp.ne.s32.totalorder %s216, %s217
      %p228 = scmp.eq.s32.totalorder %s34, 0
      %p229 = por %p227, %p228
      %p230 = scmp.ne.s32.totalorder %s216, %s217
      %p231 = scmp.eq.s32.totalorder %s35, 1
      %p232 = por %p230, %p231
      %p234 = scmp.ne.s32.totalorder %s217, %s233
      %p235 = scmp.eq.s32.totalorder %s35, 0
      %p236 = por %p234, %p235
      %s237 = ssub.s32 %s37, %s44
      %p238 = scmp.eq.s32.totalorder %s237, 0
      %s240 = sadd.s32 %s239, 1
      %s241 = scalar_select %p238, %s239, %s240
      %p244 = pneg %p238
      %p245 = scmp.eq.s32.totalorder %s29, 1
      %p246 = por %p244, %p245
      %p247 = scmp.ne.s32.totalorder %s239, %s242
      %p248 = scmp.eq.s32.totalorder %s29, 0
      %p249 = por %p247, %p248
      %p250 = scmp.ne.s32.totalorder %s239, %s242
      %p251 = scmp.eq.s32.totalorder %s34, 1
      %p252 = por %p250, %p251
      %p253 = scmp.ne.s32.totalorder %s242, %s243
      %p254 = scmp.eq.s32.totalorder %s34, 0
      %p255 = por %p253, %p254
      %p256 = scmp.ne.s32.totalorder %s242, %s243
      %p257 = scmp.eq.s32.totalorder %s35, 1
      %p258 = por %p256, %p257
      %p260 = scmp.ne.s32.totalorder %s243, %s259
      %p261 = scmp.eq.s32.totalorder %s35, 0
      %p262 = por %p260, %p261
      %s263 = ssub.s32 %s37, %s44
      %p264 = scmp.eq.s32.totalorder %s263, 0
      %s266 = sadd.s32 %s265, 1
      %s267 = scalar_select %p264, %s265, %s266
      %p270 = pneg %p264
      %p271 = scmp.eq.s32.totalorder %s29, 1
      %p272 = por %p270, %p271
      %p273 = scmp.ne.s32.totalorder %s265, %s268
      %p274 = scmp.eq.s32.totalorder %s29, 0
      %p275 = por %p273, %p274
      %p276 = scmp.ne.s32.totalorder %s265, %s268
      %p277 = scmp.eq.s32.totalorder %s34, 1
      %p278 = por %p276, %p277
      %p279 = scmp.ne.s32.totalorder %s268, %s269
      %p280 = scmp.eq.s32.totalorder %s34, 0
      %p281 = por %p279, %p280
      %p282 = scmp.ne.s32.totalorder %s268, %s269
      %p283 = scmp.eq.s32.totalorder %s35, 1
      %p284 = por %p282, %p283
      %p286 = scmp.ne.s32.totalorder %s269, %s285
      %p287 = scmp.eq.s32.totalorder %s35, 0
      %p288 = por %p286, %p287
      %s289 = ssub.s32 %s37, %s44
      %p290 = scmp.eq.s32.totalorder %s289, 0
      %s292 = sadd.s32 %s291, 1
      %s293 = scalar_select %p290, %s291, %s292
      %p296 = pneg %p290
      %p297 = scmp.eq.s32.totalorder %s29, 1
      %p298 = por %p296, %p297
      %p299 = scmp.ne.s32.totalorder %s291, %s294
      %p300 = scmp.eq.s32.totalorder %s29, 0
      %p301 = por %p299, %p300
      %p302 = scmp.ne.s32.totalorder %s291, %s294
      %p303 = scmp.eq.s32.totalorder %s34, 1
      %p304 = por %p302, %p303
      %p305 = scmp.ne.s32.totalorder %s294, %s295
      %p306 = scmp.eq.s32.totalorder %s34, 0
      %p307 = por %p305, %p306
      %p308 = scmp.ne.s32.totalorder %s294, %s295
      %p309 = scmp.eq.s32.totalorder %s35, 1
      %p310 = por %p308, %p309
      %p312 = scmp.ne.s32.totalorder %s295, %s311
      %p313 = scmp.eq.s32.totalorder %s35, 0
      %p314 = por %p312, %p313
      %s315 = ssub.s32 %s37, %s44
      %p316 = scmp.eq.s32.totalorder %s315, 0
      %s318 = sadd.s32 %s317, 1
      %s319 = scalar_select %p316, %s317, %s318
      %p322 = pneg %p316
      %p323 = scmp.eq.s32.totalorder %s29, 1
      %p324 = por %p322, %p323
      %p325 = scmp.ne.s32.totalorder %s317, %s320
      %p326 = scmp.eq.s32.totalorder %s29, 0
      %p327 = por %p325, %p326
      %p328 = scmp.ne.s32.totalorder %s317, %s320
      %p329 = scmp.eq.s32.totalorder %s34, 1
      %p330 = por %p328, %p329
      %p331 = scmp.ne.s32.totalorder %s320, %s321
      %p332 = scmp.eq.s32.totalorder %s34, 0
      %p333 = por %p331, %p332
      %p334 = scmp.ne.s32.totalorder %s320, %s321
      %p335 = scmp.eq.s32.totalorder %s35, 1
      %p336 = por %p334, %p335
      %p338 = scmp.ne.s32.totalorder %s321, %s337
      %p339 = scmp.eq.s32.totalorder %s35, 0
      %p340 = por %p338, %p339
      %s341 = ssub.s32 %s37, %s44
      %p342 = scmp.eq.s32.totalorder %s341, 0
      %s344 = sadd.s32 %s343, 1
      %s345 = scalar_select %p342, %s343, %s344
      %p348 = pneg %p342
      %p349 = scmp.eq.s32.totalorder %s29, 1
      %p350 = por %p348, %p349
      %p351 = scmp.ne.s32.totalorder %s343, %s346
      %p352 = scmp.eq.s32.totalorder %s29, 0
      %p353 = por %p351, %p352
      %p354 = scmp.ne.s32.totalorder %s343, %s346
      %p355 = scmp.eq.s32.totalorder %s34, 1
      %p356 = por %p354, %p355
      %p357 = scmp.ne.s32.totalorder %s346, %s347
      %p358 = scmp.eq.s32.totalorder %s34, 0
      %p359 = por %p357, %p358
      %p360 = scmp.ne.s32.totalorder %s346, %s347
      %p361 = scmp.eq.s32.totalorder %s35, 1
      %p362 = por %p360, %p361
      %p364 = scmp.ne.s32.totalorder %s347, %s363
      %p365 = scmp.eq.s32.totalorder %s35, 0
      %p366 = por %p364, %p365
      %s367 = ssub.s32 %s37, %s44
      %p368 = scmp.eq.s32.totalorder %s367, 0
      %s370 = sadd.s32 %s369, 1
      %s371 = scalar_select %p368, %s369, %s370
      %p374 = pneg %p368
      %p375 = scmp.eq.s32.totalorder %s29, 1
      %p376 = por %p374, %p375
      %p377 = scmp.ne.s32.totalorder %s369, %s372
      %p378 = scmp.eq.s32.totalorder %s29, 0
      %p379 = por %p377, %p378
      %p380 = scmp.ne.s32.totalorder %s369, %s372
      %p381 = scmp.eq.s32.totalorder %s34, 1
      %p382 = por %p380, %p381
      %p383 = scmp.ne.s32.totalorder %s372, %s373
      %p384 = scmp.eq.s32.totalorder %s34, 0
      %p385 = por %p383, %p384
      %p386 = scmp.ne.s32.totalorder %s372, %s373
      %p387 = scmp.eq.s32.totalorder %s35, 1
      %p388 = por %p386, %p387
      %p390 = scmp.ne.s32.totalorder %s373, %s389
      %p391 = scmp.eq.s32.totalorder %s35, 0
      %p392 = por %p390, %p391
      %s393 = ssub.s32 %s37, %s44
      %p394 = scmp.eq.s32.totalorder %s393, 0
      %s396 = sadd.s32 %s395, 1
      %s397 = scalar_select %p394, %s395, %s396
      %p400 = pneg %p394
      %p401 = scmp.eq.s32.totalorder %s29, 1
      %p402 = por %p400, %p401
      %p403 = scmp.ne.s32.totalorder %s395, %s398
      %p404 = scmp.eq.s32.totalorder %s29, 0
      %p405 = por %p403, %p404
      %p406 = scmp.ne.s32.totalorder %s395, %s398
      %p407 = scmp.eq.s32.totalorder %s34, 1
      %p408 = por %p406, %p407
      %p409 = scmp.ne.s32.totalorder %s398, %s399
      %p410 = scmp.eq.s32.totalorder %s34, 0
      %p411 = por %p409, %p410
      %p412 = scmp.ne.s32.totalorder %s398, %s399
      %p413 = scmp.eq.s32.totalorder %s35, 1
      %p414 = por %p412, %p413
      %p416 = scmp.ne.s32.totalorder %s399, %s415
      %p417 = scmp.eq.s32.totalorder %s35, 0
      %p418 = por %p416, %p417
      %s419 = ssub.s32 %s37, %s44
      %p420 = scmp.eq.s32.totalorder %s419, 0
      %s422 = sadd.s32 %s421, 1
      %s423 = scalar_select %p420, %s421, %s422
      %p426 = pneg %p420
      %p427 = scmp.eq.s32.totalorder %s29, 1
      %p428 = por %p426, %p427
      %p429 = scmp.ne.s32.totalorder %s421, %s424
      %p430 = scmp.eq.s32.totalorder %s29, 0
      %p431 = por %p429, %p430
      %p432 = scmp.ne.s32.totalorder %s421, %s424
      %p433 = scmp.eq.s32.totalorder %s34, 1
      %p434 = por %p432, %p433
      %p435 = scmp.ne.s32.totalorder %s424, %s425
      %p436 = scmp.eq.s32.totalorder %s34, 0
      %p437 = por %p435, %p436
      %p438 = scmp.ne.s32.totalorder %s424, %s425
      %p439 = scmp.eq.s32.totalorder %s35, 1
      %p440 = por %p438, %p439
      %p442 = scmp.ne.s32.totalorder %s425, %s441
      %p443 = scmp.eq.s32.totalorder %s35, 0
      %p444 = por %p442, %p443
      %s445 = ssub.s32 %s37, %s44
      %p446 = scmp.eq.s32.totalorder %s445, 0
      %s448 = sadd.s32 %s447, 1
      %s449 = scalar_select %p446, %s447, %s448
      %p452 = pneg %p446
      %p453 = scmp.eq.s32.totalorder %s29, 1
      %p454 = por %p452, %p453
      %p455 = scmp.ne.s32.totalorder %s447, %s450
      %p456 = scmp.eq.s32.totalorder %s29, 0
      %p457 = por %p455, %p456
      %p458 = scmp.ne.s32.totalorder %s447, %s450
      %p459 = scmp.eq.s32.totalorder %s34, 1
      %p460 = por %p458, %p459
      %p461 = scmp.ne.s32.totalorder %s450, %s451
      %p462 = scmp.eq.s32.totalorder %s34, 0
      %p463 = por %p461, %p462
      %p464 = scmp.ne.s32.totalorder %s450, %s451
      %p465 = scmp.eq.s32.totalorder %s35, 1
      %p466 = por %p464, %p465
      %p468 = scmp.ne.s32.totalorder %s451, %s467
      %p469 = scmp.eq.s32.totalorder %s35, 0
      %p470 = por %p468, %p469
      %s472 = sadd.s32 %s471, 1
      %p475 = scmp.eq.s32.totalorder %s29, 1
      %p476 = scmp.ne.s32.totalorder %s471, %s473
      %p477 = scmp.eq.s32.totalorder %s29, 0
      %p478 = por %p476, %p477
      %p479 = scmp.ne.s32.totalorder %s471, %s473
      %p480 = scmp.eq.s32.totalorder %s34, 1
      %p481 = por %p479, %p480
      %p482 = scmp.ne.s32.totalorder %s473, %s474
      %p483 = scmp.eq.s32.totalorder %s34, 0
      %p484 = por %p482, %p483
      %p485 = scmp.ne.s32.totalorder %s473, %s474
      %p486 = scmp.eq.s32.totalorder %s35, 1
      %p487 = por %p485, %p486
      %p489 = scmp.ne.s32.totalorder %s474, %s488
      %p490 = scmp.eq.s32.totalorder %s35, 0
      %p491 = por %p489, %p490
      %s493 = sadd.s32 %s492, 1
      %p496 = scmp.eq.s32.totalorder %s29, 1
      %p497 = scmp.ne.s32.totalorder %s492, %s494
      %p498 = scmp.eq.s32.totalorder %s29, 0
      %p499 = por %p497, %p498
      %p500 = scmp.ne.s32.totalorder %s492, %s494
      %p501 = scmp.eq.s32.totalorder %s34, 1
      %p502 = por %p500, %p501
      %p503 = scmp.ne.s32.totalorder %s494, %s495
      %p504 = scmp.eq.s32.totalorder %s34, 0
      %p505 = por %p503, %p504
      %p506 = scmp.ne.s32.totalorder %s494, %s495
      %p507 = scmp.eq.s32.totalorder %s35, 1
      %p508 = por %p506, %p507
      %p510 = scmp.ne.s32.totalorder %s495, %s509
      %p511 = scmp.eq.s32.totalorder %s35, 0
      %p512 = por %p510, %p511
      %s514 = sadd.s32 %s513, 1
      %p517 = scmp.eq.s32.totalorder %s29, 1
      %p518 = scmp.ne.s32.totalorder %s513, %s515
      %p519 = scmp.eq.s32.totalorder %s29, 0
      %p520 = por %p518, %p519
      %p521 = scmp.ne.s32.totalorder %s513, %s515
      %p522 = scmp.eq.s32.totalorder %s34, 1
      %p523 = por %p521, %p522
      %p524 = scmp.ne.s32.totalorder %s515, %s516
      %p525 = scmp.eq.s32.totalorder %s34, 0
      %p526 = por %p524, %p525
      %p527 = scmp.ne.s32.totalorder %s515, %s516
      %p528 = scmp.eq.s32.totalorder %s35, 1
      %p529 = por %p527, %p528
      %p531 = scmp.ne.s32.totalorder %s516, %s530
      %p532 = scmp.eq.s32.totalorder %s35, 0
      %p533 = por %p531, %p532
      %s534 = ssub.s32 %s36, %s48
      %p535 = scmp.eq.s32.totalorder %s534, 0
      %s537 = sadd.s32 %s536, 1
      %s538 = scalar_select %p535, %s536, %s537
      %p541 = pneg %p535
      %p542 = scmp.eq.s32.totalorder %s29, 1
      %p543 = por %p541, %p542
      %p544 = scmp.ne.s32.totalorder %s536, %s539
      %p545 = scmp.eq.s32.totalorder %s29, 0
      %p546 = por %p544, %p545
      %p547 = scmp.ne.s32.totalorder %s536, %s539
      %p548 = scmp.eq.s32.totalorder %s34, 1
      %p549 = por %p547, %p548
      %p550 = scmp.ne.s32.totalorder %s539, %s540
      %p551 = scmp.eq.s32.totalorder %s34, 0
      %p552 = por %p550, %p551
      %p553 = scmp.ne.s32.totalorder %s539, %s540
      %p554 = scmp.eq.s32.totalorder %s35, 1
      %p555 = por %p553, %p554
      %p557 = scmp.ne.s32.totalorder %s540, %s556
      %p558 = scmp.eq.s32.totalorder %s35, 0
      %p559 = por %p557, %p558
      %s560 = ssub.s32 %s36, %s48
      %p561 = scmp.eq.s32.totalorder %s560, 0
      %s563 = sadd.s32 %s562, 1
      %s564 = scalar_select %p561, %s562, %s563
      %p567 = pneg %p561
      %p568 = scmp.eq.s32.totalorder %s29, 1
      %p569 = por %p567, %p568
      %p570 = scmp.ne.s32.totalorder %s562, %s565
      %p571 = scmp.eq.s32.totalorder %s29, 0
      %p572 = por %p570, %p571
      %p573 = scmp.ne.s32.totalorder %s562, %s565
      %p574 = scmp.eq.s32.totalorder %s34, 1
      %p575 = por %p573, %p574
      %p576 = scmp.ne.s32.totalorder %s565, %s566
      %p577 = scmp.eq.s32.totalorder %s34, 0
      %p578 = por %p576, %p577
      %p579 = scmp.ne.s32.totalorder %s565, %s566
      %p580 = scmp.eq.s32.totalorder %s35, 1
      %p581 = por %p579, %p580
      %p583 = scmp.ne.s32.totalorder %s566, %s582
      %p584 = scmp.eq.s32.totalorder %s35, 0
      %p585 = por %p583, %p584
      %p586 = scmp.le.s32.totalorder 1, %s29
      %p587 = scmp.lt.s32.totalorder %s29, 3
      %p588 = pnand %p586, %p587
      %p589 = pneg %p588
      // Predicated region
      $region9: #{vit_forward_pallas.1} parent=5 // pred_check
        _
      $region10: #{vit_forward_pallas.1} parent=5 // pred_check_branch
        %591 = sbr.rel (%p588) target = $region12
      $region11: #{vit_forward_pallas.1} parent=5 // pred_region
        %s592 = ssub.s32 %s29, 1
        // Predicated region
        $region13: #{vit_forward_pallas.1} parent=11 // pred_check
          %p593 = pneg %p67
        $region14: #{vit_forward_pallas.1} parent=11 // pred_check_branch
          %595 = sbr.rel (%p593) target = $region16
        $region15: #{vit_forward_pallas.1} parent=11 // pred_region
          %p596 = scmp.lt.s32.totalorder %s38, 0
          %s597 = scalar_select %p596, %s38, 0
          %s598 = smul.addr %s597, 6
          %s599 = smul.addr %s598, 8
          %s600 = scalar_lea.vmem %s0, %s599
        $region16: #{vit_forward_pallas.1} parent=11 // pred_fallthru
          _
        // Predicated region
        $region17: #{vit_forward_pallas.1} parent=11 // pred_check
          %p601 = pneg %p88
        $region18: #{vit_forward_pallas.1} parent=11 // pred_check_branch
          %603 = sbr.rel (%p601) target = $region20
        $region19: #{vit_forward_pallas.1} parent=11 // pred_region
          _
        $region20: #{vit_forward_pallas.1} parent=11 // pred_fallthru
          _
        // Predicated region
        $region21: #{vit_forward_pallas.1} parent=11 // pred_check
          %p604 = pneg %p109
        $region22: #{vit_forward_pallas.1} parent=11 // pred_check_branch
          %606 = sbr.rel (%p604) target = $region24
        $region23: #{vit_forward_pallas.1} parent=11 // pred_region
          _
        $region24: #{vit_forward_pallas.1} parent=11 // pred_fallthru
          _
        // Predicated region
        $region25: #{vit_forward_pallas.1} parent=11 // pred_check
          %p607 = pneg %p130
        $region26: #{vit_forward_pallas.1} parent=11 // pred_check_branch
          %609 = sbr.rel (%p607) target = $region28
        $region27: #{vit_forward_pallas.1} parent=11 // pred_region
          _
        $region28: #{vit_forward_pallas.1} parent=11 // pred_fallthru
          _
        // Predicated region
        $region29: #{vit_forward_pallas.1} parent=11 // pred_check
          %p610 = pneg %p151
        $region30: #{vit_forward_pallas.1} parent=11 // pred_check_branch
          %612 = sbr.rel (%p610) target = $region32
        $region31: #{vit_forward_pallas.1} parent=11 // pred_region
          _
        $region32: #{vit_forward_pallas.1} parent=11 // pred_fallthru
          _
        // Predicated region
        $region33: #{vit_forward_pallas.1} parent=11 // pred_check
          %p613 = pneg %p484
        $region34: #{vit_forward_pallas.1} parent=11 // pred_check_branch
          %615 = sbr.rel (%p613) target = $region36
        $region35: #{vit_forward_pallas.1} parent=11 // pred_region
          _
        $region36: #{vit_forward_pallas.1} parent=11 // pred_fallthru
          _
        // Predicated region
        $region37: #{vit_forward_pallas.1} parent=11 // pred_check
          %p616 = pneg %p505
        $region38: #{vit_forward_pallas.1} parent=11 // pred_check_branch
          %618 = sbr.rel (%p616) target = $region40
        $region39: #{vit_forward_pallas.1} parent=11 // pred_region
          _
        $region40: #{vit_forward_pallas.1} parent=11 // pred_fallthru
          _
        // Predicated region
        $region41: #{vit_forward_pallas.1} parent=11 // pred_check
          %p619 = pneg %p526
        $region42: #{vit_forward_pallas.1} parent=11 // pred_check_branch
          %621 = sbr.rel (%p619) target = $region44
        $region43: #{vit_forward_pallas.1} parent=11 // pred_region
          _
        $region44: #{vit_forward_pallas.1} parent=11 // pred_fallthru
          _
      $region12: #{vit_forward_pallas.1} parent=5 // pred_fallthru
        _
      %p622 = scmp.lt.s32.totalorder %s29, 2
      // Predicated region
      $region45: #{vit_forward_pallas.1} parent=5 // pred_check
        %p623 = pneg %p622
      $region46: #{vit_forward_pallas.1} parent=5 // pred_check_branch
        %625 = sbr.rel (%p623) target = $region48
      $region47: #{vit_forward_pallas.1} parent=5 // pred_region
        // Predicated region
        $region49: #{vit_forward_pallas.1} parent=47 // pred_check
          %p626 = pneg %p171
        $region50: #{vit_forward_pallas.1} parent=47 // pred_check_branch
          %628 = sbr.rel (%p626) target = $region52
        $region51: #{vit_forward_pallas.1} parent=47 // pred_region
          %p629 = scmp.lt.s32.totalorder %s37, 1
          %s630 = scalar_select %p629, %s37, 1
          %s631 = scalar_lea.vmem %s5, %s630
        $region52: #{vit_forward_pallas.1} parent=47 // pred_fallthru
          _
        // Predicated region
        $region53: #{vit_forward_pallas.1} parent=47 // pred_check
          %p632 = pneg %p197
        $region54: #{vit_forward_pallas.1} parent=47 // pred_check_branch
          %634 = sbr.rel (%p632) target = $region56
        $region55: #{vit_forward_pallas.1} parent=47 // pred_region
          %p635 = scmp.lt.s32.totalorder %s37, 1
          %s636 = scalar_select %p635, %s37, 1
          %s637 = scalar_lea.vmem %s6, %s636
        $region56: #{vit_forward_pallas.1} parent=47 // pred_fallthru
          _
        // Predicated region
        $region57: #{vit_forward_pallas.1} parent=47 // pred_check
          %p638 = pneg %p223
        $region58: #{vit_forward_pallas.1} parent=47 // pred_check_branch
          %640 = sbr.rel (%p638) target = $region60
        $region59: #{vit_forward_pallas.1} parent=47 // pred_region
          %p641 = scmp.lt.s32.totalorder %s37, 1
          %s642 = scalar_select %p641, %s37, 1
          %s643 = smul.addr %s642, 4
          %s644 = smul.addr %s643, 4
          %s645 = scalar_lea.vmem %s7, %s644
        $region60: #{vit_forward_pallas.1} parent=47 // pred_fallthru
          _
        // Predicated region
        $region61: #{vit_forward_pallas.1} parent=47 // pred_check
          %p646 = pneg %p249
        $region62: #{vit_forward_pallas.1} parent=47 // pred_check_branch
          %648 = sbr.rel (%p646) target = $region64
        $region63: #{vit_forward_pallas.1} parent=47 // pred_region
          %p649 = scmp.lt.s32.totalorder %s37, 1
          %s650 = scalar_select %p649, %s37, 1
          %s651 = scalar_lea.vmem %s8, %s650
        $region64: #{vit_forward_pallas.1} parent=47 // pred_fallthru
          _
        // Predicated region
        $region65: #{vit_forward_pallas.1} parent=47 // pred_check
          %p652 = pneg %p275
        $region66: #{vit_forward_pallas.1} parent=47 // pred_check_branch
          %654 = sbr.rel (%p652) target = $region68
        $region67: #{vit_forward_pallas.1} parent=47 // pred_region
          %p655 = scmp.lt.s32.totalorder %s37, 1
          %s656 = scalar_select %p655, %s37, 1
          %s657 = smul.addr %s656, 4
          %s658 = smul.addr %s657, 4
          %s659 = scalar_lea.vmem %s9, %s658
        $region68: #{vit_forward_pallas.1} parent=47 // pred_fallthru
          _
        // Predicated region
        $region69: #{vit_forward_pallas.1} parent=47 // pred_check
          %p660 = pneg %p301
        $region70: #{vit_forward_pallas.1} parent=47 // pred_check_branch
          %662 = sbr.rel (%p660) target = $region72
        $region71: #{vit_forward_pallas.1} parent=47 // pred_region
          %p663 = scmp.lt.s32.totalorder %s37, 1
          %s664 = scalar_select %p663, %s37, 1
          %s665 = scalar_lea.vmem %s10, %s664
        $region72: #{vit_forward_pallas.1} parent=47 // pred_fallthru
          _
        // Predicated region
        $region73: #{vit_forward_pallas.1} parent=47 // pred_check
          %p666 = pneg %p327
        $region74: #{vit_forward_pallas.1} parent=47 // pred_check_branch
          %668 = sbr.rel (%p666) target = $region76
        $region75: #{vit_forward_pallas.1} parent=47 // pred_region
          %p669 = scmp.lt.s32.totalorder %s37, 1
          %s670 = scalar_select %p669, %s37, 1
          %s671 = scalar_lea.vmem %s11, %s670
        $region76: #{vit_forward_pallas.1} parent=47 // pred_fallthru
          _
        // Predicated region
        $region77: #{vit_forward_pallas.1} parent=47 // pred_check
          %p672 = pneg %p353
        $region78: #{vit_forward_pallas.1} parent=47 // pred_check_branch
          %674 = sbr.rel (%p672) target = $region80
        $region79: #{vit_forward_pallas.1} parent=47 // pred_region
          %p675 = scmp.lt.s32.totalorder %s37, 1
          %s676 = scalar_select %p675, %s37, 1
          %s677 = scalar_lea.vmem %s12, %s676
        $region80: #{vit_forward_pallas.1} parent=47 // pred_fallthru
          _
        // Predicated region
        $region81: #{vit_forward_pallas.1} parent=47 // pred_check
          %p678 = pneg %p379
        $region82: #{vit_forward_pallas.1} parent=47 // pred_check_branch
          %680 = sbr.rel (%p678) target = $region84
        $region83: #{vit_forward_pallas.1} parent=47 // pred_region
          %p681 = scmp.lt.s32.totalorder %s37, 1
          %s682 = scalar_select %p681, %s37, 1
          %s683 = smul.addr %s682, 4
          %s684 = smul.addr %s683, 4
          %s685 = scalar_lea.vmem %s13, %s684
        $region84: #{vit_forward_pallas.1} parent=47 // pred_fallthru
          _
        // Predicated region
        $region85: #{vit_forward_pallas.1} parent=47 // pred_check
          %p686 = pneg %p405
        $region86: #{vit_forward_pallas.1} parent=47 // pred_check_branch
          %688 = sbr.rel (%p686) target = $region88
        $region87: #{vit_forward_pallas.1} parent=47 // pred_region
          %p689 = scmp.lt.s32.totalorder %s37, 1
          %s690 = scalar_select %p689, %s37, 1
          %s691 = scalar_lea.vmem %s14, %s690
        $region88: #{vit_forward_pallas.1} parent=47 // pred_fallthru
          _
        // Predicated region
        $region89: #{vit_forward_pallas.1} parent=47 // pred_check
          %p692 = pneg %p431
        $region90: #{vit_forward_pallas.1} parent=47 // pred_check_branch
          %694 = sbr.rel (%p692) target = $region92
        $region91: #{vit_forward_pallas.1} parent=47 // pred_region
          %p695 = scmp.lt.s32.totalorder %s37, 1
          %s696 = scalar_select %p695, %s37, 1
          %s697 = smul.addr %s696, 16
          %s698 = smul.addr %s697, 4
          %s699 = scalar_lea.vmem %s15, %s698
        $region92: #{vit_forward_pallas.1} parent=47 // pred_fallthru
          _
        // Predicated region
        $region93: #{vit_forward_pallas.1} parent=47 // pred_check
          %p700 = pneg %p457
        $region94: #{vit_forward_pallas.1} parent=47 // pred_check_branch
          %702 = sbr.rel (%p700) target = $region96
        $region95: #{vit_forward_pallas.1} parent=47 // pred_region
          %p703 = scmp.lt.s32.totalorder %s37, 1
          %s704 = scalar_select %p703, %s37, 1
          %s705 = scalar_lea.vmem %s16, %s704
        $region96: #{vit_forward_pallas.1} parent=47 // pred_fallthru
          _
      $region48: #{vit_forward_pallas.1} parent=5 // pred_fallthru
        _
      %p706 = scmp.le.s32.totalorder 1, %s29
      %p707 = scmp.lt.s32.totalorder %s29, 3
      %p708 = pnand %p706, %p707
      %p709 = pneg %p708
      // Predicated region
      $region97: #{vit_forward_pallas.1} parent=5 // pred_check
        _
      $region98: #{vit_forward_pallas.1} parent=5 // pred_check_branch
        %711 = sbr.rel (%p708) target = $region100
      $region99: #{vit_forward_pallas.1} parent=5 // pred_region
        %s712 = ssub.s32 %s29, 1
        %p713 = scmp.lt.s32.totalorder %s38, 0
        %s714 = scalar_select %p713, %s38, 0
        %s715 = smul.addr %s714, 6
        %s716 = smul.addr %s715, 8
        %s717 = scalar_lea.vmem %s0, %s716
        %p718 = pneg %p67
        %p719 = pneg %p64
        %p720 = pneg %p88
        %p721 = pneg %p85
        %p722 = pneg %p109
        %p723 = pneg %p106
        %p724 = pneg %p130
        %p725 = pneg %p127
        %p726 = pneg %p151
        %p727 = pneg %p148
        %p728 = scmp.lt.s32.totalorder %s39, 1
        %s729 = scalar_select %p728, %s39, 1
        %s730 = scalar_lea.vmem %s5, %s729
        %p731 = pneg %p177
        %p732 = pneg %p174
        %p733 = scmp.lt.s32.totalorder %s39, 1
        %s734 = scalar_select %p733, %s39, 1
        %s735 = scalar_lea.vmem %s6, %s734
        %p736 = pneg %p203
        %p737 = pneg %p200
        %p738 = scmp.lt.s32.totalorder %s39, 1
        %s739 = scalar_select %p738, %s39, 1
        %s740 = smul.addr %s739, 4
        %s741 = smul.addr %s740, 4
        %s742 = scalar_lea.vmem %s7, %s741
        %p743 = pneg %p229
        %p744 = pneg %p226
        %p745 = scmp.lt.s32.totalorder %s39, 1
        %s746 = scalar_select %p745, %s39, 1
        %s747 = scalar_lea.vmem %s8, %s746
        %p748 = pneg %p255
        %p749 = pneg %p252
        %p750 = scmp.lt.s32.totalorder %s39, 1
        %s751 = scalar_select %p750, %s39, 1
        %s752 = smul.addr %s751, 4
        %s753 = smul.addr %s752, 4
        %s754 = scalar_lea.vmem %s9, %s753
        %p755 = pneg %p281
        %p756 = pneg %p278
        %p757 = scmp.lt.s32.totalorder %s39, 1
        %s758 = scalar_select %p757, %s39, 1
        %s759 = scalar_lea.vmem %s10, %s758
        %p760 = pneg %p307
        %p761 = pneg %p304
        %p762 = scmp.lt.s32.totalorder %s39, 1
        %s763 = scalar_select %p762, %s39, 1
        %s764 = scalar_lea.vmem %s11, %s763
        %p765 = pneg %p333
        %p766 = pneg %p330
        %p767 = scmp.lt.s32.totalorder %s39, 1
        %s768 = scalar_select %p767, %s39, 1
        %s769 = scalar_lea.vmem %s12, %s768
        %p770 = pneg %p359
        %p771 = pneg %p356
        %p772 = scmp.lt.s32.totalorder %s39, 1
        %s773 = scalar_select %p772, %s39, 1
        %s774 = smul.addr %s773, 4
        %s775 = smul.addr %s774, 4
        %s776 = scalar_lea.vmem %s13, %s775
        %p777 = pneg %p385
        %p778 = pneg %p382
        %p779 = scmp.lt.s32.totalorder %s39, 1
        %s780 = scalar_select %p779, %s39, 1
        %s781 = scalar_lea.vmem %s14, %s780
        %p782 = pneg %p411
        %p783 = pneg %p408
        %p784 = scmp.lt.s32.totalorder %s39, 1
        %s785 = scalar_select %p784, %s39, 1
        %s786 = smul.addr %s785, 16
        %s787 = smul.addr %s786, 4
        %s788 = scalar_lea.vmem %s15, %s787
        %p789 = pneg %p437
        %p790 = pneg %p434
        %p791 = scmp.lt.s32.totalorder %s39, 1
        %s792 = scalar_select %p791, %s39, 1
        %s793 = scalar_lea.vmem %s16, %s792
        %p794 = pneg %p463
        %p795 = pneg %p460
        %p796 = pneg %p484
        %p797 = pneg %p481
        %p798 = pneg %p505
        %p799 = pneg %p502
        %p800 = pneg %p526
        %p801 = pneg %p523
        %p802 = pneg %p552
        %p803 = pneg %p549
        %p804 = pneg %p578
        %p805 = pneg %p575
        %p806 = scmp.lt.s32.totalorder %s38, 0
        %s807 = scalar_select %p806, %s38, 0
        %s808 = smul.addr %s807, 6
        %s809 = smul.addr %s808, 8
        %s810 = scalar_lea.vmem %s21, %s809
        %p811 = scmp.lt.s32.totalorder %s38, 0
        %s812 = scalar_select %p811, %s38, 0
        %s813 = smul.addr %s812, 6
        %s814 = smul.addr %s813, 8
        %s815 = scalar_lea.vmem %s0, %s814
        %p816 = scmp.lt.s32.totalorder %s39, 1
        %s817 = scalar_select %p816, %s39, 1
        %s818 = scalar_lea.vmem %s5, %s817
        %p819 = scmp.lt.s32.totalorder %s39, 1
        %s820 = scalar_select %p819, %s39, 1
        %s821 = scalar_lea.vmem %s6, %s820
        %p822 = scmp.lt.s32.totalorder %s39, 1
        %s823 = scalar_select %p822, %s39, 1
        %s824 = smul.addr %s823, 4
        %s825 = smul.addr %s824, 4
        %s826 = scalar_lea.vmem %s7, %s825
        %p827 = scmp.lt.s32.totalorder %s39, 1
        %s828 = scalar_select %p827, %s39, 1
        %s829 = scalar_lea.vmem %s8, %s828
        %p830 = scmp.lt.s32.totalorder %s39, 1
        %s831 = scalar_select %p830, %s39, 1
        %s832 = smul.addr %s831, 4
        %s833 = smul.addr %s832, 4
        %s834 = scalar_lea.vmem %s9, %s833
        %p835 = scmp.lt.s32.totalorder %s39, 1
        %s836 = scalar_select %p835, %s39, 1
        %s837 = scalar_lea.vmem %s10, %s836
        %p838 = scmp.lt.s32.totalorder %s39, 1
        %s839 = scalar_select %p838, %s39, 1
        %s840 = scalar_lea.vmem %s11, %s839
        %p841 = scmp.lt.s32.totalorder %s39, 1
        %s842 = scalar_select %p841, %s39, 1
        %s843 = scalar_lea.vmem %s12, %s842
        %p844 = scmp.lt.s32.totalorder %s39, 1
        %s845 = scalar_select %p844, %s39, 1
        %s846 = smul.addr %s845, 4
        %s847 = smul.addr %s846, 4
        %s848 = scalar_lea.vmem %s13, %s847
        %p849 = scmp.lt.s32.totalorder %s39, 1
        %s850 = scalar_select %p849, %s39, 1
        %s851 = scalar_lea.vmem %s14, %s850
        %p852 = scmp.lt.s32.totalorder %s39, 1
        %s853 = scalar_select %p852, %s39, 1
        %s854 = smul.addr %s853, 16
        %s855 = smul.addr %s854, 4
        %s856 = scalar_lea.vmem %s15, %s855
        %p857 = scmp.lt.s32.totalorder %s39, 1
        %s858 = scalar_select %p857, %s39, 1
        %s859 = scalar_lea.vmem %s16, %s858
        %p860 = scmp.lt.s32.totalorder %s38, 0
        %s861 = scalar_select %p860, %s38, 0
        %s862 = smul.addr %s861, 6
        %s863 = smul.addr %s862, 8
        %s864 = scalar_lea.vmem %s21, %s863
        %p866 = scmp.eq.s32.totalorder %s39, 0
        // Predicated region
        $region101: #{vit_forward_pallas.1} parent=99 // pred_check
          %p867 = pneg %p866
        $region102: #{vit_forward_pallas.1} parent=99 // pred_check_branch
          %869 = sbr.rel (%p867) target = $region104
        $region103: #{vit_forward_pallas.1} parent=99 // pred_region
          %v870 = vld [vmem:[%s815] sm:$0xff]
          %v871 = vld [vmem:[%s815 + $0x8] sm:$0xff]
          %v872 = vld [vmem:[%s815 + $0x10] sm:$0xff]
          %v873 = vld [vmem:[%s815 + $0x18] sm:$0xff]
          %v874 = vld [vmem:[%s815 + $0x20] sm:$0xff]
          %v875 = vld [vmem:[%s815 + $0x28] sm:$0xff]
          %v876 = vld [vmem:[%s1] sm:$0xf]
          %v877 = vld [vmem:[%s1 + $0x4] sm:$0xf]
          %v878 = vld [vmem:[%s1 + $0x8] sm:$0xf]
          %v879 = vld [vmem:[%s1 + $0xc] sm:$0xf]
          %v880 = vld [vmem:[%s1 + $0x10] sm:$0xf]
          %v881 = vld [vmem:[%s1 + $0x14] sm:$0xf]
          %v882 = vld [vmem:[%s1 + $0x18] sm:$0x1]
          %v883 = vpack.c.bf16 %v871, %v870
          %v884 = vpack.c.bf16 %v873, %v872
          %v885 = vpack.c.bf16 %v875, %v874
          %v886 = vld [vmem:[%s2] sm:$0xff]
          %v887 = vld [vmem:[%s2 + $0x8] sm:$0xff]
          %v888 = vld [vmem:[%s2 + $0x10] sm:$0xff]
          %v896 = vunpack.c.l.b16 %v876
          %v897 = vunpack.c.l.b16 %v877
          %v898 = vunpack.c.l.b16 %v878
          %v899 = vunpack.c.l.b16 %v879
          %v900 = vunpack.c.l.b16 %v880
          %v901 = vunpack.c.l.b16 %v881
          %v902 = vunpack.c.l.b16 %v882
          %v903 = vpack.c.b16 %v897, %v896
          %v904 = vpack.c.b16 %v899, %v898
          %v905 = vpack.c.b16 %v901, %v900
          %v906 = vpack.c.b16 %v902, %v902
          %vm910 = vcmask 400384
          %v912 = vsel %vm910, %v883, 0
          %v915 = vsel %vm910, %v884, 0
          %v918 = vsel %vm910, %v885, 0
          %vm920 = vcmask 1040384
          %v921 = vsel 0, 4294967295, 65535
          %v922 = vsel %vm920, %v921, 0
          %v924 = vand.u32 %v906, %v922
          %926 = vmatprep.subr.bf16.mxu0 0
          %927 = vmatpush1.bf16.msra.mxu0 %v903
          %928 = vmatprep.subr.bf16.mxu0 0
          %929 = vmatpush1.bf16.msra.mxu0 %v904
          %930 = vmatprep.subr.bf16.mxu0 0
          %931 = vmatpush1.bf16.msra.mxu0 %v905
          %932 = vmatprep.subr.bf16.mxu0 0
          %933 = vmatpush1.bf16.msra.mxu0 %v924
          %934 = vmatprep.subr.bf16.mxu0 0
          %935 = vmatpush1.bf16.msra.mxu0 0
          %936 = vmatprep.subr.bf16.mxu0 0
          %937 = vmatpush1.bf16.msra.mxu0 0
          %938 = vmatprep.subr.bf16.mxu0 0
          %939 = vmatpush1.bf16.msra.mxu0 0
          %940 = vmatprep.subr.bf16.mxu0 0
          %941 = vmatpush1.bf16.msra.mxu0 0
          %942 = vmatprep.subr.bf16.mxu0 0
          %943 = vmatpush1.bf16.msra.mxu0 0
          %944 = vmatprep.subr.bf16.mxu0 0
          %945 = vmatpush1.bf16.msra.mxu0 0
          %946 = vmatprep.subr.bf16.mxu0 0
          %947 = vmatpush1.bf16.msra.mxu0 0
          %948 = vmatprep.subr.bf16.mxu0 0
          %949 = vmatpush1.bf16.msra.mxu0 0
          %950 = vmatprep.subr.bf16.mxu0 0
          %951 = vmatpush1.bf16.msra.mxu0 0
          %952 = vmatprep.subr.bf16.mxu0 0
          %953 = vmatpush1.bf16.msra.mxu0 0
          %954 = vmatprep.subr.bf16.mxu0 0
          %955 = vmatpush1.bf16.msra.mxu0 0
          %956 = vmatprep.subr.bf16.mxu0 0
          %957 = vmatpush1.bf16.msra.mxu0 0
          %958 = vmatprep.mubr.bf16.mxu0 0
          %959 = vmatmul.mubr.bf16.gmra.mrb[0].mxu0 %v912
          %v960 = vpop.f32.mrb[0].mxu0
          %v961 = vadd.f32 %v886, %v960
          %v962 = vpop.f32.mrb[0].mxu0
          %v963 = vpop.f32.mrb[0].mxu0
          %v964 = vadd.f32 %v887, %v963
          %v965 = vpop.f32.mrb[0].mxu0
          %966 = vmatprep.mubr.bf16.mxu0 0
          %967 = vmatmul.mubr.bf16.gmra.mrb[0].mxu0 %v915
          %v968 = vpop.f32.mrb[0].mxu0
          %v969 = vadd.f32 %v888, %v968
          %v970 = vpop.f32.mrb[0].mxu0
          %v971 = vpop.f32.mrb[0].mxu0
          %v972 = vadd.f32 %v886, %v971
          %v973 = vpop.f32.mrb[0].mxu0
          %974 = vmatprep.mubr.bf16.mxu0 0
          %975 = vmatmul.mubr.bf16.gmra.mrb[0].mxu0 %v918
          %v976 = vpop.f32.mrb[0].mxu0
          %v977 = vadd.f32 %v887, %v976
          %v978 = vpop.f32.mrb[0].mxu0
          %v979 = vpop.f32.mrb[0].mxu0
          %v980 = vadd.f32 %v888, %v979
          %v981 = vpop.f32.mrb[0].mxu0
          %982 = vdwg.mxu0
          %v983 = vld [vmem:[%s3] sm:$0x1]
          %v984 = vld [vmem:[%s4] sm:$0x1]
          %vm985 = vcmask 261120
          %v986 = vsel %vm985, %v961, 0.0
          %987 = vadd.xlane.f32.xlu0 %v986
          %v988 = vpop.xlane.xlu0 %987
          %v989 = vsel %vm985, %v964, 0.0
          %990 = vadd.xlane.f32.xlu0 %v989
          %v991 = vpop.xlane.xlu0 %990
          %v992 = vsel %vm985, %v969, 0.0
          %993 = vadd.xlane.f32.xlu0 %v992
          %v994 = vpop.xlane.xlu0 %993
          %v995 = vsel %vm985, %v972, 0.0
          %996 = vadd.xlane.f32.xlu0 %v995
          %v997 = vpop.xlane.xlu0 %996
          %v998 = vsel %vm985, %v977, 0.0
          %999 = vadd.xlane.f32.xlu0 %v998
          %v1000 = vpop.xlane.xlu0 %999
          %v1001 = vsel %vm985, %v980, 0.0
          %1002 = vadd.xlane.f32.xlu0 %v1001
          %v1003 = vpop.xlane.xlu0 %1002
          %v1004 = vrcp.pop 32.0
          %v1005 = vmul.f32 %v988, %v1004
          %v1006 = vmul.f32 %v991, %v1004
          %v1007 = vmul.f32 %v994, %v1004
          %v1008 = vmul.f32 %v997, %v1004
          %v1009 = vmul.f32 %v1000, %v1004
          %v1010 = vmul.f32 %v1003, %v1004
          %v1011 = vsub.f32 %v961, %v1005
          %v1012 = vsub.f32 %v964, %v1006
          %v1013 = vsub.f32 %v969, %v1007
          %v1014 = vsub.f32 %v972, %v1008
          %v1015 = vsub.f32 %v977, %v1009
          %v1016 = vsub.f32 %v980, %v1010
          %v1017 = vmul.f32 %v1011, %v1011
          %v1018 = vmul.f32 %v1012, %v1012
          %v1019 = vmul.f32 %v1013, %v1013
          %v1020 = vmul.f32 %v1014, %v1014
          %v1021 = vmul.f32 %v1015, %v1015
          %v1022 = vmul.f32 %v1016, %v1016
          %v1023 = vsel %vm985, %v1017, 0.0
          %1024 = vadd.xlane.f32.xlu0 %v1023
          %v1025 = vpop.xlane.xlu0 %1024
          %v1026 = vsel %vm985, %v1018, 0.0
          %1027 = vadd.xlane.f32.xlu0 %v1026
          %v1028 = vpop.xlane.xlu0 %1027
          %v1029 = vsel %vm985, %v1019, 0.0
          %1030 = vadd.xlane.f32.xlu0 %v1029
          %v1031 = vpop.xlane.xlu0 %1030
          %v1032 = vsel %vm985, %v1020, 0.0
          %1033 = vadd.xlane.f32.xlu0 %v1032
          %v1034 = vpop.xlane.xlu0 %1033
          %v1035 = vsel %vm985, %v1021, 0.0
          %1036 = vadd.xlane.f32.xlu0 %v1035
          %v1037 = vpop.xlane.xlu0 %1036
          %v1038 = vsel %vm985, %v1022, 0.0
          %1039 = vadd.xlane.f32.xlu0 %v1038
          %v1040 = vpop.xlane.xlu0 %1039
          %v1041 = vmul.f32 %v1025, %v1004
          %v1042 = vmul.f32 %v1028, %v1004
          %v1043 = vmul.f32 %v1031, %v1004
          %v1044 = vmul.f32 %v1034, %v1004
          %v1045 = vmul.f32 %v1037, %v1004
          %v1046 = vmul.f32 %v1040, %v1004
          %v1047 = vadd.f32 %v1041, 1e-05
          %v1048 = vadd.f32 %v1042, 1e-05
          %v1049 = vadd.f32 %v1043, 1e-05
          %v1050 = vadd.f32 %v1044, 1e-05
          %v1051 = vadd.f32 %v1045, 1e-05
          %v1052 = vadd.f32 %v1046, 1e-05
          %v1053 = vrsqrt.pop %v1047
          %v1054 = vrsqrt.pop %v1048
          %v1055 = vrsqrt.pop %v1049
          %v1056 = vrsqrt.pop %v1050
          %v1057 = vrsqrt.pop %v1051
          %v1058 = vrsqrt.pop %v1052
          %v1059 = vmul.f32 %v1011, %v1053
          %v1060 = vmul.f32 %v1012, %v1054
          %v1061 = vmul.f32 %v1013, %v1055
          %v1062 = vmul.f32 %v1014, %v1056
          %v1063 = vmul.f32 %v1015, %v1057
          %v1064 = vmul.f32 %v1016, %v1058
          %v1066 = vlaneseq
          %v1067 = vshrl.u32 %v1066, 7
          %v1068 = vsub.s32 0, %v1067
          %v1069 = vrot.slane %v983, %v1068
          %v1071 = vmul.f32 %v1059, %v1069
          %v1072 = vmul.f32 %v1060, %v1069
          %v1073 = vmul.f32 %v1061, %v1069
          %v1074 = vmul.f32 %v1062, %v1069
          %v1075 = vmul.f32 %v1063, %v1069
          %v1076 = vmul.f32 %v1064, %v1069
          %v1078 = vlaneseq
          %v1079 = vshrl.u32 %v1078, 7
          %v1080 = vsub.s32 0, %v1079
          %v1081 = vrot.slane %v984, %v1080
          %v1083 = vadd.f32 %v1071, %v1081
          %v1084 = vadd.f32 %v1072, %v1081
          %v1085 = vadd.f32 %v1073, %v1081
          %v1086 = vadd.f32 %v1074, %v1081
          %v1087 = vadd.f32 %v1075, %v1081
          %v1088 = vadd.f32 %v1076, %v1081
          %1089 = vst.msk [vmem:[#allocation2] sm:$0xff] %vm985, %v1083
          %1090 = vst.msk [vmem:[#allocation2 + $0x8] sm:$0xff] %vm985, %v1084
          %1091 = vst.msk [vmem:[#allocation2 + $0x10] sm:$0xff] %vm985, %v1085
          %1092 = vst.msk [vmem:[#allocation2 + $0x18] sm:$0xff] %vm985, %v1086
          %1093 = vst.msk [vmem:[#allocation2 + $0x20] sm:$0xff] %vm985, %v1087
          %1094 = vst.msk [vmem:[#allocation2 + $0x28] sm:$0xff] %vm985, %v1088
        $region104: #{vit_forward_pallas.1} parent=99 // pred_fallthru
          _
        %v1095 = vld [vmem:[#allocation2] sm:$0xff]
        %v1096 = vld [vmem:[#allocation2 + $0x8] sm:$0xff]
        %v1097 = vld [vmem:[#allocation2 + $0x10] sm:$0xff]
        %v1098 = vld [vmem:[#allocation2 + $0x18] sm:$0xff]
        %v1099 = vld [vmem:[#allocation2 + $0x20] sm:$0xff]
        %v1100 = vld [vmem:[#allocation2 + $0x28] sm:$0xff]
        %v1101 = vlaneseq
        %v1102 = vand.u32 %v1101, 127
        %vm1103 = vcmp.lt.s32.totalorder %v1102, 17
        %v1104 = vsel %vm1103, 0.0, -1e+30
        %v1105 = vld [vmem:[%s818] sm:$0x1]
        %v1106 = vld [vmem:[%s821] sm:$0x1]
        %vm1107 = vcmask 261120
        %v1108 = vsel %vm1107, %v1095, 0.0
        %1109 = vadd.xlane.f32.xlu0 %v1108
        %v1110 = vpop.xlane.xlu0 %1109
        %v1111 = vsel %vm1107, %v1096, 0.0
        %1112 = vadd.xlane.f32.xlu0 %v1111
        %v1113 = vpop.xlane.xlu0 %1112
        %v1114 = vsel %vm1107, %v1097, 0.0
        %1115 = vadd.xlane.f32.xlu0 %v1114
        %v1116 = vpop.xlane.xlu0 %1115
        %v1117 = vsel %vm1107, %v1098, 0.0
        %1118 = vadd.xlane.f32.xlu0 %v1117
        %v1119 = vpop.xlane.xlu0 %1118
        %v1120 = vsel %vm1107, %v1099, 0.0
        %1121 = vadd.xlane.f32.xlu0 %v1120
        %v1122 = vpop.xlane.xlu0 %1121
        %v1123 = vsel %vm1107, %v1100, 0.0
        %1124 = vadd.xlane.f32.xlu0 %v1123
        %v1125 = vpop.xlane.xlu0 %1124
        %v1126 = vrcp.pop 32.0
        %v1127 = vmul.f32 %v1110, %v1126
        %v1128 = vmul.f32 %v1113, %v1126
        %v1129 = vmul.f32 %v1116, %v1126
        %v1130 = vmul.f32 %v1119, %v1126
        %v1131 = vmul.f32 %v1122, %v1126
        %v1132 = vmul.f32 %v1125, %v1126
        %v1133 = vsub.f32 %v1095, %v1127
        %v1134 = vsub.f32 %v1096, %v1128
        %v1135 = vsub.f32 %v1097, %v1129
        %v1136 = vsub.f32 %v1098, %v1130
        %v1137 = vsub.f32 %v1099, %v1131
        %v1138 = vsub.f32 %v1100, %v1132
        %v1139 = vmul.f32 %v1133, %v1133
        %v1140 = vmul.f32 %v1134, %v1134
        %v1141 = vmul.f32 %v1135, %v1135
        %v1142 = vmul.f32 %v1136, %v1136
        %v1143 = vmul.f32 %v1137, %v1137
        %v1144 = vmul.f32 %v1138, %v1138
        %v1145 = vsel %vm1107, %v1139, 0.0
        %1146 = vadd.xlane.f32.xlu0 %v1145
        %v1147 = vpop.xlane.xlu0 %1146
        %v1148 = vsel %vm1107, %v1140, 0.0
        %1149 = vadd.xlane.f32.xlu0 %v1148
        %v1150 = vpop.xlane.xlu0 %1149
        %v1151 = vsel %vm1107, %v1141, 0.0
        %1152 = vadd.xlane.f32.xlu0 %v1151
        %v1153 = vpop.xlane.xlu0 %1152
        %v1154 = vsel %vm1107, %v1142, 0.0
        %1155 = vadd.xlane.f32.xlu0 %v1154
        %v1156 = vpop.xlane.xlu0 %1155
        %v1157 = vsel %vm1107, %v1143, 0.0
        %1158 = vadd.xlane.f32.xlu0 %v1157
        %v1159 = vpop.xlane.xlu0 %1158
        %v1160 = vsel %vm1107, %v1144, 0.0
        %1161 = vadd.xlane.f32.xlu0 %v1160
        %v1162 = vpop.xlane.xlu0 %1161
        %v1163 = vmul.f32 %v1147, %v1126
        %v1164 = vmul.f32 %v1150, %v1126
        %v1165 = vmul.f32 %v1153, %v1126
        %v1166 = vmul.f32 %v1156, %v1126
        %v1167 = vmul.f32 %v1159, %v1126
        %v1168 = vmul.f32 %v1162, %v1126
        %v1169 = vadd.f32 %v1163, 1e-05
        %v1170 = vadd.f32 %v1164, 1e-05
        %v1171 = vadd.f32 %v1165, 1e-05
        %v1172 = vadd.f32 %v1166, 1e-05
        %v1173 = vadd.f32 %v1167, 1e-05
        %v1174 = vadd.f32 %v1168, 1e-05
        %v1175 = vrsqrt.pop %v1169
        %v1176 = vrsqrt.pop %v1170
        %v1177 = vrsqrt.pop %v1171
        %v1178 = vrsqrt.pop %v1172
        %v1179 = vrsqrt.pop %v1173
        %v1180 = vrsqrt.pop %v1174
        %v1181 = vmul.f32 %v1133, %v1175
        %v1182 = vmul.f32 %v1134, %v1176
        %v1183 = vmul.f32 %v1135, %v1177
        %v1184 = vmul.f32 %v1136, %v1178
        %v1185 = vmul.f32 %v1137, %v1179
        %v1186 = vmul.f32 %v1138, %v1180
        %v1188 = vlaneseq
        %v1189 = vshrl.u32 %v1188, 7
        %v1190 = vsub.s32 0, %v1189
        %v1191 = vrot.slane %v1105, %v1190
        %v1193 = vmul.f32 %v1181, %v1191
        %v1194 = vmul.f32 %v1182, %v1191
        %v1195 = vmul.f32 %v1183, %v1191
        %v1196 = vmul.f32 %v1184, %v1191
        %v1197 = vmul.f32 %v1185, %v1191
        %v1198 = vmul.f32 %v1186, %v1191
        %v1200 = vlaneseq
        %v1201 = vshrl.u32 %v1200, 7
        %v1202 = vsub.s32 0, %v1201
        %v1203 = vrot.slane %v1106, %v1202
        %v1205 = vadd.f32 %v1193, %v1203
        %v1206 = vadd.f32 %v1194, %v1203
        %v1207 = vadd.f32 %v1195, %v1203
        %v1208 = vadd.f32 %v1196, %v1203
        %v1209 = vadd.f32 %v1197, %v1203
        %v1210 = vadd.f32 %v1198, %v1203
        %v1211 = vld [vmem:[%s826] sm:$0xf]
        %v1212 = vld [vmem:[%s826 + $0x4] sm:$0xf]
        %v1213 = vld [vmem:[%s826 + $0x8] sm:$0xf]
        %v1214 = vld [vmem:[%s826 + $0xc] sm:$0xf]
        %v1215 = vpack.c.bf16 %v1206, %v1205
        %v1216 = vpack.c.bf16 %v1208, %v1207
        %v1217 = vpack.c.bf16 %v1210, %v1209
        %v1218 = vld [vmem:[%s829] sm:$0x1]
        %v1220 = vlaneseq
        %v1221 = vshrl.u32 %v1220, 7
        %v1222 = vsub.s32 0, %v1221
        %v1223 = vrot.slane %v1218, %v1222
        %v1229 = vunpack.c.l.b16 %v1211
        %v1230 = vunpack.c.l.b16 %v1212
        %v1231 = vunpack.c.l.b16 %v1213
        %v1232 = vunpack.c.l.b16 %v1214
        %v1233 = vpack.c.b16 %v1230, %v1229
        %v1234 = vpack.c.b16 %v1232, %v1231
        %v1238 = vsel %vm1107, %v1215, 0
        %v1241 = vsel %vm1107, %v1216, 0
        %v1244 = vsel %vm1107, %v1217, 0
        %1246 = vmatprep.subr.bf16.mxu0 0
        %1247 = vmatpush1.bf16.msra.mxu0 %v1233
        %1248 = vmatprep.subr.bf16.mxu0 0
        %1249 = vmatpush1.bf16.msra.mxu0 %v1234
        %1250 = vmatprep.subr.bf16.mxu0 0
        %1251 = vmatpush1.bf16.msra.mxu0 0
        %1252 = vmatprep.subr.bf16.mxu0 0
        %1253 = vmatpush1.bf16.msra.mxu0 0
        %1254 = vmatprep.subr.bf16.mxu0 0
        %1255 = vmatpush1.bf16.msra.mxu0 0
        %1256 = vmatprep.subr.bf16.mxu0 0
        %1257 = vmatpush1.bf16.msra.mxu0 0
        %1258 = vmatprep.subr.bf16.mxu0 0
        %1259 = vmatpush1.bf16.msra.mxu0 0
        %1260 = vmatprep.subr.bf16.mxu0 0
        %1261 = vmatpush1.bf16.msra.mxu0 0
        %1262 = vmatprep.subr.bf16.mxu0 0
        %1263 = vmatpush1.bf16.msra.mxu0 0
        %1264 = vmatprep.subr.bf16.mxu0 0
        %1265 = vmatpush1.bf16.msra.mxu0 0
        %1266 = vmatprep.subr.bf16.mxu0 0
        %1267 = vmatpush1.bf16.msra.mxu0 0
        %1268 = vmatprep.subr.bf16.mxu0 0
        %1269 = vmatpush1.bf16.msra.mxu0 0
        %1270 = vmatprep.subr.bf16.mxu0 0
        %1271 = vmatpush1.bf16.msra.mxu0 0
        %1272 = vmatprep.subr.bf16.mxu0 0
        %1273 = vmatpush1.bf16.msra.mxu0 0
        %1274 = vmatprep.subr.bf16.mxu0 0
        %1275 = vmatpush1.bf16.msra.mxu0 0
        %1276 = vmatprep.subr.bf16.mxu0 0
        %1277 = vmatpush1.bf16.msra.mxu0 0
        %1278 = vmatprep.mubr.bf16.mxu0 0
        %1279 = vmatmul.mubr.bf16.gmra.mrb[0].mxu0 %v1238
        %v1280 = vpop.f32.mrb[0].mxu0
        %v1281 = vadd.f32 %v1223, %v1280
        %v1282 = vpop.f32.mrb[0].mxu0
        %v1283 = vpop.f32.mrb[0].mxu0
        %v1284 = vadd.f32 %v1223, %v1283
        %v1285 = vpop.f32.mrb[0].mxu0
        %1286 = vmatprep.mubr.bf16.mxu0 0
        %1287 = vmatmul.mubr.bf16.gmra.mrb[0].mxu0 %v1241
        %v1288 = vpop.f32.mrb[0].mxu0
        %v1289 = vadd.f32 %v1223, %v1288
        %v1290 = vpop.f32.mrb[0].mxu0
        %v1291 = vpop.f32.mrb[0].mxu0
        %v1292 = vadd.f32 %v1223, %v1291
        %v1293 = vpop.f32.mrb[0].mxu0
        %1294 = vmatprep.mubr.bf16.mxu0 0
        %1295 = vmatmul.mubr.bf16.gmra.mrb[0].mxu0 %v1244
        %v1296 = vpop.f32.mrb[0].mxu0
        %v1297 = vadd.f32 %v1223, %v1296
        %v1298 = vpop.f32.mrb[0].mxu0
        %v1299 = vpop.f32.mrb[0].mxu0
        %v1300 = vadd.f32 %v1223, %v1299
        %v1301 = vpop.f32.mrb[0].mxu0
        %1302 = vdwg.mxu0
        %v1303 = vmul.f32 %v1281, 0.35355338
        %v1304 = vmul.f32 %v1284, 0.35355338
        %v1305 = vmul.f32 %v1289, 0.35355338
        %v1306 = vpack.c.bf16 %v1304, %v1303
        %v1307 = vpack.c.bf16 %v1305, %v1305
        %v1308 = vpack.c.bf16 %v1284, %v1281
        %v1309 = vpack.c.bf16 %v1289, %v1289
        %1312 = vrot.lane.b32.xlu0 %v1308, 96
        %v1313 = vpop.permute.xlu0 %1312
        %1314 = vrot.lane.b32.xlu0 %v1309, 96
        %v1315 = vpop.permute.xlu0 %1314
        %vm1316 = vcmask 64512
        %v1318 = vsel %vm1316, %v1306, 0
        %v1321 = vsel %vm1316, %v1307, 0
        %v1324 = vsel %vm1316, %v1313, 0
        %v1327 = vsel %vm1316, %v1315, 0
        %1329 = vmatprep.subr.bf16.mxu0 0
        %1330 = vmatpush1.bf16.xpose.msra.mxu0 %v1324
        %1331 = vmatprep.subr.bf16.mxu0 0
        %1332 = vmatpush1.bf16.xpose.msra.mxu0 %v1327
        %1333 = vmatprep.subr.bf16.mxu0 0
        %1334 = vmatpush1.bf16.xpose.msra.mxu0 0
        %1335 = vmatprep.subr.bf16.mxu0 0
        %1336 = vmatpush1.bf16.xpose.msra.mxu0 0
        %1337 = vmatprep.subr.bf16.mxu0 0
        %1338 = vmatpush1.bf16.xpose.msra.mxu0 0
        %1339 = vmatprep.subr.bf16.mxu0 0
        %1340 = vmatpush1.bf16.xpose.msra.mxu0 0
        %1341 = vmatprep.subr.bf16.mxu0 0
        %1342 = vmatpush1.bf16.xpose.msra.mxu0 0
        %1343 = vmatprep.subr.bf16.mxu0 0
        %1344 = vmatpush1.bf16.xpose.msra.mxu0 0
        %1345 = vmatprep.subr.bf16.mxu0 0
        %1346 = vmatpush1.bf16.xpose.msra.mxu0 0
        %1347 = vmatprep.subr.bf16.mxu0 0
        %1348 = vmatpush1.bf16.xpose.msra.mxu0 0
        %1349 = vmatprep.subr.bf16.mxu0 0
        %1350 = vmatpush1.bf16.xpose.msra.mxu0 0
        %1351 = vmatprep.subr.bf16.mxu0 0
        %1352 = vmatpush1.bf16.xpose.msra.mxu0 0
        %1353 = vmatprep.subr.bf16.mxu0 0
        %1354 = vmatpush1.bf16.xpose.msra.mxu0 0
        %1355 = vmatprep.subr.bf16.mxu0 0
        %1356 = vmatpush1.bf16.xpose.msra.mxu0 0
        %1357 = vmatprep.subr.bf16.mxu0 0
        %1358 = vmatpush1.bf16.xpose.msra.mxu0 0
        %1359 = vmatprep.subr.bf16.mxu0 0
        %1360 = vmatpush1.bf16.xpose.msra.mxu0 0
        %1361 = vmatprep.mubr.bf16.mxu0 0
        %1362 = vmatmul.mubr.bf16.gmra.mrb[0].mxu0 %v1318
        %v1363 = vpop.f32.mrb[0].mxu0
        %v1364 = vadd.f32 %v1104, %v1363
        %v1365 = vpop.f32.mrb[0].mxu0
        %v1366 = vpop.f32.mrb[0].mxu0
        %v1367 = vadd.f32 %v1104, %v1366
        %v1368 = vpop.f32.mrb[0].mxu0
        %1369 = vmatprep.mubr.bf16.mxu0 0
        %1370 = vmatmul.mubr.bf16.gmra.mrb[0].mxu0 %v1321
        %v1371 = vpop.f32.mrb[0].mxu0
        %v1372 = vadd.f32 %v1104, %v1371
        %v1373 = vpop.f32.mrb[0].mxu0
        %v1374 = vpop.f32.mrb[0].mxu0
        %v1375 = vpop.f32.mrb[0].mxu0
        %1376 = vdwg.mxu0
        %vm1377 = vcmask 195584
        %v1378 = vsel %vm1377, %v1364, -inf
        %1379 = vmax.xlane.f32.xlu0 %v1378
        %v1380 = vpop.xlane.xlu0 %1379
        %v1381 = vsel %vm1377, %v1367, -inf
        %1382 = vmax.xlane.f32.xlu0 %v1381
        %v1383 = vpop.xlane.xlu0 %1382
        %v1384 = vsel %vm1377, %v1372, -inf
        %1385 = vmax.xlane.f32.xlu0 %v1384
        %v1386 = vpop.xlane.xlu0 %1385
        %v1387 = vsub.f32 %v1364, %v1380
        %v1388 = vsub.f32 %v1367, %v1383
        %v1389 = vsub.f32 %v1372, %v1386
        %v1390 = vmul.f32 %v1387, 1.442695
        %v1391 = vpow.pop %v1390
        %v1392 = vmul.f32 %v1388, 1.442695
        %v1393 = vpow.pop %v1392
        %v1394 = vmul.f32 %v1389, 1.442695
        %v1395 = vpow.pop %v1394
        %v1396 = vsel %vm1377, %v1391, 0.0
        %1397 = vadd.xlane.f32.xlu0 %v1396
        %v1398 = vpop.xlane.xlu0 %1397
        %v1399 = vsel %vm1377, %v1393, 0.0
        %1400 = vadd.xlane.f32.xlu0 %v1399
        %v1401 = vpop.xlane.xlu0 %1400
        %v1402 = vsel %vm1377, %v1395, 0.0
        %1403 = vadd.xlane.f32.xlu0 %v1402
        %v1404 = vpop.xlane.xlu0 %1403
        %v1405 = vrcp.pop %v1398
        %v1406 = vrcp.pop %v1401
        %v1407 = vrcp.pop %v1404
        %v1408 = vmul.f32 %v1391, %v1405
        %v1409 = vmul.f32 %v1393, %v1406
        %v1410 = vmul.f32 %v1395, %v1407
        %v1411 = vpack.c.bf16 %v1409, %v1408
        %v1412 = vpack.c.bf16 %v1410, %v1410
        %1413 = vrot.lane.b32.xlu0 %v1308, 64
        %v1414 = vpop.permute.xlu0 %1413
        %1415 = vrot.lane.b32.xlu0 %v1309, 64
        %v1416 = vpop.permute.xlu0 %1415
        %v1419 = vsel %vm1377, %v1411, 0
        %v1422 = vsel %vm1377, %v1412, 0
        %vm1424 = vcmask 1043456
        %v1426 = vsel %vm1424, %v1416, 0
        %1428 = vmatprep.subr.bf16.mxu0 0
        %1429 = vmatpush1.bf16.msra.mxu0 %v1414
        %1430 = vmatprep.subr.bf16.mxu0 0
        %1431 = vmatpush1.bf16.msra.mxu0 %v1426
        %1432 = vmatprep.subr.bf16.mxu0 0
        %1433 = vmatpush1.bf16.msra.mxu0 0
        %1434 = vmatprep.subr.bf16.mxu0 0
        %1435 = vmatpush1.bf16.msra.mxu0 0
        %1436 = vmatprep.subr.bf16.mxu0 0
        %1437 = vmatpush1.bf16.msra.mxu0 0
        %1438 = vmatprep.subr.bf16.mxu0 0
        %1439 = vmatpush1.bf16.msra.mxu0 0
        %1440 = vmatprep.subr.bf16.mxu0 0
        %1441 = vmatpush1.bf16.msra.mxu0 0
        %1442 = vmatprep.subr.bf16.mxu0 0
        %1443 = vmatpush1.bf16.msra.mxu0 0
        %1444 = vmatprep.subr.bf16.mxu0 0
        %1445 = vmatpush1.bf16.msra.mxu0 0
        %1446 = vmatprep.subr.bf16.mxu0 0
        %1447 = vmatpush1.bf16.msra.mxu0 0
        %1448 = vmatprep.subr.bf16.mxu0 0
        %1449 = vmatpush1.bf16.msra.mxu0 0
        %1450 = vmatprep.subr.bf16.mxu0 0
        %1451 = vmatpush1.bf16.msra.mxu0 0
        %1452 = vmatprep.subr.bf16.mxu0 0
        %1453 = vmatpush1.bf16.msra.mxu0 0
        %1454 = vmatprep.subr.bf16.mxu0 0
        %1455 = vmatpush1.bf16.msra.mxu0 0
        %1456 = vmatprep.subr.bf16.mxu0 0
        %1457 = vmatpush1.bf16.msra.mxu0 0
        %1458 = vmatprep.subr.bf16.mxu0 0
        %1459 = vmatpush1.bf16.msra.mxu0 0
        %1460 = vmatprep.mubr.bf16.mxu0 0
        %1461 = vmatmul.mubr.bf16.gmra.mrb[0].mxu0 %v1419
        %v1462 = vpop.f32.mrb[0].mxu0
        %v1463 = vadd.f32 0.0, %v1462
        %v1464 = vpop.f32.mrb[0].mxu0
        %v1465 = vpop.f32.mrb[0].mxu0
        %v1466 = vadd.f32 0.0, %v1465
        %v1467 = vpop.f32.mrb[0].mxu0
        %1468 = vmatprep.mubr.bf16.mxu0 0
        %1469 = vmatmul.mubr.bf16.gmra.mrb[0].mxu0 %v1422
        %v1470 = vpop.f32.mrb[0].mxu0
        %v1471 = vadd.f32 0.0, %v1470
        %v1472 = vpop.f32.mrb[0].mxu0
        %v1473 = vpop.f32.mrb[0].mxu0
        %v1474 = vpop.f32.mrb[0].mxu0
        %1475 = vdwg.mxu0
        %1478 = vrot.lane.b32.xlu0 %v1306, 120
        %v1479 = vpop.permute.xlu0 %1478
        %1480 = vrot.lane.b32.xlu0 %v1307, 120
        %v1481 = vpop.permute.xlu0 %1480
        %1482 = vrot.lane.b32.xlu0 %v1308, 88
        %v1483 = vpop.permute.xlu0 %1482
        %1484 = vrot.lane.b32.xlu0 %v1309, 88
        %v1485 = vpop.permute.xlu0 %1484
        %v1487 = vsel %vm1316, %v1479, 0
        %v1490 = vsel %vm1316, %v1481, 0
        %v1493 = vsel %vm1316, %v1483, 0
        %v1496 = vsel %vm1316, %v1485, 0
        %1498 = vmatprep.subr.bf16.mxu0 0
        %1499 = vmatpush1.bf16.xpose.msra.mxu0 %v1493
        %1500 = vmatprep.subr.bf16.mxu0 0
        %1501 = vmatpush1.bf16.xpose.msra.mxu0 %v1496
        %1502 = vmatprep.subr.bf16.mxu0 0
        %1503 = vmatpush1.bf16.xpose.msra.mxu0 0
        %1504 = vmatprep.subr.bf16.mxu0 0
        %1505 = vmatpush1.bf16.xpose.msra.mxu0 0
        %1506 = vmatprep.subr.bf16.mxu0 0
        %1507 = vmatpush1.bf16.xpose.msra.mxu0 0
        %1508 = vmatprep.subr.bf16.mxu0 0
        %1509 = vmatpush1.bf16.xpose.msra.mxu0 0
        %1510 = vmatprep.subr.bf16.mxu0 0
        %1511 = vmatpush1.bf16.xpose.msra.mxu0 0
        %1512 = vmatprep.subr.bf16.mxu0 0
        %1513 = vmatpush1.bf16.xpose.msra.mxu0 0
        %1514 = vmatprep.subr.bf16.mxu0 0
        %1515 = vmatpush1.bf16.xpose.msra.mxu0 0
        %1516 = vmatprep.subr.bf16.mxu0 0
        %1517 = vmatpush1.bf16.xpose.msra.mxu0 0
        %1518 = vmatprep.subr.bf16.mxu0 0
        %1519 = vmatpush1.bf16.xpose.msra.mxu0 0
        %1520 = vmatprep.subr.bf16.mxu0 0
        %1521 = vmatpush1.bf16.xpose.msra.mxu0 0
        %1522 = vmatprep.subr.bf16.mxu0 0
        %1523 = vmatpush1.bf16.xpose.msra.mxu0 0
        %1524 = vmatprep.subr.bf16.mxu0 0
        %1525 = vmatpush1.bf16.xpose.msra.mxu0 0
        %1526 = vmatprep.subr.bf16.mxu0 0
        %1527 = vmatpush1.bf16.xpose.msra.mxu0 0
        %1528 = vmatprep.subr.bf16.mxu0 0
        %1529 = vmatpush1.bf16.xpose.msra.mxu0 0
        %1530 = vmatprep.mubr.bf16.mxu0 0
        %1531 = vmatmul.mubr.bf16.gmra.mrb[0].mxu0 %v1487
        %v1532 = vpop.f32.mrb[0].mxu0
        %v1533 = vadd.f32 %v1104, %v1532
        %v1534 = vpop.f32.mrb[0].mxu0
        %v1535 = vpop.f32.mrb[0].mxu0
        %v1536 = vadd.f32 %v1104, %v1535
        %v1537 = vpop.f32.mrb[0].mxu0
        %1538 = vmatprep.mubr.bf16.mxu0 0
        %1539 = vmatmul.mubr.bf16.gmra.mrb[0].mxu0 %v1490
        %v1540 = vpop.f32.mrb[0].mxu0
        %v1541 = vadd.f32 %v1104, %v1540
        %v1542 = vpop.f32.mrb[0].mxu0
        %v1543 = vpop.f32.mrb[0].mxu0
        %v1544 = vpop.f32.mrb[0].mxu0
        %1545 = vdwg.mxu0
        %v1546 = vsel %vm1377, %v1533, -inf
        %1547 = vmax.xlane.f32.xlu0 %v1546
        %v1548 = vpop.xlane.xlu0 %1547
        %v1549 = vsel %vm1377, %v1536, -inf
        %1550 = vmax.xlane.f32.xlu0 %v1549
        %v1551 = vpop.xlane.xlu0 %1550
        %v1552 = vsel %vm1377, %v1541, -inf
        %1553 = vmax.xlane.f32.xlu0 %v1552
        %v1554 = vpop.xlane.xlu0 %1553
        %v1555 = vsub.f32 %v1533, %v1548
        %v1556 = vsub.f32 %v1536, %v1551
        %v1557 = vsub.f32 %v1541, %v1554
        %v1558 = vmul.f32 %v1555, 1.442695
        %v1559 = vpow.pop %v1558
        %v1560 = vmul.f32 %v1556, 1.442695
        %v1561 = vpow.pop %v1560
        %v1562 = vmul.f32 %v1557, 1.442695
        %v1563 = vpow.pop %v1562
        %v1564 = vsel %vm1377, %v1559, 0.0
        %1565 = vadd.xlane.f32.xlu0 %v1564
        %v1566 = vpop.xlane.xlu0 %1565
        %v1567 = vsel %vm1377, %v1561, 0.0
        %1568 = vadd.xlane.f32.xlu0 %v1567
        %v1569 = vpop.xlane.xlu0 %1568
        %v1570 = vsel %vm1377, %v1563, 0.0
        %1571 = vadd.xlane.f32.xlu0 %v1570
        %v1572 = vpop.xlane.xlu0 %1571
        %v1573 = vrcp.pop %v1566
        %v1574 = vrcp.pop %v1569
        %v1575 = vrcp.pop %v1572
        %v1576 = vmul.f32 %v1559, %v1573
        %v1577 = vmul.f32 %v1561, %v1574
        %v1578 = vmul.f32 %v1563, %v1575
        %v1579 = vpack.c.bf16 %v1577, %v1576
        %v1580 = vpack.c.bf16 %v1578, %v1578
        %1581 = vrot.lane.b32.xlu0 %v1308, 56
        %v1582 = vpop.permute.xlu0 %1581
        %1583 = vrot.lane.b32.xlu0 %v1309, 56
        %v1584 = vpop.permute.xlu0 %1583
        %v1587 = vsel %vm1377, %v1579, 0
        %v1590 = vsel %vm1377, %v1580, 0
        %v1593 = vsel %vm1424, %v1584, 0
        %1595 = vmatprep.subr.bf16.mxu0 0
        %1596 = vmatpush1.bf16.msra.mxu0 %v1582
        %1597 = vmatprep.subr.bf16.mxu0 0
        %1598 = vmatpush1.bf16.msra.mxu0 %v1593
        %1599 = vmatprep.subr.bf16.mxu0 0
        %1600 = vmatpush1.bf16.msra.mxu0 0
        %1601 = vmatprep.subr.bf16.mxu0 0
        %1602 = vmatpush1.bf16.msra.mxu0 0
        %1603 = vmatprep.subr.bf16.mxu0 0
        %1604 = vmatpush1.bf16.msra.mxu0 0
        %1605 = vmatprep.subr.bf16.mxu0 0
        %1606 = vmatpush1.bf16.msra.mxu0 0
        %1607 = vmatprep.subr.bf16.mxu0 0
        %1608 = vmatpush1.bf16.msra.mxu0 0
        %1609 = vmatprep.subr.bf16.mxu0 0
        %1610 = vmatpush1.bf16.msra.mxu0 0
        %1611 = vmatprep.subr.bf16.mxu0 0
        %1612 = vmatpush1.bf16.msra.mxu0 0
        %1613 = vmatprep.subr.bf16.mxu0 0
        %1614 = vmatpush1.bf16.msra.mxu0 0
        %1615 = vmatprep.subr.bf16.mxu0 0
        %1616 = vmatpush1.bf16.msra.mxu0 0
        %1617 = vmatprep.subr.bf16.mxu0 0
        %1618 = vmatpush1.bf16.msra.mxu0 0
        %1619 = vmatprep.subr.bf16.mxu0 0
        %1620 = vmatpush1.bf16.msra.mxu0 0
        %1621 = vmatprep.subr.bf16.mxu0 0
        %1622 = vmatpush1.bf16.msra.mxu0 0
        %1623 = vmatprep.subr.bf16.mxu0 0
        %1624 = vmatpush1.bf16.msra.mxu0 0
        %1625 = vmatprep.subr.bf16.mxu0 0
        %1626 = vmatpush1.bf16.msra.mxu0 0
        %1627 = vmatprep.mubr.bf16.mxu0 0
        %1628 = vmatmul.mubr.bf16.gmra.mrb[0].mxu0 %v1587
        %v1629 = vpop.f32.mrb[0].mxu0
        %v1630 = vadd.f32 0.0, %v1629
        %v1631 = vpop.f32.mrb[0].mxu0
        %v1632 = vpop.f32.mrb[0].mxu0
        %v1633 = vadd.f32 0.0, %v1632
        %v1634 = vpop.f32.mrb[0].mxu0
        %1635 = vmatprep.mubr.bf16.mxu0 0
        %1636 = vmatmul.mubr.bf16.gmra.mrb[0].mxu0 %v1590
        %v1637 = vpop.f32.mrb[0].mxu0
        %v1638 = vadd.f32 0.0, %v1637
        %v1639 = vpop.f32.mrb[0].mxu0
        %v1640 = vpop.f32.mrb[0].mxu0
        %v1641 = vpop.f32.mrb[0].mxu0
        %1642 = vdwg.mxu0
        %1643 = vrot.lane.b32.xlu0 %v1306, 112
        %v1644 = vpop.permute.xlu0 %1643
        %1645 = vrot.lane.b32.xlu0 %v1307, 112
        %v1646 = vpop.permute.xlu0 %1645
        %1647 = vrot.lane.b32.xlu0 %v1308, 80
        %v1648 = vpop.permute.xlu0 %1647
        %1649 = vrot.lane.b32.xlu0 %v1309, 80
        %v1650 = vpop.permute.xlu0 %1649
        %v1652 = vsel %vm1316, %v1644, 0
        %v1655 = vsel %vm1316, %v1646, 0
        %v1658 = vsel %vm1316, %v1648, 0
        %v1661 = vsel %vm1316, %v1650, 0
        %1663 = vmatprep.subr.bf16.mxu0 0
        %1664 = vmatpush1.bf16.xpose.msra.mxu0 %v1658
        %1665 = vmatprep.subr.bf16.mxu0 0
        %1666 = vmatpush1.bf16.xpose.msra.mxu0 %v1661
        %1667 = vmatprep.subr.bf16.mxu0 0
        %1668 = vmatpush1.bf16.xpose.msra.mxu0 0
        %1669 = vmatprep.subr.bf16.mxu0 0
        %1670 = vmatpush1.bf16.xpose.msra.mxu0 0
        %1671 = vmatprep.subr.bf16.mxu0 0
        %1672 = vmatpush1.bf16.xpose.msra.mxu0 0
        %1673 = vmatprep.subr.bf16.mxu0 0
        %1674 = vmatpush1.bf16.xpose.msra.mxu0 0
        %1675 = vmatprep.subr.bf16.mxu0 0
        %1676 = vmatpush1.bf16.xpose.msra.mxu0 0
        %1677 = vmatprep.subr.bf16.mxu0 0
        %1678 = vmatpush1.bf16.xpose.msra.mxu0 0
        %1679 = vmatprep.subr.bf16.mxu0 0
        %1680 = vmatpush1.bf16.xpose.msra.mxu0 0
        %1681 = vmatprep.subr.bf16.mxu0 0
        %1682 = vmatpush1.bf16.xpose.msra.mxu0 0
        %1683 = vmatprep.subr.bf16.mxu0 0
        %1684 = vmatpush1.bf16.xpose.msra.mxu0 0
        %1685 = vmatprep.subr.bf16.mxu0 0
        %1686 = vmatpush1.bf16.xpose.msra.mxu0 0
        %1687 = vmatprep.subr.bf16.mxu0 0
        %1688 = vmatpush1.bf16.xpose.msra.mxu0 0
        %1689 = vmatprep.subr.bf16.mxu0 0
        %1690 = vmatpush1.bf16.xpose.msra.mxu0 0
        %1691 = vmatprep.subr.bf16.mxu0 0
        %1692 = vmatpush1.bf16.xpose.msra.mxu0 0
        %1693 = vmatprep.subr.bf16.mxu0 0
        %1694 = vmatpush1.bf16.xpose.msra.mxu0 0
        %1695 = vmatprep.mubr.bf16.mxu0 0
        %1696 = vmatmul.mubr.bf16.gmra.mrb[0].mxu0 %v1652
        %v1697 = vpop.f32.mrb[0].mxu0
        %v1698 = vadd.f32 %v1104, %v1697
        %v1699 = vpop.f32.mrb[0].mxu0
        %v1700 = vpop.f32.mrb[0].mxu0
        %v1701 = vadd.f32 %v1104, %v1700
        %v1702 = vpop.f32.mrb[0].mxu0
        %1703 = vmatprep.mubr.bf16.mxu0 0
        %1704 = vmatmul.mubr.bf16.gmra.mrb[0].mxu0 %v1655
        %v1705 = vpop.f32.mrb[0].mxu0
        %v1706 = vadd.f32 %v1104, %v1705
        %v1707 = vpop.f32.mrb[0].mxu0
        %v1708 = vpop.f32.mrb[0].mxu0
        %v1709 = vpop.f32.mrb[0].mxu0
        %1710 = vdwg.mxu0
        %v1711 = vsel %vm1377, %v1698, -inf
        %1712 = vmax.xlane.f32.xlu0 %v1711
        %v1713 = vpop.xlane.xlu0 %1712
        %v1714 = vsel %vm1377, %v1701, -inf
        %1715 = vmax.xlane.f32.xlu0 %v1714
        %v1716 = vpop.xlane.xlu0 %1715
        %v1717 = vsel %vm1377, %v1706, -inf
        %1718 = vmax.xlane.f32.xlu0 %v1717
        %v1719 = vpop.xlane.xlu0 %1718
        %v1720 = vsub.f32 %v1698, %v1713
        %v1721 = vsub.f32 %v1701, %v1716
        %v1722 = vsub.f32 %v1706, %v1719
        %v1723 = vmul.f32 %v1720, 1.442695
        %v1724 = vpow.pop %v1723
        %v1725 = vmul.f32 %v1721, 1.442695
        %v1726 = vpow.pop %v1725
        %v1727 = vmul.f32 %v1722, 1.442695
        %v1728 = vpow.pop %v1727
        %v1729 = vsel %vm1377, %v1724, 0.0
        %1730 = vadd.xlane.f32.xlu0 %v1729
        %v1731 = vpop.xlane.xlu0 %1730
        %v1732 = vsel %vm1377, %v1726, 0.0
        %1733 = vadd.xlane.f32.xlu0 %v1732
        %v1734 = vpop.xlane.xlu0 %1733
        %v1735 = vsel %vm1377, %v1728, 0.0
        %1736 = vadd.xlane.f32.xlu0 %v1735
        %v1737 = vpop.xlane.xlu0 %1736
        %v1738 = vrcp.pop %v1731
        %v1739 = vrcp.pop %v1734
        %v1740 = vrcp.pop %v1737
        %v1741 = vmul.f32 %v1724, %v1738
        %v1742 = vmul.f32 %v1726, %v1739
        %v1743 = vmul.f32 %v1728, %v1740
        %v1744 = vpack.c.bf16 %v1742, %v1741
        %v1745 = vpack.c.bf16 %v1743, %v1743
        %1746 = vrot.lane.b32.xlu0 %v1308, 48
        %v1747 = vpop.permute.xlu0 %1746
        %1748 = vrot.lane.b32.xlu0 %v1309, 48
        %v1749 = vpop.permute.xlu0 %1748
        %v1752 = vsel %vm1377, %v1744, 0
        %v1755 = vsel %vm1377, %v1745, 0
        %v1758 = vsel %vm1424, %v1749, 0
        %1760 = vmatprep.subr.bf16.mxu0 0
        %1761 = vmatpush1.bf16.msra.mxu0 %v1747
        %1762 = vmatprep.subr.bf16.mxu0 0
        %1763 = vmatpush1.bf16.msra.mxu0 %v1758
        %1764 = vmatprep.subr.bf16.mxu0 0
        %1765 = vmatpush1.bf16.msra.mxu0 0
        %1766 = vmatprep.subr.bf16.mxu0 0
        %1767 = vmatpush1.bf16.msra.mxu0 0
        %1768 = vmatprep.subr.bf16.mxu0 0
        %1769 = vmatpush1.bf16.msra.mxu0 0
        %1770 = vmatprep.subr.bf16.mxu0 0
        %1771 = vmatpush1.bf16.msra.mxu0 0
        %1772 = vmatprep.subr.bf16.mxu0 0
        %1773 = vmatpush1.bf16.msra.mxu0 0
        %1774 = vmatprep.subr.bf16.mxu0 0
        %1775 = vmatpush1.bf16.msra.mxu0 0
        %1776 = vmatprep.subr.bf16.mxu0 0
        %1777 = vmatpush1.bf16.msra.mxu0 0
        %1778 = vmatprep.subr.bf16.mxu0 0
        %1779 = vmatpush1.bf16.msra.mxu0 0
        %1780 = vmatprep.subr.bf16.mxu0 0
        %1781 = vmatpush1.bf16.msra.mxu0 0
        %1782 = vmatprep.subr.bf16.mxu0 0
        %1783 = vmatpush1.bf16.msra.mxu0 0
        %1784 = vmatprep.subr.bf16.mxu0 0
        %1785 = vmatpush1.bf16.msra.mxu0 0
        %1786 = vmatprep.subr.bf16.mxu0 0
        %1787 = vmatpush1.bf16.msra.mxu0 0
        %1788 = vmatprep.subr.bf16.mxu0 0
        %1789 = vmatpush1.bf16.msra.mxu0 0
        %1790 = vmatprep.subr.bf16.mxu0 0
        %1791 = vmatpush1.bf16.msra.mxu0 0
        %1792 = vmatprep.mubr.bf16.mxu0 0
        %1793 = vmatmul.mubr.bf16.gmra.mrb[0].mxu0 %v1752
        %v1794 = vpop.f32.mrb[0].mxu0
        %v1795 = vadd.f32 0.0, %v1794
        %v1796 = vpop.f32.mrb[0].mxu0
        %v1797 = vpop.f32.mrb[0].mxu0
        %v1798 = vadd.f32 0.0, %v1797
        %v1799 = vpop.f32.mrb[0].mxu0
        %1800 = vmatprep.mubr.bf16.mxu0 0
        %1801 = vmatmul.mubr.bf16.gmra.mrb[0].mxu0 %v1755
        %v1802 = vpop.f32.mrb[0].mxu0
        %v1803 = vadd.f32 0.0, %v1802
        %v1804 = vpop.f32.mrb[0].mxu0
        %v1805 = vpop.f32.mrb[0].mxu0
        %v1806 = vpop.f32.mrb[0].mxu0
        %1807 = vdwg.mxu0
        %1808 = vrot.lane.b32.xlu0 %v1306, 104
        %v1809 = vpop.permute.xlu0 %1808
        %1810 = vrot.lane.b32.xlu0 %v1307, 104
        %v1811 = vpop.permute.xlu0 %1810
        %1812 = vrot.lane.b32.xlu0 %v1308, 72
        %v1813 = vpop.permute.xlu0 %1812
        %1814 = vrot.lane.b32.xlu0 %v1309, 72
        %v1815 = vpop.permute.xlu0 %1814
        %v1817 = vsel %vm1316, %v1809, 0
        %v1820 = vsel %vm1316, %v1811, 0
        %v1823 = vsel %vm1316, %v1813, 0
        %v1826 = vsel %vm1316, %v1815, 0
        %1828 = vmatprep.subr.bf16.mxu0 0
        %1829 = vmatpush1.bf16.xpose.msra.mxu0 %v1823
        %1830 = vmatprep.subr.bf16.mxu0 0
        %1831 = vmatpush1.bf16.xpose.msra.mxu0 %v1826
        %1832 = vmatprep.subr.bf16.mxu0 0
        %1833 = vmatpush1.bf16.xpose.msra.mxu0 0
        %1834 = vmatprep.subr.bf16.mxu0 0
        %1835 = vmatpush1.bf16.xpose.msra.mxu0 0
        %1836 = vmatprep.subr.bf16.mxu0 0
        %1837 = vmatpush1.bf16.xpose.msra.mxu0 0
        %1838 = vmatprep.subr.bf16.mxu0 0
        %1839 = vmatpush1.bf16.xpose.msra.mxu0 0
        %1840 = vmatprep.subr.bf16.mxu0 0
        %1841 = vmatpush1.bf16.xpose.msra.mxu0 0
        %1842 = vmatprep.subr.bf16.mxu0 0
        %1843 = vmatpush1.bf16.xpose.msra.mxu0 0
        %1844 = vmatprep.subr.bf16.mxu0 0
        %1845 = vmatpush1.bf16.xpose.msra.mxu0 0
        %1846 = vmatprep.subr.bf16.mxu0 0
        %1847 = vmatpush1.bf16.xpose.msra.mxu0 0
        %1848 = vmatprep.subr.bf16.mxu0 0
        %1849 = vmatpush1.bf16.xpose.msra.mxu0 0
        %1850 = vmatprep.subr.bf16.mxu0 0
        %1851 = vmatpush1.bf16.xpose.msra.mxu0 0
        %1852 = vmatprep.subr.bf16.mxu0 0
        %1853 = vmatpush1.bf16.xpose.msra.mxu0 0
        %1854 = vmatprep.subr.bf16.mxu0 0
        %1855 = vmatpush1.bf16.xpose.msra.mxu0 0
        %1856 = vmatprep.subr.bf16.mxu0 0
        %1857 = vmatpush1.bf16.xpose.msra.mxu0 0
        %1858 = vmatprep.subr.bf16.mxu0 0
        %1859 = vmatpush1.bf16.xpose.msra.mxu0 0
        %1860 = vmatprep.mubr.bf16.mxu0 0
        %1861 = vmatmul.mubr.bf16.gmra.mrb[0].mxu0 %v1817
        %v1862 = vpop.f32.mrb[0].mxu0
        %v1863 = vadd.f32 %v1104, %v1862
        %v1864 = vpop.f32.mrb[0].mxu0
        %v1865 = vpop.f32.mrb[0].mxu0
        %v1866 = vadd.f32 %v1104, %v1865
        %v1867 = vpop.f32.mrb[0].mxu0
        %1868 = vmatprep.mubr.bf16.mxu0 0
        %1869 = vmatmul.mubr.bf16.gmra.mrb[0].mxu0 %v1820
        %v1870 = vpop.f32.mrb[0].mxu0
        %v1871 = vadd.f32 %v1104, %v1870
        %v1872 = vpop.f32.mrb[0].mxu0
        %v1873 = vpop.f32.mrb[0].mxu0
        %v1874 = vpop.f32.mrb[0].mxu0
        %1875 = vdwg.mxu0
        %v1876 = vsel %vm1377, %v1863, -inf
        %1877 = vmax.xlane.f32.xlu0 %v1876
        %v1878 = vpop.xlane.xlu0 %1877
        %v1879 = vsel %vm1377, %v1866, -inf
        %1880 = vmax.xlane.f32.xlu0 %v1879
        %v1881 = vpop.xlane.xlu0 %1880
        %v1882 = vsel %vm1377, %v1871, -inf
        %1883 = vmax.xlane.f32.xlu0 %v1882
        %v1884 = vpop.xlane.xlu0 %1883
        %v1885 = vsub.f32 %v1863, %v1878
        %v1886 = vsub.f32 %v1866, %v1881
        %v1887 = vsub.f32 %v1871, %v1884
        %v1888 = vmul.f32 %v1885, 1.442695
        %v1889 = vpow.pop %v1888
        %v1890 = vmul.f32 %v1886, 1.442695
        %v1891 = vpow.pop %v1890
        %v1892 = vmul.f32 %v1887, 1.442695
        %v1893 = vpow.pop %v1892
        %v1894 = vsel %vm1377, %v1889, 0.0
        %1895 = vadd.xlane.f32.xlu0 %v1894
        %v1896 = vpop.xlane.xlu0 %1895
        %v1897 = vsel %vm1377, %v1891, 0.0
        %1898 = vadd.xlane.f32.xlu0 %v1897
        %v1899 = vpop.xlane.xlu0 %1898
        %v1900 = vsel %vm1377, %v1893, 0.0
        %1901 = vadd.xlane.f32.xlu0 %v1900
        %v1902 = vpop.xlane.xlu0 %1901
        %v1903 = vrcp.pop %v1896
        %v1904 = vrcp.pop %v1899
        %v1905 = vrcp.pop %v1902
        %v1906 = vmul.f32 %v1889, %v1903
        %v1907 = vmul.f32 %v1891, %v1904
        %v1908 = vmul.f32 %v1893, %v1905
        %v1909 = vpack.c.bf16 %v1907, %v1906
        %v1910 = vpack.c.bf16 %v1908, %v1908
        %1911 = vrot.lane.b32.xlu0 %v1308, 40
        %v1912 = vpop.permute.xlu0 %1911
        %1913 = vrot.lane.b32.xlu0 %v1309, 40
        %v1914 = vpop.permute.xlu0 %1913
        %v1917 = vsel %vm1377, %v1909, 0
        %v1920 = vsel %vm1377, %v1910, 0
        %v1923 = vsel %vm1424, %v1914, 0
        %1925 = vmatprep.subr.bf16.mxu0 0
        %1926 = vmatpush1.bf16.msra.mxu0 %v1912
        %1927 = vmatprep.subr.bf16.mxu0 0
        %1928 = vmatpush1.bf16.msra.mxu0 %v1923
        %1929 = vmatprep.subr.bf16.mxu0 0
        %1930 = vmatpush1.bf16.msra.mxu0 0
        %1931 = vmatprep.subr.bf16.mxu0 0
        %1932 = vmatpush1.bf16.msra.mxu0 0
        %1933 = vmatprep.subr.bf16.mxu0 0
        %1934 = vmatpush1.bf16.msra.mxu0 0
        %1935 = vmatprep.subr.bf16.mxu0 0
        %1936 = vmatpush1.bf16.msra.mxu0 0
        %1937 = vmatprep.subr.bf16.mxu0 0
        %1938 = vmatpush1.bf16.msra.mxu0 0
        %1939 = vmatprep.subr.bf16.mxu0 0
        %1940 = vmatpush1.bf16.msra.mxu0 0
        %1941 = vmatprep.subr.bf16.mxu0 0
        %1942 = vmatpush1.bf16.msra.mxu0 0
        %1943 = vmatprep.subr.bf16.mxu0 0
        %1944 = vmatpush1.bf16.msra.mxu0 0
        %1945 = vmatprep.subr.bf16.mxu0 0
        %1946 = vmatpush1.bf16.msra.mxu0 0
        %1947 = vmatprep.subr.bf16.mxu0 0
        %1948 = vmatpush1.bf16.msra.mxu0 0
        %1949 = vmatprep.subr.bf16.mxu0 0
        %1950 = vmatpush1.bf16.msra.mxu0 0
        %1951 = vmatprep.subr.bf16.mxu0 0
        %1952 = vmatpush1.bf16.msra.mxu0 0
        %1953 = vmatprep.subr.bf16.mxu0 0
        %1954 = vmatpush1.bf16.msra.mxu0 0
        %1955 = vmatprep.subr.bf16.mxu0 0
        %1956 = vmatpush1.bf16.msra.mxu0 0
        %1957 = vmatprep.mubr.bf16.mxu0 0
        %1958 = vmatmul.mubr.bf16.gmra.mrb[0].mxu0 %v1917
        %v1959 = vpop.f32.mrb[0].mxu0
        %v1960 = vadd.f32 0.0, %v1959
        %v1961 = vpop.f32.mrb[0].mxu0
        %v1962 = vpop.f32.mrb[0].mxu0
        %v1963 = vadd.f32 0.0, %v1962
        %v1964 = vpop.f32.mrb[0].mxu0
        %1965 = vmatprep.mubr.bf16.mxu0 0
        %1966 = vmatmul.mubr.bf16.gmra.mrb[0].mxu0 %v1920
        %v1967 = vpop.f32.mrb[0].mxu0
        %v1968 = vadd.f32 0.0, %v1967
        %v1969 = vpop.f32.mrb[0].mxu0
        %v1970 = vpop.f32.mrb[0].mxu0
        %v1971 = vpop.f32.mrb[0].mxu0
        %1972 = vdwg.mxu0
        %1976 = vrot.lane.b32.xlu0 %v1630, 8
        %v1977 = vpop.permute.xlu0 %1976
        %1978 = vrot.lane.b32.xlu0 %v1633, 8
        %v1979 = vpop.permute.xlu0 %1978
        %1980 = vrot.lane.b32.xlu0 %v1638, 8
        %v1981 = vpop.permute.xlu0 %1980
        %1988 = vrot.lane.b32.xlu0 %v1795, 16
        %v1989 = vpop.permute.xlu0 %1988
        %1990 = vrot.lane.b32.xlu0 %v1798, 16
        %v1991 = vpop.permute.xlu0 %1990
        %1992 = vrot.lane.b32.xlu0 %v1803, 16
        %v1993 = vpop.permute.xlu0 %1992
        %2000 = vrot.lane.b32.xlu0 %v1960, 24
        %v2001 = vpop.permute.xlu0 %2000
        %2002 = vrot.lane.b32.xlu0 %v1963, 24
        %v2003 = vpop.permute.xlu0 %2002
        %2004 = vrot.lane.b32.xlu0 %v1968, 24
        %v2005 = vpop.permute.xlu0 %2004
        %v2009 = vsel %vm1316, %v1463, %v1977
        %v2010 = vsel %vm1316, %v1466, %v1979
        %v2011 = vsel %vm1316, %v1471, %v1981
        %vm2012 = vcmask 130048
        %v2013 = vsel %vm2012, %v2009, %v1989
        %v2014 = vsel %vm2012, %v2010, %v1991
        %v2015 = vsel %vm2012, %v2011, %v1993
        %v2016 = vsel %vm1377, %v2013, %v2001
        %v2017 = vsel %vm1377, %v2014, %v2003
        %v2018 = vsel %vm1377, %v2015, %v2005
        %v2019 = vpack.c.bf16 %v2017, %v2016
        %v2020 = vpack.c.bf16 %v2018, %v2018
        %2021 = vst.msk [vmem:[#allocation3] sm:$0xff] %vm1107, %v2019
        %vm2022 = vcmask 257024
        %2023 = vst.msk [vmem:[#allocation3 + $0x8] sm:$0xf] %vm2022, %v2020
        %v2024 = vmul.f32 %v1292, 0.35355338
        %v2025 = vmul.f32 %v1297, 0.35355338
        %v2026 = vmul.f32 %v1300, 0.35355338
        %v2027 = vpack.c.bf16 %v2025, %v2024
        %v2028 = vpack.c.bf16 %v2026, %v2026
        %v2029 = vpack.c.bf16 %v1297, %v1292
        %v2030 = vpack.c.bf16 %v1300, %v1300
        %2033 = vrot.lane.b32.xlu0 %v2029, 96
        %v2034 = vpop.permute.xlu0 %2033
        %2035 = vrot.lane.b32.xlu0 %v2030, 96
        %v2036 = vpop.permute.xlu0 %2035
        %v2038 = vsel %vm1316, %v2027, 0
        %v2041 = vsel %vm1316, %v2028, 0
        %v2044 = vsel %vm1316, %v2034, 0
        %v2047 = vsel %vm1316, %v2036, 0
        %2049 = vmatprep.subr.bf16.mxu0 0
        %2050 = vmatpush1.bf16.xpose.msra.mxu0 %v2044
        %2051 = vmatprep.subr.bf16.mxu0 0
        %2052 = vmatpush1.bf16.xpose.msra.mxu0 %v2047
        %2053 = vmatprep.subr.bf16.mxu0 0
        %2054 = vmatpush1.bf16.xpose.msra.mxu0 0
        %2055 = vmatprep.subr.bf16.mxu0 0
        %2056 = vmatpush1.bf16.xpose.msra.mxu0 0
        %2057 = vmatprep.subr.bf16.mxu0 0
        %2058 = vmatpush1.bf16.xpose.msra.mxu0 0
        %2059 = vmatprep.subr.bf16.mxu0 0
        %2060 = vmatpush1.bf16.xpose.msra.mxu0 0
        %2061 = vmatprep.subr.bf16.mxu0 0
        %2062 = vmatpush1.bf16.xpose.msra.mxu0 0
        %2063 = vmatprep.subr.bf16.mxu0 0
        %2064 = vmatpush1.bf16.xpose.msra.mxu0 0
        %2065 = vmatprep.subr.bf16.mxu0 0
        %2066 = vmatpush1.bf16.xpose.msra.mxu0 0
        %2067 = vmatprep.subr.bf16.mxu0 0
        %2068 = vmatpush1.bf16.xpose.msra.mxu0 0
        %2069 = vmatprep.subr.bf16.mxu0 0
        %2070 = vmatpush1.bf16.xpose.msra.mxu0 0
        %2071 = vmatprep.subr.bf16.mxu0 0
        %2072 = vmatpush1.bf16.xpose.msra.mxu0 0
        %2073 = vmatprep.subr.bf16.mxu0 0
        %2074 = vmatpush1.bf16.xpose.msra.mxu0 0
        %2075 = vmatprep.subr.bf16.mxu0 0
        %2076 = vmatpush1.bf16.xpose.msra.mxu0 0
        %2077 = vmatprep.subr.bf16.mxu0 0
        %2078 = vmatpush1.bf16.xpose.msra.mxu0 0
        %2079 = vmatprep.subr.bf16.mxu0 0
        %2080 = vmatpush1.bf16.xpose.msra.mxu0 0
        %2081 = vmatprep.mubr.bf16.mxu0 0
        %2082 = vmatmul.mubr.bf16.gmra.mrb[0].mxu0 %v2038
        %v2083 = vpop.f32.mrb[0].mxu0
        %v2084 = vadd.f32 %v1104, %v2083
        %v2085 = vpop.f32.mrb[0].mxu0
        %v2086 = vpop.f32.mrb[0].mxu0
        %v2087 = vadd.f32 %v1104, %v2086
        %v2088 = vpop.f32.mrb[0].mxu0
        %2089 = vmatprep.mubr.bf16.mxu0 0
        %2090 = vmatmul.mubr.bf16.gmra.mrb[0].mxu0 %v2041
        %v2091 = vpop.f32.mrb[0].mxu0
        %v2092 = vadd.f32 %v1104, %v2091
        %v2093 = vpop.f32.mrb[0].mxu0
        %v2094 = vpop.f32.mrb[0].mxu0
        %v2095 = vpop.f32.mrb[0].mxu0
        %2096 = vdwg.mxu0
        %v2097 = vsel %vm1377, %v2084, -inf
        %2098 = vmax.xlane.f32.xlu0 %v2097
        %v2099 = vpop.xlane.xlu0 %2098
        %v2100 = vsel %vm1377, %v2087, -inf
        %2101 = vmax.xlane.f32.xlu0 %v2100
        %v2102 = vpop.xlane.xlu0 %2101
        %v2103 = vsel %vm1377, %v2092, -inf
        %2104 = vmax.xlane.f32.xlu0 %v2103
        %v2105 = vpop.xlane.xlu0 %2104
        %v2106 = vsub.f32 %v2084, %v2099
        %v2107 = vsub.f32 %v2087, %v2102
        %v2108 = vsub.f32 %v2092, %v2105
        %v2109 = vmul.f32 %v2106, 1.442695
        %v2110 = vpow.pop %v2109
        %v2111 = vmul.f32 %v2107, 1.442695
        %v2112 = vpow.pop %v2111
        %v2113 = vmul.f32 %v2108, 1.442695
        %v2114 = vpow.pop %v2113
        %v2115 = vsel %vm1377, %v2110, 0.0
        %2116 = vadd.xlane.f32.xlu0 %v2115
        %v2117 = vpop.xlane.xlu0 %2116
        %v2118 = vsel %vm1377, %v2112, 0.0
        %2119 = vadd.xlane.f32.xlu0 %v2118
        %v2120 = vpop.xlane.xlu0 %2119
        %v2121 = vsel %vm1377, %v2114, 0.0
        %2122 = vadd.xlane.f32.xlu0 %v2121
        %v2123 = vpop.xlane.xlu0 %2122
        %v2124 = vrcp.pop %v2117
        %v2125 = vrcp.pop %v2120
        %v2126 = vrcp.pop %v2123
        %v2127 = vmul.f32 %v2110, %v2124
        %v2128 = vmul.f32 %v2112, %v2125
        %v2129 = vmul.f32 %v2114, %v2126
        %v2130 = vpack.c.bf16 %v2128, %v2127
        %v2131 = vpack.c.bf16 %v2129, %v2129
        %2132 = vrot.lane.b32.xlu0 %v2029, 64
        %v2133 = vpop.permute.xlu0 %2132
        %2134 = vrot.lane.b32.xlu0 %v2030, 64
        %v2135 = vpop.permute.xlu0 %2134
        %v2138 = vsel %vm1377, %v2130, 0
        %v2141 = vsel %vm1377, %v2131, 0
        %v2144 = vsel %vm1424, %v2135, 0
        %2146 = vmatprep.subr.bf16.mxu0 0
        %2147 = vmatpush1.bf16.msra.mxu0 %v2133
        %2148 = vmatprep.subr.bf16.mxu0 0
        %2149 = vmatpush1.bf16.msra.mxu0 %v2144
        %2150 = vmatprep.subr.bf16.mxu0 0
        %2151 = vmatpush1.bf16.msra.mxu0 0
        %2152 = vmatprep.subr.bf16.mxu0 0
        %2153 = vmatpush1.bf16.msra.mxu0 0
        %2154 = vmatprep.subr.bf16.mxu0 0
        %2155 = vmatpush1.bf16.msra.mxu0 0
        %2156 = vmatprep.subr.bf16.mxu0 0
        %2157 = vmatpush1.bf16.msra.mxu0 0
        %2158 = vmatprep.subr.bf16.mxu0 0
        %2159 = vmatpush1.bf16.msra.mxu0 0
        %2160 = vmatprep.subr.bf16.mxu0 0
        %2161 = vmatpush1.bf16.msra.mxu0 0
        %2162 = vmatprep.subr.bf16.mxu0 0
        %2163 = vmatpush1.bf16.msra.mxu0 0
        %2164 = vmatprep.subr.bf16.mxu0 0
        %2165 = vmatpush1.bf16.msra.mxu0 0
        %2166 = vmatprep.subr.bf16.mxu0 0
        %2167 = vmatpush1.bf16.msra.mxu0 0
        %2168 = vmatprep.subr.bf16.mxu0 0
        %2169 = vmatpush1.bf16.msra.mxu0 0
        %2170 = vmatprep.subr.bf16.mxu0 0
        %2171 = vmatpush1.bf16.msra.mxu0 0
        %2172 = vmatprep.subr.bf16.mxu0 0
        %2173 = vmatpush1.bf16.msra.mxu0 0
        %2174 = vmatprep.subr.bf16.mxu0 0
        %2175 = vmatpush1.bf16.msra.mxu0 0
        %2176 = vmatprep.subr.bf16.mxu0 0
        %2177 = vmatpush1.bf16.msra.mxu0 0
        %2178 = vmatprep.mubr.bf16.mxu0 0
        %2179 = vmatmul.mubr.bf16.gmra.mrb[0].mxu0 %v2138
        %v2180 = vpop.f32.mrb[0].mxu0
        %v2181 = vadd.f32 0.0, %v2180
        %v2182 = vpop.f32.mrb[0].mxu0
        %v2183 = vpop.f32.mrb[0].mxu0
        %v2184 = vadd.f32 0.0, %v2183
        %v2185 = vpop.f32.mrb[0].mxu0
        %2186 = vmatprep.mubr.bf16.mxu0 0
        %2187 = vmatmul.mubr.bf16.gmra.mrb[0].mxu0 %v2141
        %v2188 = vpop.f32.mrb[0].mxu0
        %v2189 = vadd.f32 0.0, %v2188
        %v2190 = vpop.f32.mrb[0].mxu0
        %v2191 = vpop.f32.mrb[0].mxu0
        %v2192 = vpop.f32.mrb[0].mxu0
        %2193 = vdwg.mxu0
        %2196 = vrot.lane.b32.xlu0 %v2027, 120
        %v2197 = vpop.permute.xlu0 %2196
        %2198 = vrot.lane.b32.xlu0 %v2028, 120
        %v2199 = vpop.permute.xlu0 %2198
        %2200 = vrot.lane.b32.xlu0 %v2029, 88
        %v2201 = vpop.permute.xlu0 %2200
        %2202 = vrot.lane.b32.xlu0 %v2030, 88
        %v2203 = vpop.permute.xlu0 %2202
        %v2205 = vsel %vm1316, %v2197, 0
        %v2208 = vsel %vm1316, %v2199, 0
        %v2211 = vsel %vm1316, %v2201, 0
        %v2214 = vsel %vm1316, %v2203, 0
        %2216 = vmatprep.subr.bf16.mxu0 0
        %2217 = vmatpush1.bf16.xpose.msra.mxu0 %v2211
        %2218 = vmatprep.subr.bf16.mxu0 0
        %2219 = vmatpush1.bf16.xpose.msra.mxu0 %v2214
        %2220 = vmatprep.subr.bf16.mxu0 0
        %2221 = vmatpush1.bf16.xpose.msra.mxu0 0
        %2222 = vmatprep.subr.bf16.mxu0 0
        %2223 = vmatpush1.bf16.xpose.msra.mxu0 0
        %2224 = vmatprep.subr.bf16.mxu0 0
        %2225 = vmatpush1.bf16.xpose.msra.mxu0 0
        %2226 = vmatprep.subr.bf16.mxu0 0
        %2227 = vmatpush1.bf16.xpose.msra.mxu0 0
        %2228 = vmatprep.subr.bf16.mxu0 0
        %2229 = vmatpush1.bf16.xpose.msra.mxu0 0
        %2230 = vmatprep.subr.bf16.mxu0 0
        %2231 = vmatpush1.bf16.xpose.msra.mxu0 0
        %2232 = vmatprep.subr.bf16.mxu0 0
        %2233 = vmatpush1.bf16.xpose.msra.mxu0 0
        %2234 = vmatprep.subr.bf16.mxu0 0
        %2235 = vmatpush1.bf16.xpose.msra.mxu0 0
        %2236 = vmatprep.subr.bf16.mxu0 0
        %2237 = vmatpush1.bf16.xpose.msra.mxu0 0
        %2238 = vmatprep.subr.bf16.mxu0 0
        %2239 = vmatpush1.bf16.xpose.msra.mxu0 0
        %2240 = vmatprep.subr.bf16.mxu0 0
        %2241 = vmatpush1.bf16.xpose.msra.mxu0 0
        %2242 = vmatprep.subr.bf16.mxu0 0
        %2243 = vmatpush1.bf16.xpose.msra.mxu0 0
        %2244 = vmatprep.subr.bf16.mxu0 0
        %2245 = vmatpush1.bf16.xpose.msra.mxu0 0
        %2246 = vmatprep.subr.bf16.mxu0 0
        %2247 = vmatpush1.bf16.xpose.msra.mxu0 0
        %2248 = vmatprep.mubr.bf16.mxu0 0
        %2249 = vmatmul.mubr.bf16.gmra.mrb[0].mxu0 %v2205
        %v2250 = vpop.f32.mrb[0].mxu0
        %v2251 = vadd.f32 %v1104, %v2250
        %v2252 = vpop.f32.mrb[0].mxu0
        %v2253 = vpop.f32.mrb[0].mxu0
        %v2254 = vadd.f32 %v1104, %v2253
        %v2255 = vpop.f32.mrb[0].mxu0
        %2256 = vmatprep.mubr.bf16.mxu0 0
        %2257 = vmatmul.mubr.bf16.gmra.mrb[0].mxu0 %v2208
        %v2258 = vpop.f32.mrb[0].mxu0
        %v2259 = vadd.f32 %v1104, %v2258
        %v2260 = vpop.f32.mrb[0].mxu0
        %v2261 = vpop.f32.mrb[0].mxu0
        %v2262 = vpop.f32.mrb[0].mxu0
        %2263 = vdwg.mxu0
        %v2264 = vsel %vm1377, %v2251, -inf
        %2265 = vmax.xlane.f32.xlu0 %v2264
        %v2266 = vpop.xlane.xlu0 %2265
        %v2267 = vsel %vm1377, %v2254, -inf
        %2268 = vmax.xlane.f32.xlu0 %v2267
        %v2269 = vpop.xlane.xlu0 %2268
        %v2270 = vsel %vm1377, %v2259, -inf
        %2271 = vmax.xlane.f32.xlu0 %v2270
        %v2272 = vpop.xlane.xlu0 %2271
        %v2273 = vsub.f32 %v2251, %v2266
        %v2274 = vsub.f32 %v2254, %v2269
        %v2275 = vsub.f32 %v2259, %v2272
        %v2276 = vmul.f32 %v2273, 1.442695
        %v2277 = vpow.pop %v2276
        %v2278 = vmul.f32 %v2274, 1.442695
        %v2279 = vpow.pop %v2278
        %v2280 = vmul.f32 %v2275, 1.442695
        %v2281 = vpow.pop %v2280
        %v2282 = vsel %vm1377, %v2277, 0.0
        %2283 = vadd.xlane.f32.xlu0 %v2282
        %v2284 = vpop.xlane.xlu0 %2283
        %v2285 = vsel %vm1377, %v2279, 0.0
        %2286 = vadd.xlane.f32.xlu0 %v2285
        %v2287 = vpop.xlane.xlu0 %2286
        %v2288 = vsel %vm1377, %v2281, 0.0
        %2289 = vadd.xlane.f32.xlu0 %v2288
        %v2290 = vpop.xlane.xlu0 %2289
        %v2291 = vrcp.pop %v2284
        %v2292 = vrcp.pop %v2287
        %v2293 = vrcp.pop %v2290
        %v2294 = vmul.f32 %v2277, %v2291
        %v2295 = vmul.f32 %v2279, %v2292
        %v2296 = vmul.f32 %v2281, %v2293
        %v2297 = vpack.c.bf16 %v2295, %v2294
        %v2298 = vpack.c.bf16 %v2296, %v2296
        %2299 = vrot.lane.b32.xlu0 %v2029, 56
        %v2300 = vpop.permute.xlu0 %2299
        %2301 = vrot.lane.b32.xlu0 %v2030, 56
        %v2302 = vpop.permute.xlu0 %2301
        %v2305 = vsel %vm1377, %v2297, 0
        %v2308 = vsel %vm1377, %v2298, 0
        %v2311 = vsel %vm1424, %v2302, 0
        %2313 = vmatprep.subr.bf16.mxu0 0
        %2314 = vmatpush1.bf16.msra.mxu0 %v2300
        %2315 = vmatprep.subr.bf16.mxu0 0
        %2316 = vmatpush1.bf16.msra.mxu0 %v2311
        %2317 = vmatprep.subr.bf16.mxu0 0
        %2318 = vmatpush1.bf16.msra.mxu0 0
        %2319 = vmatprep.subr.bf16.mxu0 0
        %2320 = vmatpush1.bf16.msra.mxu0 0
        %2321 = vmatprep.subr.bf16.mxu0 0
        %2322 = vmatpush1.bf16.msra.mxu0 0
        %2323 = vmatprep.subr.bf16.mxu0 0
        %2324 = vmatpush1.bf16.msra.mxu0 0
        %2325 = vmatprep.subr.bf16.mxu0 0
        %2326 = vmatpush1.bf16.msra.mxu0 0
        %2327 = vmatprep.subr.bf16.mxu0 0
        %2328 = vmatpush1.bf16.msra.mxu0 0
        %2329 = vmatprep.subr.bf16.mxu0 0
        %2330 = vmatpush1.bf16.msra.mxu0 0
        %2331 = vmatprep.subr.bf16.mxu0 0
        %2332 = vmatpush1.bf16.msra.mxu0 0
        %2333 = vmatprep.subr.bf16.mxu0 0
        %2334 = vmatpush1.bf16.msra.mxu0 0
        %2335 = vmatprep.subr.bf16.mxu0 0
        %2336 = vmatpush1.bf16.msra.mxu0 0
        %2337 = vmatprep.subr.bf16.mxu0 0
        %2338 = vmatpush1.bf16.msra.mxu0 0
        %2339 = vmatprep.subr.bf16.mxu0 0
        %2340 = vmatpush1.bf16.msra.mxu0 0
        %2341 = vmatprep.subr.bf16.mxu0 0
        %2342 = vmatpush1.bf16.msra.mxu0 0
        %2343 = vmatprep.subr.bf16.mxu0 0
        %2344 = vmatpush1.bf16.msra.mxu0 0
        %2345 = vmatprep.mubr.bf16.mxu0 0
        %2346 = vmatmul.mubr.bf16.gmra.mrb[0].mxu0 %v2305
        %v2347 = vpop.f32.mrb[0].mxu0
        %v2348 = vadd.f32 0.0, %v2347
        %v2349 = vpop.f32.mrb[0].mxu0
        %v2350 = vpop.f32.mrb[0].mxu0
        %v2351 = vadd.f32 0.0, %v2350
        %v2352 = vpop.f32.mrb[0].mxu0
        %2353 = vmatprep.mubr.bf16.mxu0 0
        %2354 = vmatmul.mubr.bf16.gmra.mrb[0].mxu0 %v2308
        %v2355 = vpop.f32.mrb[0].mxu0
        %v2356 = vadd.f32 0.0, %v2355
        %v2357 = vpop.f32.mrb[0].mxu0
        %v2358 = vpop.f32.mrb[0].mxu0
        %v2359 = vpop.f32.mrb[0].mxu0
        %2360 = vdwg.mxu0
        %2361 = vrot.lane.b32.xlu0 %v2027, 112
        %v2362 = vpop.permute.xlu0 %2361
        %2363 = vrot.lane.b32.xlu0 %v2028, 112
        %v2364 = vpop.permute.xlu0 %2363
        %2365 = vrot.lane.b32.xlu0 %v2029, 80
        %v2366 = vpop.permute.xlu0 %2365
        %2367 = vrot.lane.b32.xlu0 %v2030, 80
        %v2368 = vpop.permute.xlu0 %2367
        %v2370 = vsel %vm1316, %v2362, 0
        %v2373 = vsel %vm1316, %v2364, 0
        %v2376 = vsel %vm1316, %v2366, 0
        %v2379 = vsel %vm1316, %v2368, 0
        %2381 = vmatprep.subr.bf16.mxu0 0
        %2382 = vmatpush1.bf16.xpose.msra.mxu0 %v2376
        %2383 = vmatprep.subr.bf16.mxu0 0
        %2384 = vmatpush1.bf16.xpose.msra.mxu0 %v2379
        %2385 = vmatprep.subr.bf16.mxu0 0
        %2386 = vmatpush1.bf16.xpose.msra.mxu0 0
        %2387 = vmatprep.subr.bf16.mxu0 0
        %2388 = vmatpush1.bf16.xpose.msra.mxu0 0
        %2389 = vmatprep.subr.bf16.mxu0 0
        %2390 = vmatpush1.bf16.xpose.msra.mxu0 0
        %2391 = vmatprep.subr.bf16.mxu0 0
        %2392 = vmatpush1.bf16.xpose.msra.mxu0 0
        %2393 = vmatprep.subr.bf16.mxu0 0
        %2394 = vmatpush1.bf16.xpose.msra.mxu0 0
        %2395 = vmatprep.subr.bf16.mxu0 0
        %2396 = vmatpush1.bf16.xpose.msra.mxu0 0
        %2397 = vmatprep.subr.bf16.mxu0 0
        %2398 = vmatpush1.bf16.xpose.msra.mxu0 0
        %2399 = vmatprep.subr.bf16.mxu0 0
        %2400 = vmatpush1.bf16.xpose.msra.mxu0 0
        %2401 = vmatprep.subr.bf16.mxu0 0
        %2402 = vmatpush1.bf16.xpose.msra.mxu0 0
        %2403 = vmatprep.subr.bf16.mxu0 0
        %2404 = vmatpush1.bf16.xpose.msra.mxu0 0
        %2405 = vmatprep.subr.bf16.mxu0 0
        %2406 = vmatpush1.bf16.xpose.msra.mxu0 0
        %2407 = vmatprep.subr.bf16.mxu0 0
        %2408 = vmatpush1.bf16.xpose.msra.mxu0 0
        %2409 = vmatprep.subr.bf16.mxu0 0
        %2410 = vmatpush1.bf16.xpose.msra.mxu0 0
        %2411 = vmatprep.subr.bf16.mxu0 0
        %2412 = vmatpush1.bf16.xpose.msra.mxu0 0
        %2413 = vmatprep.mubr.bf16.mxu0 0
        %2414 = vmatmul.mubr.bf16.gmra.mrb[0].mxu0 %v2370
        %v2415 = vpop.f32.mrb[0].mxu0
        %v2416 = vadd.f32 %v1104, %v2415
        %v2417 = vpop.f32.mrb[0].mxu0
        %v2418 = vpop.f32.mrb[0].mxu0
        %v2419 = vadd.f32 %v1104, %v2418
        %v2420 = vpop.f32.mrb[0].mxu0
        %2421 = vmatprep.mubr.bf16.mxu0 0
        %2422 = vmatmul.mubr.bf16.gmra.mrb[0].mxu0 %v2373
        %v2423 = vpop.f32.mrb[0].mxu0
        %v2424 = vadd.f32 %v1104, %v2423
        %v2425 = vpop.f32.mrb[0].mxu0
        %v2426 = vpop.f32.mrb[0].mxu0
        %v2427 = vpop.f32.mrb[0].mxu0
        %2428 = vdwg.mxu0
        %v2429 = vsel %vm1377, %v2416, -inf
        %2430 = vmax.xlane.f32.xlu0 %v2429
        %v2431 = vpop.xlane.xlu0 %2430
        %v2432 = vsel %vm1377, %v2419, -inf
        %2433 = vmax.xlane.f32.xlu0 %v2432
        %v2434 = vpop.xlane.xlu0 %2433
        %v2435 = vsel %vm1377, %v2424, -inf
        %2436 = vmax.xlane.f32.xlu0 %v2435
        %v2437 = vpop.xlane.xlu0 %2436
        %v2438 = vsub.f32 %v2416, %v2431
        %v2439 = vsub.f32 %v2419, %v2434
        %v2440 = vsub.f32 %v2424, %v2437
        %v2441 = vmul.f32 %v2438, 1.442695
        %v2442 = vpow.pop %v2441
        %v2443 = vmul.f32 %v2439, 1.442695
        %v2444 = vpow.pop %v2443
        %v2445 = vmul.f32 %v2440, 1.442695
        %v2446 = vpow.pop %v2445
        %v2447 = vsel %vm1377, %v2442, 0.0
        %2448 = vadd.xlane.f32.xlu0 %v2447
        %v2449 = vpop.xlane.xlu0 %2448
        %v2450 = vsel %vm1377, %v2444, 0.0
        %2451 = vadd.xlane.f32.xlu0 %v2450
        %v2452 = vpop.xlane.xlu0 %2451
        %v2453 = vsel %vm1377, %v2446, 0.0
        %2454 = vadd.xlane.f32.xlu0 %v2453
        %v2455 = vpop.xlane.xlu0 %2454
        %v2456 = vrcp.pop %v2449
        %v2457 = vrcp.pop %v2452
        %v2458 = vrcp.pop %v2455
        %v2459 = vmul.f32 %v2442, %v2456
        %v2460 = vmul.f32 %v2444, %v2457
        %v2461 = vmul.f32 %v2446, %v2458
        %v2462 = vpack.c.bf16 %v2460, %v2459
        %v2463 = vpack.c.bf16 %v2461, %v2461
        %2464 = vrot.lane.b32.xlu0 %v2029, 48
        %v2465 = vpop.permute.xlu0 %2464
        %2466 = vrot.lane.b32.xlu0 %v2030, 48
        %v2467 = vpop.permute.xlu0 %2466
        %v2470 = vsel %vm1377, %v2462, 0
        %v2473 = vsel %vm1377, %v2463, 0
        %v2476 = vsel %vm1424, %v2467, 0
        %2478 = vmatprep.subr.bf16.mxu0 0
        %2479 = vmatpush1.bf16.msra.mxu0 %v2465
        %2480 = vmatprep.subr.bf16.mxu0 0
        %2481 = vmatpush1.bf16.msra.mxu0 %v2476
        %2482 = vmatprep.subr.bf16.mxu0 0
        %2483 = vmatpush1.bf16.msra.mxu0 0
        %2484 = vmatprep.subr.bf16.mxu0 0
        %2485 = vmatpush1.bf16.msra.mxu0 0
        %2486 = vmatprep.subr.bf16.mxu0 0
        %2487 = vmatpush1.bf16.msra.mxu0 0
        %2488 = vmatprep.subr.bf16.mxu0 0
        %2489 = vmatpush1.bf16.msra.mxu0 0
        %2490 = vmatprep.subr.bf16.mxu0 0
        %2491 = vmatpush1.bf16.msra.mxu0 0
        %2492 = vmatprep.subr.bf16.mxu0 0
        %2493 = vmatpush1.bf16.msra.mxu0 0
        %2494 = vmatprep.subr.bf16.mxu0 0
        %2495 = vmatpush1.bf16.msra.mxu0 0
        %2496 = vmatprep.subr.bf16.mxu0 0
        %2497 = vmatpush1.bf16.msra.mxu0 0
        %2498 = vmatprep.subr.bf16.mxu0 0
        %2499 = vmatpush1.bf16.msra.mxu0 0
        %2500 = vmatprep.subr.bf16.mxu0 0
        %2501 = vmatpush1.bf16.msra.mxu0 0
        %2502 = vmatprep.subr.bf16.mxu0 0
        %2503 = vmatpush1.bf16.msra.mxu0 0
        %2504 = vmatprep.subr.bf16.mxu0 0
        %2505 = vmatpush1.bf16.msra.mxu0 0
        %2506 = vmatprep.subr.bf16.mxu0 0
        %2507 = vmatpush1.bf16.msra.mxu0 0
        %2508 = vmatprep.subr.bf16.mxu0 0
        %2509 = vmatpush1.bf16.msra.mxu0 0
        %2510 = vmatprep.mubr.bf16.mxu0 0
        %2511 = vmatmul.mubr.bf16.gmra.mrb[0].mxu0 %v2470
        %v2512 = vpop.f32.mrb[0].mxu0
        %v2513 = vadd.f32 0.0, %v2512
        %v2514 = vpop.f32.mrb[0].mxu0
        %v2515 = vpop.f32.mrb[0].mxu0
        %v2516 = vadd.f32 0.0, %v2515
        %v2517 = vpop.f32.mrb[0].mxu0
        %2518 = vmatprep.mubr.bf16.mxu0 0
        %2519 = vmatmul.mubr.bf16.gmra.mrb[0].mxu0 %v2473
        %v2520 = vpop.f32.mrb[0].mxu0
        %v2521 = vadd.f32 0.0, %v2520
        %v2522 = vpop.f32.mrb[0].mxu0
        %v2523 = vpop.f32.mrb[0].mxu0
        %v2524 = vpop.f32.mrb[0].mxu0
        %2525 = vdwg.mxu0
        %2526 = vrot.lane.b32.xlu0 %v2027, 104
        %v2527 = vpop.permute.xlu0 %2526
        %2528 = vrot.lane.b32.xlu0 %v2028, 104
        %v2529 = vpop.permute.xlu0 %2528
        %2530 = vrot.lane.b32.xlu0 %v2029, 72
        %v2531 = vpop.permute.xlu0 %2530
        %2532 = vrot.lane.b32.xlu0 %v2030, 72
        %v2533 = vpop.permute.xlu0 %2532
        %v2535 = vsel %vm1316, %v2527, 0
        %v2538 = vsel %vm1316, %v2529, 0
        %v2541 = vsel %vm1316, %v2531, 0
        %v2544 = vsel %vm1316, %v2533, 0
        %2546 = vmatprep.subr.bf16.mxu0 0
        %2547 = vmatpush1.bf16.xpose.msra.mxu0 %v2541
        %2548 = vmatprep.subr.bf16.mxu0 0
        %2549 = vmatpush1.bf16.xpose.msra.mxu0 %v2544
        %2550 = vmatprep.subr.bf16.mxu0 0
        %2551 = vmatpush1.bf16.xpose.msra.mxu0 0
        %2552 = vmatprep.subr.bf16.mxu0 0
        %2553 = vmatpush1.bf16.xpose.msra.mxu0 0
        %2554 = vmatprep.subr.bf16.mxu0 0
        %2555 = vmatpush1.bf16.xpose.msra.mxu0 0
        %2556 = vmatprep.subr.bf16.mxu0 0
        %2557 = vmatpush1.bf16.xpose.msra.mxu0 0
        %2558 = vmatprep.subr.bf16.mxu0 0
        %2559 = vmatpush1.bf16.xpose.msra.mxu0 0
        %2560 = vmatprep.subr.bf16.mxu0 0
        %2561 = vmatpush1.bf16.xpose.msra.mxu0 0
        %2562 = vmatprep.subr.bf16.mxu0 0
        %2563 = vmatpush1.bf16.xpose.msra.mxu0 0
        %2564 = vmatprep.subr.bf16.mxu0 0
        %2565 = vmatpush1.bf16.xpose.msra.mxu0 0
        %2566 = vmatprep.subr.bf16.mxu0 0
        %2567 = vmatpush1.bf16.xpose.msra.mxu0 0
        %2568 = vmatprep.subr.bf16.mxu0 0
        %2569 = vmatpush1.bf16.xpose.msra.mxu0 0
        %2570 = vmatprep.subr.bf16.mxu0 0
        %2571 = vmatpush1.bf16.xpose.msra.mxu0 0
        %2572 = vmatprep.subr.bf16.mxu0 0
        %2573 = vmatpush1.bf16.xpose.msra.mxu0 0
        %2574 = vmatprep.subr.bf16.mxu0 0
        %2575 = vmatpush1.bf16.xpose.msra.mxu0 0
        %2576 = vmatprep.subr.bf16.mxu0 0
        %2577 = vmatpush1.bf16.xpose.msra.mxu0 0
        %2578 = vmatprep.mubr.bf16.mxu0 0
        %2579 = vmatmul.mubr.bf16.gmra.mrb[0].mxu0 %v2535
        %v2580 = vpop.f32.mrb[0].mxu0
        %v2581 = vadd.f32 %v1104, %v2580
        %v2582 = vpop.f32.mrb[0].mxu0
        %v2583 = vpop.f32.mrb[0].mxu0
        %v2584 = vadd.f32 %v1104, %v2583
        %v2585 = vpop.f32.mrb[0].mxu0
        %2586 = vmatprep.mubr.bf16.mxu0 0
        %2587 = vmatmul.mubr.bf16.gmra.mrb[0].mxu0 %v2538
        %v2588 = vpop.f32.mrb[0].mxu0
        %v2589 = vadd.f32 %v1104, %v2588
        %v2590 = vpop.f32.mrb[0].mxu0
        %v2591 = vpop.f32.mrb[0].mxu0
        %v2592 = vpop.f32.mrb[0].mxu0
        %2593 = vdwg.mxu0
        %v2594 = vsel %vm1377, %v2581, -inf
        %2595 = vmax.xlane.f32.xlu0 %v2594
        %v2596 = vpop.xlane.xlu0 %2595
        %v2597 = vsel %vm1377, %v2584, -inf
        %2598 = vmax.xlane.f32.xlu0 %v2597
        %v2599 = vpop.xlane.xlu0 %2598
        %v2600 = vsel %vm1377, %v2589, -inf
        %2601 = vmax.xlane.f32.xlu0 %v2600
        %v2602 = vpop.xlane.xlu0 %2601
        %v2603 = vsub.f32 %v2581, %v2596
        %v2604 = vsub.f32 %v2584, %v2599
        %v2605 = vsub.f32 %v2589, %v2602
        %v2606 = vmul.f32 %v2603, 1.442695
        %v2607 = vpow.pop %v2606
        %v2608 = vmul.f32 %v2604, 1.442695
        %v2609 = vpow.pop %v2608
        %v2610 = vmul.f32 %v2605, 1.442695
        %v2611 = vpow.pop %v2610
        %v2612 = vsel %vm1377, %v2607, 0.0
        %2613 = vadd.xlane.f32.xlu0 %v2612
        %v2614 = vpop.xlane.xlu0 %2613
        %v2615 = vsel %vm1377, %v2609, 0.0
        %2616 = vadd.xlane.f32.xlu0 %v2615
        %v2617 = vpop.xlane.xlu0 %2616
        %v2618 = vsel %vm1377, %v2611, 0.0
        %2619 = vadd.xlane.f32.xlu0 %v2618
        %v2620 = vpop.xlane.xlu0 %2619
        %v2621 = vrcp.pop %v2614
        %v2622 = vrcp.pop %v2617
        %v2623 = vrcp.pop %v2620
        %v2624 = vmul.f32 %v2607, %v2621
        %v2625 = vmul.f32 %v2609, %v2622
        %v2626 = vmul.f32 %v2611, %v2623
        %v2627 = vpack.c.bf16 %v2625, %v2624
        %v2628 = vpack.c.bf16 %v2626, %v2626
        %2629 = vrot.lane.b32.xlu0 %v2029, 40
        %v2630 = vpop.permute.xlu0 %2629
        %2631 = vrot.lane.b32.xlu0 %v2030, 40
        %v2632 = vpop.permute.xlu0 %2631
        %v2635 = vsel %vm1377, %v2627, 0
        %v2638 = vsel %vm1377, %v2628, 0
        %v2641 = vsel %vm1424, %v2632, 0
        %2643 = vmatprep.subr.bf16.mxu0 0
        %2644 = vmatpush1.bf16.msra.mxu0 %v2630
        %2645 = vmatprep.subr.bf16.mxu0 0
        %2646 = vmatpush1.bf16.msra.mxu0 %v2641
        %2647 = vmatprep.subr.bf16.mxu0 0
        %2648 = vmatpush1.bf16.msra.mxu0 0
        %2649 = vmatprep.subr.bf16.mxu0 0
        %2650 = vmatpush1.bf16.msra.mxu0 0
        %2651 = vmatprep.subr.bf16.mxu0 0
        %2652 = vmatpush1.bf16.msra.mxu0 0
        %2653 = vmatprep.subr.bf16.mxu0 0
        %2654 = vmatpush1.bf16.msra.mxu0 0
        %2655 = vmatprep.subr.bf16.mxu0 0
        %2656 = vmatpush1.bf16.msra.mxu0 0
        %2657 = vmatprep.subr.bf16.mxu0 0
        %2658 = vmatpush1.bf16.msra.mxu0 0
        %2659 = vmatprep.subr.bf16.mxu0 0
        %2660 = vmatpush1.bf16.msra.mxu0 0
        %2661 = vmatprep.subr.bf16.mxu0 0
        %2662 = vmatpush1.bf16.msra.mxu0 0
        %2663 = vmatprep.subr.bf16.mxu0 0
        %2664 = vmatpush1.bf16.msra.mxu0 0
        %2665 = vmatprep.subr.bf16.mxu0 0
        %2666 = vmatpush1.bf16.msra.mxu0 0
        %2667 = vmatprep.subr.bf16.mxu0 0
        %2668 = vmatpush1.bf16.msra.mxu0 0
        %2669 = vmatprep.subr.bf16.mxu0 0
        %2670 = vmatpush1.bf16.msra.mxu0 0
        %2671 = vmatprep.subr.bf16.mxu0 0
        %2672 = vmatpush1.bf16.msra.mxu0 0
        %2673 = vmatprep.subr.bf16.mxu0 0
        %2674 = vmatpush1.bf16.msra.mxu0 0
        %2675 = vmatprep.mubr.bf16.mxu0 0
        %2676 = vmatmul.mubr.bf16.gmra.mrb[0].mxu0 %v2635
        %v2677 = vpop.f32.mrb[0].mxu0
        %v2678 = vadd.f32 0.0, %v2677
        %v2679 = vpop.f32.mrb[0].mxu0
        %v2680 = vpop.f32.mrb[0].mxu0
        %v2681 = vadd.f32 0.0, %v2680
        %v2682 = vpop.f32.mrb[0].mxu0
        %2683 = vmatprep.mubr.bf16.mxu0 0
        %2684 = vmatmul.mubr.bf16.gmra.mrb[0].mxu0 %v2638
        %v2685 = vpop.f32.mrb[0].mxu0
        %v2686 = vadd.f32 0.0, %v2685
        %v2687 = vpop.f32.mrb[0].mxu0
        %v2688 = vpop.f32.mrb[0].mxu0
        %v2689 = vpop.f32.mrb[0].mxu0
        %2690 = vdwg.mxu0
        %2694 = vrot.lane.b32.xlu0 %v2348, 8
        %v2695 = vpop.permute.xlu0 %2694
        %2696 = vrot.lane.b32.xlu0 %v2351, 8
        %v2697 = vpop.permute.xlu0 %2696
        %2698 = vrot.lane.b32.xlu0 %v2356, 8
        %v2699 = vpop.permute.xlu0 %2698
        %2706 = vrot.lane.b32.xlu0 %v2513, 16
        %v2707 = vpop.permute.xlu0 %2706
        %2708 = vrot.lane.b32.xlu0 %v2516, 16
        %v2709 = vpop.permute.xlu0 %2708
        %2710 = vrot.lane.b32.xlu0 %v2521, 16
        %v2711 = vpop.permute.xlu0 %2710
        %2718 = vrot.lane.b32.xlu0 %v2678, 24
        %v2719 = vpop.permute.xlu0 %2718
        %2720 = vrot.lane.b32.xlu0 %v2681, 24
        %v2721 = vpop.permute.xlu0 %2720
        %2722 = vrot.lane.b32.xlu0 %v2686, 24
        %v2723 = vpop.permute.xlu0 %2722
        %v2727 = vsel %vm1316, %v2181, %v2695
        %v2728 = vsel %vm1316, %v2184, %v2697
        %v2729 = vsel %vm1316, %v2189, %v2699
        %v2730 = vsel %vm2012, %v2727, %v2707
        %v2731 = vsel %vm2012, %v2728, %v2709
        %v2732 = vsel %vm2012, %v2729, %v2711
        %v2733 = vsel %vm1377, %v2730, %v2719
        %v2734 = vsel %vm1377, %v2731, %v2721
        %v2735 = vsel %vm1377, %v2732, %v2723
        %v2736 = vpack.c.bf16 %v2734, %v2733
        %v2737 = vpack.c.bf16 %v2735, %v2735
        %vm2740 = vcmask 1043456
        %v2741 = vrot.slane %v2736, 4
        %v2742 = vrot.slane %v2737, 4
        %v2743 = vsel %vm2740, %v2741, %v2742
        %vm2746 = vcmask 261124
        %2747 = vst.msk [vmem:[#allocation3 + $0x8] sm:$0xf0] %vm2746, %v2741
        %2748 = vst.msk [vmem:[#allocation3 + $0x10] sm:$0xff] %vm1107, %v2743
        %v2749 = vld [vmem:[#allocation3] sm:$0xff]
        %v2750 = vld [vmem:[#allocation3 + $0x8] sm:$0xff]
        %v2751 = vld [vmem:[#allocation3 + $0x10] sm:$0xff]
        %v2752 = vld [vmem:[%s834] sm:$0xf]
        %v2753 = vld [vmem:[%s834 + $0x4] sm:$0xf]
        %v2754 = vld [vmem:[%s834 + $0x8] sm:$0xf]
        %v2755 = vld [vmem:[%s834 + $0xc] sm:$0xf]
        %v2756 = vld [vmem:[%s837] sm:$0x1]
        %v2758 = vlaneseq
        %v2759 = vshrl.u32 %v2758, 7
        %v2760 = vsub.s32 0, %v2759
        %v2761 = vrot.slane %v2756, %v2760
        %v2767 = vunpack.c.l.b16 %v2752
        %v2768 = vunpack.c.l.b16 %v2753
        %v2769 = vunpack.c.l.b16 %v2754
        %v2770 = vunpack.c.l.b16 %v2755
        %v2771 = vpack.c.b16 %v2768, %v2767
        %v2772 = vpack.c.b16 %v2770, %v2769
        %v2776 = vsel %vm1107, %v2749, 0
        %v2779 = vsel %vm1107, %v2750, 0
        %v2782 = vsel %vm1107, %v2751, 0
        %2784 = vmatprep.subr.bf16.mxu0 0
        %2785 = vmatpush1.bf16.msra.mxu0 %v2771
        %2786 = vmatprep.subr.bf16.mxu0 0
        %2787 = vmatpush1.bf16.msra.mxu0 %v2772
        %2788 = vmatprep.subr.bf16.mxu0 0
        %2789 = vmatpush1.bf16.msra.mxu0 0
        %2790 = vmatprep.subr.bf16.mxu0 0
        %2791 = vmatpush1.bf16.msra.mxu0 0
        %2792 = vmatprep.subr.bf16.mxu0 0
        %2793 = vmatpush1.bf16.msra.mxu0 0
        %2794 = vmatprep.subr.bf16.mxu0 0
        %2795 = vmatpush1.bf16.msra.mxu0 0
        %2796 = vmatprep.subr.bf16.mxu0 0
        %2797 = vmatpush1.bf16.msra.mxu0 0
        %2798 = vmatprep.subr.bf16.mxu0 0
        %2799 = vmatpush1.bf16.msra.mxu0 0
        %2800 = vmatprep.subr.bf16.mxu0 0
        %2801 = vmatpush1.bf16.msra.mxu0 0
        %2802 = vmatprep.subr.bf16.mxu0 0
        %2803 = vmatpush1.bf16.msra.mxu0 0
        %2804 = vmatprep.subr.bf16.mxu0 0
        %2805 = vmatpush1.bf16.msra.mxu0 0
        %2806 = vmatprep.subr.bf16.mxu0 0
        %2807 = vmatpush1.bf16.msra.mxu0 0
        %2808 = vmatprep.subr.bf16.mxu0 0
        %2809 = vmatpush1.bf16.msra.mxu0 0
        %2810 = vmatprep.subr.bf16.mxu0 0
        %2811 = vmatpush1.bf16.msra.mxu0 0
        %2812 = vmatprep.subr.bf16.mxu0 0
        %2813 = vmatpush1.bf16.msra.mxu0 0
        %2814 = vmatprep.subr.bf16.mxu0 0
        %2815 = vmatpush1.bf16.msra.mxu0 0
        %2816 = vmatprep.mubr.bf16.mxu0 0
        %2817 = vmatmul.mubr.bf16.gmra.mrb[0].mxu0 %v2776
        %v2818 = vpop.f32.mrb[0].mxu0
        %v2819 = vadd.f32 %v2761, %v2818
        %v2820 = vpop.f32.mrb[0].mxu0
        %v2821 = vpop.f32.mrb[0].mxu0
        %v2822 = vadd.f32 %v2761, %v2821
        %v2823 = vpop.f32.mrb[0].mxu0
        %2824 = vmatprep.mubr.bf16.mxu0 0
        %2825 = vmatmul.mubr.bf16.gmra.mrb[0].mxu0 %v2779
        %v2826 = vpop.f32.mrb[0].mxu0
        %v2827 = vadd.f32 %v2761, %v2826
        %v2828 = vpop.f32.mrb[0].mxu0
        %v2829 = vpop.f32.mrb[0].mxu0
        %v2830 = vadd.f32 %v2761, %v2829
        %v2831 = vpop.f32.mrb[0].mxu0
        %2832 = vmatprep.mubr.bf16.mxu0 0
        %2833 = vmatmul.mubr.bf16.gmra.mrb[0].mxu0 %v2782
        %v2834 = vpop.f32.mrb[0].mxu0
        %v2835 = vadd.f32 %v2761, %v2834
        %v2836 = vpop.f32.mrb[0].mxu0
        %v2837 = vpop.f32.mrb[0].mxu0
        %v2838 = vadd.f32 %v2761, %v2837
        %v2839 = vpop.f32.mrb[0].mxu0
        %2840 = vdwg.mxu0
        %v2841 = vadd.f32 %v1095, %v2819
        %v2842 = vadd.f32 %v1096, %v2822
        %v2843 = vadd.f32 %v1097, %v2827
        %v2844 = vadd.f32 %v1098, %v2830
        %v2845 = vadd.f32 %v1099, %v2835
        %v2846 = vadd.f32 %v1100, %v2838
        %v2847 = vld [vmem:[%s840] sm:$0x1]
        %v2848 = vld [vmem:[%s843] sm:$0x1]
        %v2849 = vsel %vm1107, %v2841, 0.0
        %2850 = vadd.xlane.f32.xlu0 %v2849
        %v2851 = vpop.xlane.xlu0 %2850
        %v2852 = vsel %vm1107, %v2842, 0.0
        %2853 = vadd.xlane.f32.xlu0 %v2852
        %v2854 = vpop.xlane.xlu0 %2853
        %v2855 = vsel %vm1107, %v2843, 0.0
        %2856 = vadd.xlane.f32.xlu0 %v2855
        %v2857 = vpop.xlane.xlu0 %2856
        %v2858 = vsel %vm1107, %v2844, 0.0
        %2859 = vadd.xlane.f32.xlu0 %v2858
        %v2860 = vpop.xlane.xlu0 %2859
        %v2861 = vsel %vm1107, %v2845, 0.0
        %2862 = vadd.xlane.f32.xlu0 %v2861
        %v2863 = vpop.xlane.xlu0 %2862
        %v2864 = vsel %vm1107, %v2846, 0.0
        %2865 = vadd.xlane.f32.xlu0 %v2864
        %v2866 = vpop.xlane.xlu0 %2865
        %v2867 = vmul.f32 %v2851, %v1126
        %v2868 = vmul.f32 %v2854, %v1126
        %v2869 = vmul.f32 %v2857, %v1126
        %v2870 = vmul.f32 %v2860, %v1126
        %v2871 = vmul.f32 %v2863, %v1126
        %v2872 = vmul.f32 %v2866, %v1126
        %v2873 = vsub.f32 %v2841, %v2867
        %v2874 = vsub.f32 %v2842, %v2868
        %v2875 = vsub.f32 %v2843, %v2869
        %v2876 = vsub.f32 %v2844, %v2870
        %v2877 = vsub.f32 %v2845, %v2871
        %v2878 = vsub.f32 %v2846, %v2872
        %v2879 = vmul.f32 %v2873, %v2873
        %v2880 = vmul.f32 %v2874, %v2874
        %v2881 = vmul.f32 %v2875, %v2875
        %v2882 = vmul.f32 %v2876, %v2876
        %v2883 = vmul.f32 %v2877, %v2877
        %v2884 = vmul.f32 %v2878, %v2878
        %v2885 = vsel %vm1107, %v2879, 0.0
        %2886 = vadd.xlane.f32.xlu0 %v2885
        %v2887 = vpop.xlane.xlu0 %2886
        %v2888 = vsel %vm1107, %v2880, 0.0
        %2889 = vadd.xlane.f32.xlu0 %v2888
        %v2890 = vpop.xlane.xlu0 %2889
        %v2891 = vsel %vm1107, %v2881, 0.0
        %2892 = vadd.xlane.f32.xlu0 %v2891
        %v2893 = vpop.xlane.xlu0 %2892
        %v2894 = vsel %vm1107, %v2882, 0.0
        %2895 = vadd.xlane.f32.xlu0 %v2894
        %v2896 = vpop.xlane.xlu0 %2895
        %v2897 = vsel %vm1107, %v2883, 0.0
        %2898 = vadd.xlane.f32.xlu0 %v2897
        %v2899 = vpop.xlane.xlu0 %2898
        %v2900 = vsel %vm1107, %v2884, 0.0
        %2901 = vadd.xlane.f32.xlu0 %v2900
        %v2902 = vpop.xlane.xlu0 %2901
        %v2903 = vmul.f32 %v2887, %v1126
        %v2904 = vmul.f32 %v2890, %v1126
        %v2905 = vmul.f32 %v2893, %v1126
        %v2906 = vmul.f32 %v2896, %v1126
        %v2907 = vmul.f32 %v2899, %v1126
        %v2908 = vmul.f32 %v2902, %v1126
        %v2909 = vadd.f32 %v2903, 1e-05
        %v2910 = vadd.f32 %v2904, 1e-05
        %v2911 = vadd.f32 %v2905, 1e-05
        %v2912 = vadd.f32 %v2906, 1e-05
        %v2913 = vadd.f32 %v2907, 1e-05
        %v2914 = vadd.f32 %v2908, 1e-05
        %v2915 = vrsqrt.pop %v2909
        %v2916 = vrsqrt.pop %v2910
        %v2917 = vrsqrt.pop %v2911
        %v2918 = vrsqrt.pop %v2912
        %v2919 = vrsqrt.pop %v2913
        %v2920 = vrsqrt.pop %v2914
        %v2921 = vmul.f32 %v2873, %v2915
        %v2922 = vmul.f32 %v2874, %v2916
        %v2923 = vmul.f32 %v2875, %v2917
        %v2924 = vmul.f32 %v2876, %v2918
        %v2925 = vmul.f32 %v2877, %v2919
        %v2926 = vmul.f32 %v2878, %v2920
        %v2928 = vlaneseq
        %v2929 = vshrl.u32 %v2928, 7
        %v2930 = vsub.s32 0, %v2929
        %v2931 = vrot.slane %v2847, %v2930
        %v2933 = vmul.f32 %v2921, %v2931
        %v2934 = vmul.f32 %v2922, %v2931
        %v2935 = vmul.f32 %v2923, %v2931
        %v2936 = vmul.f32 %v2924, %v2931
        %v2937 = vmul.f32 %v2925, %v2931
        %v2938 = vmul.f32 %v2926, %v2931
        %v2940 = vlaneseq
        %v2941 = vshrl.u32 %v2940, 7
        %v2942 = vsub.s32 0, %v2941
        %v2943 = vrot.slane %v2848, %v2942
        %v2945 = vadd.f32 %v2933, %v2943
        %v2946 = vadd.f32 %v2934, %v2943
        %v2947 = vadd.f32 %v2935, %v2943
        %v2948 = vadd.f32 %v2936, %v2943
        %v2949 = vadd.f32 %v2937, %v2943
        %v2950 = vadd.f32 %v2938, %v2943
        %v2951 = vld [vmem:[%s848] sm:$0xf]
        %v2952 = vld [vmem:[%s848 + $0x4] sm:$0xf]
        %v2953 = vld [vmem:[%s848 + $0x8] sm:$0xf]
        %v2954 = vld [vmem:[%s848 + $0xc] sm:$0xf]
        %v2955 = vpack.c.bf16 %v2946, %v2945
        %v2956 = vpack.c.bf16 %v2948, %v2947
        %v2957 = vpack.c.bf16 %v2950, %v2949
        %v2958 = vld [vmem:[%s851] sm:$0x1]
        %v2960 = vlaneseq
        %v2961 = vshrl.u32 %v2960, 7
        %v2962 = vsub.s32 0, %v2961
        %v2963 = vrot.slane %v2958, %v2962
        %v2969 = vunpack.c.l.b16 %v2951
        %v2970 = vunpack.c.l.b16 %v2952
        %v2971 = vunpack.c.l.b16 %v2953
        %v2972 = vunpack.c.l.b16 %v2954
        %v2973 = vpack.c.b16 %v2970, %v2969
        %v2974 = vpack.c.b16 %v2972, %v2971
        %v2978 = vsel %vm1107, %v2955, 0
        %v2981 = vsel %vm1107, %v2956, 0
        %v2984 = vsel %vm1107, %v2957, 0
        %2986 = vmatprep.subr.bf16.mxu0 0
        %2987 = vmatpush1.bf16.msra.mxu0 %v2973
        %2988 = vmatprep.subr.bf16.mxu0 0
        %2989 = vmatpush1.bf16.msra.mxu0 %v2974
        %2990 = vmatprep.subr.bf16.mxu0 0
        %2991 = vmatpush1.bf16.msra.mxu0 0
        %2992 = vmatprep.subr.bf16.mxu0 0
        %2993 = vmatpush1.bf16.msra.mxu0 0
        %2994 = vmatprep.subr.bf16.mxu0 0
        %2995 = vmatpush1.bf16.msra.mxu0 0
        %2996 = vmatprep.subr.bf16.mxu0 0
        %2997 = vmatpush1.bf16.msra.mxu0 0
        %2998 = vmatprep.subr.bf16.mxu0 0
        %2999 = vmatpush1.bf16.msra.mxu0 0
        %3000 = vmatprep.subr.bf16.mxu0 0
        %3001 = vmatpush1.bf16.msra.mxu0 0
        %3002 = vmatprep.subr.bf16.mxu0 0
        %3003 = vmatpush1.bf16.msra.mxu0 0
        %3004 = vmatprep.subr.bf16.mxu0 0
        %3005 = vmatpush1.bf16.msra.mxu0 0
        %3006 = vmatprep.subr.bf16.mxu0 0
        %3007 = vmatpush1.bf16.msra.mxu0 0
        %3008 = vmatprep.subr.bf16.mxu0 0
        %3009 = vmatpush1.bf16.msra.mxu0 0
        %3010 = vmatprep.subr.bf16.mxu0 0
        %3011 = vmatpush1.bf16.msra.mxu0 0
        %3012 = vmatprep.subr.bf16.mxu0 0
        %3013 = vmatpush1.bf16.msra.mxu0 0
        %3014 = vmatprep.subr.bf16.mxu0 0
        %3015 = vmatpush1.bf16.msra.mxu0 0
        %3016 = vmatprep.subr.bf16.mxu0 0
        %3017 = vmatpush1.bf16.msra.mxu0 0
        %3018 = vmatprep.mubr.bf16.mxu0 0
        %3019 = vmatmul.mubr.bf16.gmra.mrb[0].mxu0 %v2978
        %v3020 = vpop.f32.mrb[0].mxu0
        %v3021 = vadd.f32 %v2963, %v3020
        %v3022 = vpop.f32.mrb[0].mxu0
        %v3023 = vpop.f32.mrb[0].mxu0
        %v3024 = vadd.f32 %v2963, %v3023
        %v3025 = vpop.f32.mrb[0].mxu0
        %3026 = vmatprep.mubr.bf16.mxu0 0
        %3027 = vmatmul.mubr.bf16.gmra.mrb[0].mxu0 %v2981
        %v3028 = vpop.f32.mrb[0].mxu0
        %v3029 = vadd.f32 %v2963, %v3028
        %v3030 = vpop.f32.mrb[0].mxu0
        %v3031 = vpop.f32.mrb[0].mxu0
        %v3032 = vadd.f32 %v2963, %v3031
        %v3033 = vpop.f32.mrb[0].mxu0
        %3034 = vmatprep.mubr.bf16.mxu0 0
        %3035 = vmatmul.mubr.bf16.gmra.mrb[0].mxu0 %v2984
        %v3036 = vpop.f32.mrb[0].mxu0
        %v3037 = vadd.f32 %v2963, %v3036
        %v3038 = vpop.f32.mrb[0].mxu0
        %v3039 = vpop.f32.mrb[0].mxu0
        %v3040 = vadd.f32 %v2963, %v3039
        %v3041 = vpop.f32.mrb[0].mxu0
        %3042 = vdwg.mxu0
        %v3043 = vmul.f32 %v3021, 1.702
        %v3044 = vmul.f32 %v3024, 1.702
        %v3045 = vmul.f32 %v3029, 1.702
        %v3046 = vmul.f32 %v3032, 1.702
        %v3047 = vmul.f32 %v3037, 1.702
        %v3048 = vmul.f32 %v3040, 1.702
        %v3049 = vxor.u32 %v3043, 2147483648
        %v3050 = vxor.u32 %v3044, 2147483648
        %v3051 = vxor.u32 %v3045, 2147483648
        %v3052 = vxor.u32 %v3046, 2147483648
        %v3053 = vxor.u32 %v3047, 2147483648
        %v3054 = vxor.u32 %v3048, 2147483648
        %v3055 = vmul.f32 %v3049, 1.442695
        %v3056 = vpow.pop %v3055
        %v3057 = vmul.f32 %v3050, 1.442695
        %v3058 = vpow.pop %v3057
        %v3059 = vmul.f32 %v3051, 1.442695
        %v3060 = vpow.pop %v3059
        %v3061 = vmul.f32 %v3052, 1.442695
        %v3062 = vpow.pop %v3061
        %v3063 = vmul.f32 %v3053, 1.442695
        %v3064 = vpow.pop %v3063
        %v3065 = vmul.f32 %v3054, 1.442695
        %v3066 = vpow.pop %v3065
        %v3067 = vadd.f32 %v3056, 1.0
        %v3068 = vadd.f32 %v3058, 1.0
        %v3069 = vadd.f32 %v3060, 1.0
        %v3070 = vadd.f32 %v3062, 1.0
        %v3071 = vadd.f32 %v3064, 1.0
        %v3072 = vadd.f32 %v3066, 1.0
        %v3073 = vrcp.pop %v3067
        %v3074 = vmul.f32 1.0, %v3073
        %v3075 = vrcp.pop %v3068
        %v3076 = vmul.f32 1.0, %v3075
        %v3077 = vrcp.pop %v3069
        %v3078 = vmul.f32 1.0, %v3077
        %v3079 = vrcp.pop %v3070
        %v3080 = vmul.f32 1.0, %v3079
        %v3081 = vrcp.pop %v3071
        %v3082 = vmul.f32 1.0, %v3081
        %v3083 = vrcp.pop %v3072
        %v3084 = vmul.f32 1.0, %v3083
        %v3085 = vmul.f32 %v3021, %v3074
        %v3086 = vmul.f32 %v3024, %v3076
        %v3087 = vmul.f32 %v3029, %v3078
        %v3088 = vmul.f32 %v3032, %v3080
        %v3089 = vmul.f32 %v3037, %v3082
        %v3090 = vmul.f32 %v3040, %v3084
        %v3091 = vld [vmem:[%s856] sm:$0xf]
        %v3092 = vld [vmem:[%s856 + $0x4] sm:$0xf]
        %v3093 = vld [vmem:[%s856 + $0x8] sm:$0xf]
        %v3094 = vld [vmem:[%s856 + $0xc] sm:$0xf]
        %v3095 = vld [vmem:[%s856 + $0x10] sm:$0xf]
        %v3096 = vld [vmem:[%s856 + $0x14] sm:$0xf]
        %v3097 = vld [vmem:[%s856 + $0x18] sm:$0xf]
        %v3098 = vld [vmem:[%s856 + $0x1c] sm:$0xf]
        %v3099 = vld [vmem:[%s856 + $0x20] sm:$0xf]
        %v3100 = vld [vmem:[%s856 + $0x24] sm:$0xf]
        %v3101 = vld [vmem:[%s856 + $0x28] sm:$0xf]
        %v3102 = vld [vmem:[%s856 + $0x2c] sm:$0xf]
        %v3103 = vld [vmem:[%s856 + $0x30] sm:$0xf]
        %v3104 = vld [vmem:[%s856 + $0x34] sm:$0xf]
        %v3105 = vld [vmem:[%s856 + $0x38] sm:$0xf]
        %v3106 = vld [vmem:[%s856 + $0x3c] sm:$0xf]
        %v3107 = vpack.c.bf16 %v3086, %v3085
        %v3108 = vpack.c.bf16 %v3088, %v3087
        %v3109 = vpack.c.bf16 %v3090, %v3089
        %v3110 = vld [vmem:[%s859] sm:$0x1]
        %v3112 = vlaneseq
        %v3113 = vshrl.u32 %v3112, 7
        %v3114 = vsub.s32 0, %v3113
        %v3115 = vrot.slane %v3110, %v3114
        %v3133 = vunpack.c.l.b16 %v3091
        %v3134 = vunpack.c.l.b16 %v3092
        %v3135 = vunpack.c.l.b16 %v3093
        %v3136 = vunpack.c.l.b16 %v3094
        %v3137 = vunpack.c.l.b16 %v3095
        %v3138 = vunpack.c.l.b16 %v3096
        %v3139 = vunpack.c.l.b16 %v3097
        %v3140 = vunpack.c.l.b16 %v3098
        %v3141 = vunpack.c.l.b16 %v3099
        %v3142 = vunpack.c.l.b16 %v3100
        %v3143 = vunpack.c.l.b16 %v3101
        %v3144 = vunpack.c.l.b16 %v3102
        %v3145 = vunpack.c.l.b16 %v3103
        %v3146 = vunpack.c.l.b16 %v3104
        %v3147 = vunpack.c.l.b16 %v3105
        %v3148 = vunpack.c.l.b16 %v3106
        %v3149 = vpack.c.b16 %v3134, %v3133
        %v3150 = vpack.c.b16 %v3136, %v3135
        %v3151 = vpack.c.b16 %v3138, %v3137
        %v3152 = vpack.c.b16 %v3140, %v3139
        %v3153 = vpack.c.b16 %v3142, %v3141
        %v3154 = vpack.c.b16 %v3144, %v3143
        %v3155 = vpack.c.b16 %v3146, %v3145
        %v3156 = vpack.c.b16 %v3148, %v3147
        %3165 = vmatprep.subr.bf16.mxu0 0
        %3166 = vmatpush1.bf16.msra.mxu0 %v3149
        %3167 = vmatprep.subr.bf16.mxu0 0
        %3168 = vmatpush1.bf16.msra.mxu0 %v3150
        %3169 = vmatprep.subr.bf16.mxu0 0
        %3170 = vmatpush1.bf16.msra.mxu0 %v3151
        %3171 = vmatprep.subr.bf16.mxu0 0
        %3172 = vmatpush1.bf16.msra.mxu0 %v3152
        %3173 = vmatprep.subr.bf16.mxu0 0
        %3174 = vmatpush1.bf16.msra.mxu0 %v3153
        %3175 = vmatprep.subr.bf16.mxu0 0
        %3176 = vmatpush1.bf16.msra.mxu0 %v3154
        %3177 = vmatprep.subr.bf16.mxu0 0
        %3178 = vmatpush1.bf16.msra.mxu0 %v3155
        %3179 = vmatprep.subr.bf16.mxu0 0
        %3180 = vmatpush1.bf16.msra.mxu0 %v3156
        %3181 = vmatprep.subr.bf16.mxu0 0
        %3182 = vmatpush1.bf16.msra.mxu0 0
        %3183 = vmatprep.subr.bf16.mxu0 0
        %3184 = vmatpush1.bf16.msra.mxu0 0
        %3185 = vmatprep.subr.bf16.mxu0 0
        %3186 = vmatpush1.bf16.msra.mxu0 0
        %3187 = vmatprep.subr.bf16.mxu0 0
        %3188 = vmatpush1.bf16.msra.mxu0 0
        %3189 = vmatprep.subr.bf16.mxu0 0
        %3190 = vmatpush1.bf16.msra.mxu0 0
        %3191 = vmatprep.subr.bf16.mxu0 0
        %3192 = vmatpush1.bf16.msra.mxu0 0
        %3193 = vmatprep.subr.bf16.mxu0 0
        %3194 = vmatpush1.bf16.msra.mxu0 0
        %3195 = vmatprep.subr.bf16.mxu0 0
        %3196 = vmatpush1.bf16.msra.mxu0 0
        %3197 = vmatprep.mubr.bf16.mxu0 0
        %3198 = vmatmul.mubr.bf16.gmra.mrb[0].mxu0 %v3107
        %v3199 = vpop.f32.mrb[0].mxu0
        %v3200 = vadd.f32 %v3115, %v3199
        %v3201 = vpop.f32.mrb[0].mxu0
        %v3202 = vpop.f32.mrb[0].mxu0
        %v3203 = vadd.f32 %v3115, %v3202
        %v3204 = vpop.f32.mrb[0].mxu0
        %3205 = vmatprep.mubr.bf16.mxu0 0
        %3206 = vmatmul.mubr.bf16.gmra.mrb[0].mxu0 %v3108
        %v3207 = vpop.f32.mrb[0].mxu0
        %v3208 = vadd.f32 %v3115, %v3207
        %v3209 = vpop.f32.mrb[0].mxu0
        %v3210 = vpop.f32.mrb[0].mxu0
        %v3211 = vadd.f32 %v3115, %v3210
        %v3212 = vpop.f32.mrb[0].mxu0
        %3213 = vmatprep.mubr.bf16.mxu0 0
        %3214 = vmatmul.mubr.bf16.gmra.mrb[0].mxu0 %v3109
        %v3215 = vpop.f32.mrb[0].mxu0
        %v3216 = vadd.f32 %v3115, %v3215
        %v3217 = vpop.f32.mrb[0].mxu0
        %v3218 = vpop.f32.mrb[0].mxu0
        %v3219 = vadd.f32 %v3115, %v3218
        %v3220 = vpop.f32.mrb[0].mxu0
        %3221 = vdwg.mxu0
        %v3222 = vadd.f32 %v2841, %v3200
        %v3223 = vadd.f32 %v2842, %v3203
        %v3224 = vadd.f32 %v2843, %v3208
        %v3225 = vadd.f32 %v2844, %v3211
        %v3226 = vadd.f32 %v2845, %v3216
        %v3227 = vadd.f32 %v2846, %v3219
        %3228 = vst.msk [vmem:[#allocation2] sm:$0xff] %vm1107, %v3222
        %3229 = vst.msk [vmem:[#allocation2 + $0x8] sm:$0xff] %vm1107, %v3223
        %3230 = vst.msk [vmem:[#allocation2 + $0x10] sm:$0xff] %vm1107, %v3224
        %3231 = vst.msk [vmem:[#allocation2 + $0x18] sm:$0xff] %vm1107, %v3225
        %3232 = vst.msk [vmem:[#allocation2 + $0x20] sm:$0xff] %vm1107, %v3226
        %3233 = vst.msk [vmem:[#allocation2 + $0x28] sm:$0xff] %vm1107, %v3227
        %p3234 = scmp.eq.s32.totalorder %s39, 1
        // Predicated region
        $region105: #{vit_forward_pallas.1} parent=99 // pred_check
          %p3235 = pneg %p3234
        $region106: #{vit_forward_pallas.1} parent=99 // pred_check_branch
          %3237 = sbr.rel (%p3235) target = $region108
        $region107: #{vit_forward_pallas.1} parent=99 // pred_region
          %v3238 = vld [vmem:[%s834] sm:$0xf]
          %v3239 = vld [vmem:[%s834 + $0x4] sm:$0xf]
          %v3240 = vld [vmem:[%s834 + $0x8] sm:$0xf]
          %v3241 = vld [vmem:[%s834 + $0xc] sm:$0xf]
          %v3242 = vpack.c.bf16 %v1292, %v1289
          %v3243 = vpack.c.bf16 %v1300, %v1297
          %v3244 = vld [vmem:[%s837] sm:$0x1]
          %v3246 = vlaneseq
          %v3247 = vshrl.u32 %v3246, 7
          %v3248 = vsub.s32 0, %v3247
          %v3249 = vrot.slane %v3244, %v3248
          %3253 = vrot.lane.b32.xlu0 %v3242, 64
          %v3254 = vpop.permute.xlu0 %3253
          %3255 = vrot.lane.b32.xlu0 %v3243, 64
          %v3256 = vpop.permute.xlu0 %3255
          %v3261 = vunpack.c.l.b16 %v3238
          %v3262 = vunpack.c.l.b16 %v3239
          %v3263 = vunpack.c.l.b16 %v3240
          %v3264 = vunpack.c.l.b16 %v3241
          %v3265 = vpack.c.b16 %v3262, %v3261
          %v3266 = vpack.c.b16 %v3264, %v3263
          %v3270 = vsel %vm1107, %v1414, 0
          %v3273 = vsel %vm1107, %v3254, 0
          %v3276 = vsel %vm1107, %v3256, 0
          %3278 = vmatprep.subr.bf16.mxu0 0
          %3279 = vmatpush1.bf16.msra.mxu0 %v3265
          %3280 = vmatprep.subr.bf16.mxu0 0
          %3281 = vmatpush1.bf16.msra.mxu0 %v3266
          %3282 = vmatprep.subr.bf16.mxu0 0
          %3283 = vmatpush1.bf16.msra.mxu0 0
          %3284 = vmatprep.subr.bf16.mxu0 0
          %3285 = vmatpush1.bf16.msra.mxu0 0
          %3286 = vmatprep.subr.bf16.mxu0 0
          %3287 = vmatpush1.bf16.msra.mxu0 0
          %3288 = vmatprep.subr.bf16.mxu0 0
          %3289 = vmatpush1.bf16.msra.mxu0 0
          %3290 = vmatprep.subr.bf16.mxu0 0
          %3291 = vmatpush1.bf16.msra.mxu0 0
          %3292 = vmatprep.subr.bf16.mxu0 0
          %3293 = vmatpush1.bf16.msra.mxu0 0
          %3294 = vmatprep.subr.bf16.mxu0 0
          %3295 = vmatpush1.bf16.msra.mxu0 0
          %3296 = vmatprep.subr.bf16.mxu0 0
          %3297 = vmatpush1.bf16.msra.mxu0 0
          %3298 = vmatprep.subr.bf16.mxu0 0
          %3299 = vmatpush1.bf16.msra.mxu0 0
          %3300 = vmatprep.subr.bf16.mxu0 0
          %3301 = vmatpush1.bf16.msra.mxu0 0
          %3302 = vmatprep.subr.bf16.mxu0 0
          %3303 = vmatpush1.bf16.msra.mxu0 0
          %3304 = vmatprep.subr.bf16.mxu0 0
          %3305 = vmatpush1.bf16.msra.mxu0 0
          %3306 = vmatprep.subr.bf16.mxu0 0
          %3307 = vmatpush1.bf16.msra.mxu0 0
          %3308 = vmatprep.subr.bf16.mxu0 0
          %3309 = vmatpush1.bf16.msra.mxu0 0
          %3310 = vmatprep.mubr.bf16.mxu0 0
          %3311 = vmatmul.mubr.bf16.gmra.mrb[0].mxu0 %v3270
          %v3312 = vpop.f32.mrb[0].mxu0
          %v3313 = vadd.f32 %v3249, %v3312
          %v3314 = vpop.f32.mrb[0].mxu0
          %v3315 = vpop.f32.mrb[0].mxu0
          %v3316 = vadd.f32 %v3249, %v3315
          %v3317 = vpop.f32.mrb[0].mxu0
          %3318 = vmatprep.mubr.bf16.mxu0 0
          %3319 = vmatmul.mubr.bf16.gmra.mrb[0].mxu0 %v3273
          %v3320 = vpop.f32.mrb[0].mxu0
          %v3321 = vadd.f32 %v3249, %v3320
          %v3322 = vpop.f32.mrb[0].mxu0
          %v3323 = vpop.f32.mrb[0].mxu0
          %v3324 = vadd.f32 %v3249, %v3323
          %v3325 = vpop.f32.mrb[0].mxu0
          %3326 = vmatprep.mubr.bf16.mxu0 0
          %3327 = vmatmul.mubr.bf16.gmra.mrb[0].mxu0 %v3276
          %v3328 = vpop.f32.mrb[0].mxu0
          %v3329 = vadd.f32 %v3249, %v3328
          %v3330 = vpop.f32.mrb[0].mxu0
          %v3331 = vpop.f32.mrb[0].mxu0
          %v3332 = vadd.f32 %v3249, %v3331
          %v3333 = vpop.f32.mrb[0].mxu0
          %3334 = vdwg.mxu0
          %v3335 = vadd.f32 %v3313, %v1095
          %v3336 = vadd.f32 %v3316, %v1096
          %v3337 = vadd.f32 %v3321, %v1097
          %v3338 = vadd.f32 %v3324, %v1098
          %v3339 = vadd.f32 %v3329, %v1099
          %v3340 = vadd.f32 %v3332, %v1100
          %v3341 = vld [vmem:[%s840] sm:$0x1]
          %v3342 = vld [vmem:[%s843] sm:$0x1]
          %v3343 = vsel %vm1107, %v3335, 0.0
          %3344 = vadd.xlane.f32.xlu0 %v3343
          %v3345 = vpop.xlane.xlu0 %3344
          %v3346 = vsel %vm1107, %v3336, 0.0
          %3347 = vadd.xlane.f32.xlu0 %v3346
          %v3348 = vpop.xlane.xlu0 %3347
          %v3349 = vsel %vm1107, %v3337, 0.0
          %3350 = vadd.xlane.f32.xlu0 %v3349
          %v3351 = vpop.xlane.xlu0 %3350
          %v3352 = vsel %vm1107, %v3338, 0.0
          %3353 = vadd.xlane.f32.xlu0 %v3352
          %v3354 = vpop.xlane.xlu0 %3353
          %v3355 = vsel %vm1107, %v3339, 0.0
          %3356 = vadd.xlane.f32.xlu0 %v3355
          %v3357 = vpop.xlane.xlu0 %3356
          %v3358 = vsel %vm1107, %v3340, 0.0
          %3359 = vadd.xlane.f32.xlu0 %v3358
          %v3360 = vpop.xlane.xlu0 %3359
          %v3361 = vmul.f32 %v3345, %v1126
          %v3362 = vmul.f32 %v3348, %v1126
          %v3363 = vmul.f32 %v3351, %v1126
          %v3364 = vmul.f32 %v3354, %v1126
          %v3365 = vmul.f32 %v3357, %v1126
          %v3366 = vmul.f32 %v3360, %v1126
          %v3367 = vsub.f32 %v3335, %v3361
          %v3368 = vsub.f32 %v3336, %v3362
          %v3369 = vsub.f32 %v3337, %v3363
          %v3370 = vsub.f32 %v3338, %v3364
          %v3371 = vsub.f32 %v3339, %v3365
          %v3372 = vsub.f32 %v3340, %v3366
          %v3373 = vmul.f32 %v3367, %v3367
          %v3374 = vmul.f32 %v3368, %v3368
          %v3375 = vmul.f32 %v3369, %v3369
          %v3376 = vmul.f32 %v3370, %v3370
          %v3377 = vmul.f32 %v3371, %v3371
          %v3378 = vmul.f32 %v3372, %v3372
          %v3379 = vsel %vm1107, %v3373, 0.0
          %3380 = vadd.xlane.f32.xlu0 %v3379
          %v3381 = vpop.xlane.xlu0 %3380
          %v3382 = vsel %vm1107, %v3374, 0.0
          %3383 = vadd.xlane.f32.xlu0 %v3382
          %v3384 = vpop.xlane.xlu0 %3383
          %v3385 = vsel %vm1107, %v3375, 0.0
          %3386 = vadd.xlane.f32.xlu0 %v3385
          %v3387 = vpop.xlane.xlu0 %3386
          %v3388 = vsel %vm1107, %v3376, 0.0
          %3389 = vadd.xlane.f32.xlu0 %v3388
          %v3390 = vpop.xlane.xlu0 %3389
          %v3391 = vsel %vm1107, %v3377, 0.0
          %3392 = vadd.xlane.f32.xlu0 %v3391
          %v3393 = vpop.xlane.xlu0 %3392
          %v3394 = vsel %vm1107, %v3378, 0.0
          %3395 = vadd.xlane.f32.xlu0 %v3394
          %v3396 = vpop.xlane.xlu0 %3395
          %v3397 = vmul.f32 %v3381, %v1126
          %v3398 = vmul.f32 %v3384, %v1126
          %v3399 = vmul.f32 %v3387, %v1126
          %v3400 = vmul.f32 %v3390, %v1126
          %v3401 = vmul.f32 %v3393, %v1126
          %v3402 = vmul.f32 %v3396, %v1126
          %v3403 = vadd.f32 %v3397, 1e-05
          %v3404 = vadd.f32 %v3398, 1e-05
          %v3405 = vadd.f32 %v3399, 1e-05
          %v3406 = vadd.f32 %v3400, 1e-05
          %v3407 = vadd.f32 %v3401, 1e-05
          %v3408 = vadd.f32 %v3402, 1e-05
          %v3409 = vrsqrt.pop %v3403
          %v3410 = vrsqrt.pop %v3404
          %v3411 = vrsqrt.pop %v3405
          %v3412 = vrsqrt.pop %v3406
          %v3413 = vrsqrt.pop %v3407
          %v3414 = vrsqrt.pop %v3408
          %v3415 = vmul.f32 %v3367, %v3409
          %v3416 = vmul.f32 %v3368, %v3410
          %v3417 = vmul.f32 %v3369, %v3411
          %v3418 = vmul.f32 %v3370, %v3412
          %v3419 = vmul.f32 %v3371, %v3413
          %v3420 = vmul.f32 %v3372, %v3414
          %v3422 = vlaneseq
          %v3423 = vshrl.u32 %v3422, 7
          %v3424 = vsub.s32 0, %v3423
          %v3425 = vrot.slane %v3341, %v3424
          %v3427 = vmul.f32 %v3415, %v3425
          %v3428 = vmul.f32 %v3416, %v3425
          %v3429 = vmul.f32 %v3417, %v3425
          %v3430 = vmul.f32 %v3418, %v3425
          %v3431 = vmul.f32 %v3419, %v3425
          %v3432 = vmul.f32 %v3420, %v3425
          %v3434 = vlaneseq
          %v3435 = vshrl.u32 %v3434, 7
          %v3436 = vsub.s32 0, %v3435
          %v3437 = vrot.slane %v3342, %v3436
          %v3439 = vadd.f32 %v3427, %v3437
          %v3440 = vadd.f32 %v3428, %v3437
          %v3441 = vadd.f32 %v3429, %v3437
          %v3442 = vadd.f32 %v3430, %v3437
          %v3443 = vadd.f32 %v3431, %v3437
          %v3444 = vadd.f32 %v3432, %v3437
          %v3445 = vld [vmem:[%s848] sm:$0xf]
          %v3446 = vld [vmem:[%s848 + $0x4] sm:$0xf]
          %v3447 = vld [vmem:[%s848 + $0x8] sm:$0xf]
          %v3448 = vld [vmem:[%s848 + $0xc] sm:$0xf]
          %v3449 = vpack.c.bf16 %v3440, %v3439
          %v3450 = vpack.c.bf16 %v3442, %v3441
          %v3451 = vpack.c.bf16 %v3444, %v3443
          %v3452 = vld [vmem:[%s851] sm:$0x1]
          %v3454 = vlaneseq
          %v3455 = vshrl.u32 %v3454, 7
          %v3456 = vsub.s32 0, %v3455
          %v3457 = vrot.slane %v3452, %v3456
          %v3463 = vunpack.c.l.b16 %v3445
          %v3464 = vunpack.c.l.b16 %v3446
          %v3465 = vunpack.c.l.b16 %v3447
          %v3466 = vunpack.c.l.b16 %v3448
          %v3467 = vpack.c.b16 %v3464, %v3463
          %v3468 = vpack.c.b16 %v3466, %v3465
          %v3472 = vsel %vm1107, %v3449, 0
          %v3475 = vsel %vm1107, %v3450, 0
          %v3478 = vsel %vm1107, %v3451, 0
          %3480 = vmatprep.subr.bf16.mxu0 0
          %3481 = vmatpush1.bf16.msra.mxu0 %v3467
          %3482 = vmatprep.subr.bf16.mxu0 0
          %3483 = vmatpush1.bf16.msra.mxu0 %v3468
          %3484 = vmatprep.subr.bf16.mxu0 0
          %3485 = vmatpush1.bf16.msra.mxu0 0
          %3486 = vmatprep.subr.bf16.mxu0 0
          %3487 = vmatpush1.bf16.msra.mxu0 0
          %3488 = vmatprep.subr.bf16.mxu0 0
          %3489 = vmatpush1.bf16.msra.mxu0 0
          %3490 = vmatprep.subr.bf16.mxu0 0
          %3491 = vmatpush1.bf16.msra.mxu0 0
          %3492 = vmatprep.subr.bf16.mxu0 0
          %3493 = vmatpush1.bf16.msra.mxu0 0
          %3494 = vmatprep.subr.bf16.mxu0 0
          %3495 = vmatpush1.bf16.msra.mxu0 0
          %3496 = vmatprep.subr.bf16.mxu0 0
          %3497 = vmatpush1.bf16.msra.mxu0 0
          %3498 = vmatprep.subr.bf16.mxu0 0
          %3499 = vmatpush1.bf16.msra.mxu0 0
          %3500 = vmatprep.subr.bf16.mxu0 0
          %3501 = vmatpush1.bf16.msra.mxu0 0
          %3502 = vmatprep.subr.bf16.mxu0 0
          %3503 = vmatpush1.bf16.msra.mxu0 0
          %3504 = vmatprep.subr.bf16.mxu0 0
          %3505 = vmatpush1.bf16.msra.mxu0 0
          %3506 = vmatprep.subr.bf16.mxu0 0
          %3507 = vmatpush1.bf16.msra.mxu0 0
          %3508 = vmatprep.subr.bf16.mxu0 0
          %3509 = vmatpush1.bf16.msra.mxu0 0
          %3510 = vmatprep.subr.bf16.mxu0 0
          %3511 = vmatpush1.bf16.msra.mxu0 0
          %3512 = vmatprep.mubr.bf16.mxu0 0
          %3513 = vmatmul.mubr.bf16.gmra.mrb[0].mxu0 %v3472
          %v3514 = vpop.f32.mrb[0].mxu0
          %v3515 = vadd.f32 %v3457, %v3514
          %v3516 = vpop.f32.mrb[0].mxu0
          %v3517 = vpop.f32.mrb[0].mxu0
          %v3518 = vadd.f32 %v3457, %v3517
          %v3519 = vpop.f32.mrb[0].mxu0
          %3520 = vmatprep.mubr.bf16.mxu0 0
          %3521 = vmatmul.mubr.bf16.gmra.mrb[0].mxu0 %v3475
          %v3522 = vpop.f32.mrb[0].mxu0
          %v3523 = vadd.f32 %v3457, %v3522
          %v3524 = vpop.f32.mrb[0].mxu0
          %v3525 = vpop.f32.mrb[0].mxu0
          %v3526 = vadd.f32 %v3457, %v3525
          %v3527 = vpop.f32.mrb[0].mxu0
          %3528 = vmatprep.mubr.bf16.mxu0 0
          %3529 = vmatmul.mubr.bf16.gmra.mrb[0].mxu0 %v3478
          %v3530 = vpop.f32.mrb[0].mxu0
          %v3531 = vadd.f32 %v3457, %v3530
          %v3532 = vpop.f32.mrb[0].mxu0
          %v3533 = vpop.f32.mrb[0].mxu0
          %v3534 = vadd.f32 %v3457, %v3533
          %v3535 = vpop.f32.mrb[0].mxu0
          %3536 = vdwg.mxu0
          %v3537 = vmul.f32 %v3515, 1.702
          %v3538 = vmul.f32 %v3518, 1.702
          %v3539 = vmul.f32 %v3523, 1.702
          %v3540 = vmul.f32 %v3526, 1.702
          %v3541 = vmul.f32 %v3531, 1.702
          %v3542 = vmul.f32 %v3534, 1.702
          %v3543 = vxor.u32 %v3537, 2147483648
          %v3544 = vxor.u32 %v3538, 2147483648
          %v3545 = vxor.u32 %v3539, 2147483648
          %v3546 = vxor.u32 %v3540, 2147483648
          %v3547 = vxor.u32 %v3541, 2147483648
          %v3548 = vxor.u32 %v3542, 2147483648
          %v3549 = vmul.f32 %v3543, 1.442695
          %v3550 = vpow.pop %v3549
          %v3551 = vmul.f32 %v3544, 1.442695
          %v3552 = vpow.pop %v3551
          %v3553 = vmul.f32 %v3545, 1.442695
          %v3554 = vpow.pop %v3553
          %v3555 = vmul.f32 %v3546, 1.442695
          %v3556 = vpow.pop %v3555
          %v3557 = vmul.f32 %v3547, 1.442695
          %v3558 = vpow.pop %v3557
          %v3559 = vmul.f32 %v3548, 1.442695
          %v3560 = vpow.pop %v3559
          %v3561 = vadd.f32 %v3550, 1.0
          %v3562 = vadd.f32 %v3552, 1.0
          %v3563 = vadd.f32 %v3554, 1.0
          %v3564 = vadd.f32 %v3556, 1.0
          %v3565 = vadd.f32 %v3558, 1.0
          %v3566 = vadd.f32 %v3560, 1.0
          %v3567 = vrcp.pop %v3561
          %v3568 = vmul.f32 1.0, %v3567
          %v3569 = vrcp.pop %v3562
          %v3570 = vmul.f32 1.0, %v3569
          %v3571 = vrcp.pop %v3563
          %v3572 = vmul.f32 1.0, %v3571
          %v3573 = vrcp.pop %v3564
          %v3574 = vmul.f32 1.0, %v3573
          %v3575 = vrcp.pop %v3565
          %v3576 = vmul.f32 1.0, %v3575
          %v3577 = vrcp.pop %v3566
          %v3578 = vmul.f32 1.0, %v3577
          %v3579 = vmul.f32 %v3515, %v3568
          %v3580 = vmul.f32 %v3518, %v3570
          %v3581 = vmul.f32 %v3523, %v3572
          %v3582 = vmul.f32 %v3526, %v3574
          %v3583 = vmul.f32 %v3531, %v3576
          %v3584 = vmul.f32 %v3534, %v3578
          %v3585 = vld [vmem:[%s856] sm:$0xf]
          %v3586 = vld [vmem:[%s856 + $0x4] sm:$0xf]
          %v3587 = vld [vmem:[%s856 + $0x8] sm:$0xf]
          %v3588 = vld [vmem:[%s856 + $0xc] sm:$0xf]
          %v3589 = vld [vmem:[%s856 + $0x10] sm:$0xf]
          %v3590 = vld [vmem:[%s856 + $0x14] sm:$0xf]
          %v3591 = vld [vmem:[%s856 + $0x18] sm:$0xf]
          %v3592 = vld [vmem:[%s856 + $0x1c] sm:$0xf]
          %v3593 = vld [vmem:[%s856 + $0x20] sm:$0xf]
          %v3594 = vld [vmem:[%s856 + $0x24] sm:$0xf]
          %v3595 = vld [vmem:[%s856 + $0x28] sm:$0xf]
          %v3596 = vld [vmem:[%s856 + $0x2c] sm:$0xf]
          %v3597 = vld [vmem:[%s856 + $0x30] sm:$0xf]
          %v3598 = vld [vmem:[%s856 + $0x34] sm:$0xf]
          %v3599 = vld [vmem:[%s856 + $0x38] sm:$0xf]
          %v3600 = vld [vmem:[%s856 + $0x3c] sm:$0xf]
          %v3601 = vpack.c.bf16 %v3580, %v3579
          %v3602 = vpack.c.bf16 %v3582, %v3581
          %v3603 = vpack.c.bf16 %v3584, %v3583
          %v3604 = vld [vmem:[%s859] sm:$0x1]
          %v3606 = vlaneseq
          %v3607 = vshrl.u32 %v3606, 7
          %v3608 = vsub.s32 0, %v3607
          %v3609 = vrot.slane %v3604, %v3608
          %v3627 = vunpack.c.l.b16 %v3585
          %v3628 = vunpack.c.l.b16 %v3586
          %v3629 = vunpack.c.l.b16 %v3587
          %v3630 = vunpack.c.l.b16 %v3588
          %v3631 = vunpack.c.l.b16 %v3589
          %v3632 = vunpack.c.l.b16 %v3590
          %v3633 = vunpack.c.l.b16 %v3591
          %v3634 = vunpack.c.l.b16 %v3592
          %v3635 = vunpack.c.l.b16 %v3593
          %v3636 = vunpack.c.l.b16 %v3594
          %v3637 = vunpack.c.l.b16 %v3595
          %v3638 = vunpack.c.l.b16 %v3596
          %v3639 = vunpack.c.l.b16 %v3597
          %v3640 = vunpack.c.l.b16 %v3598
          %v3641 = vunpack.c.l.b16 %v3599
          %v3642 = vunpack.c.l.b16 %v3600
          %v3643 = vpack.c.b16 %v3628, %v3627
          %v3644 = vpack.c.b16 %v3630, %v3629
          %v3645 = vpack.c.b16 %v3632, %v3631
          %v3646 = vpack.c.b16 %v3634, %v3633
          %v3647 = vpack.c.b16 %v3636, %v3635
          %v3648 = vpack.c.b16 %v3638, %v3637
          %v3649 = vpack.c.b16 %v3640, %v3639
          %v3650 = vpack.c.b16 %v3642, %v3641
          %3659 = vmatprep.subr.bf16.mxu0 0
          %3660 = vmatpush1.bf16.msra.mxu0 %v3643
          %3661 = vmatprep.subr.bf16.mxu0 0
          %3662 = vmatpush1.bf16.msra.mxu0 %v3644
          %3663 = vmatprep.subr.bf16.mxu0 0
          %3664 = vmatpush1.bf16.msra.mxu0 %v3645
          %3665 = vmatprep.subr.bf16.mxu0 0
          %3666 = vmatpush1.bf16.msra.mxu0 %v3646
          %3667 = vmatprep.subr.bf16.mxu0 0
          %3668 = vmatpush1.bf16.msra.mxu0 %v3647
          %3669 = vmatprep.subr.bf16.mxu0 0
          %3670 = vmatpush1.bf16.msra.mxu0 %v3648
          %3671 = vmatprep.subr.bf16.mxu0 0
          %3672 = vmatpush1.bf16.msra.mxu0 %v3649
          %3673 = vmatprep.subr.bf16.mxu0 0
          %3674 = vmatpush1.bf16.msra.mxu0 %v3650
          %3675 = vmatprep.subr.bf16.mxu0 0
          %3676 = vmatpush1.bf16.msra.mxu0 0
          %3677 = vmatprep.subr.bf16.mxu0 0
          %3678 = vmatpush1.bf16.msra.mxu0 0
          %3679 = vmatprep.subr.bf16.mxu0 0
          %3680 = vmatpush1.bf16.msra.mxu0 0
          %3681 = vmatprep.subr.bf16.mxu0 0
          %3682 = vmatpush1.bf16.msra.mxu0 0
          %3683 = vmatprep.subr.bf16.mxu0 0
          %3684 = vmatpush1.bf16.msra.mxu0 0
          %3685 = vmatprep.subr.bf16.mxu0 0
          %3686 = vmatpush1.bf16.msra.mxu0 0
          %3687 = vmatprep.subr.bf16.mxu0 0
          %3688 = vmatpush1.bf16.msra.mxu0 0
          %3689 = vmatprep.subr.bf16.mxu0 0
          %3690 = vmatpush1.bf16.msra.mxu0 0
          %3691 = vmatprep.mubr.bf16.mxu0 0
          %3692 = vmatmul.mubr.bf16.gmra.mrb[0].mxu0 %v3601
          %v3693 = vpop.f32.mrb[0].mxu0
          %v3694 = vadd.f32 %v3609, %v3693
          %v3695 = vpop.f32.mrb[0].mxu0
          %v3696 = vpop.f32.mrb[0].mxu0
          %v3697 = vadd.f32 %v3609, %v3696
          %v3698 = vpop.f32.mrb[0].mxu0
          %3699 = vmatprep.mubr.bf16.mxu0 0
          %3700 = vmatmul.mubr.bf16.gmra.mrb[0].mxu0 %v3602
          %v3701 = vpop.f32.mrb[0].mxu0
          %v3702 = vadd.f32 %v3609, %v3701
          %v3703 = vpop.f32.mrb[0].mxu0
          %v3704 = vpop.f32.mrb[0].mxu0
          %v3705 = vadd.f32 %v3609, %v3704
          %v3706 = vpop.f32.mrb[0].mxu0
          %3707 = vmatprep.mubr.bf16.mxu0 0
          %3708 = vmatmul.mubr.bf16.gmra.mrb[0].mxu0 %v3603
          %v3709 = vpop.f32.mrb[0].mxu0
          %v3710 = vadd.f32 %v3609, %v3709
          %v3711 = vpop.f32.mrb[0].mxu0
          %v3712 = vpop.f32.mrb[0].mxu0
          %v3713 = vadd.f32 %v3609, %v3712
          %v3714 = vpop.f32.mrb[0].mxu0
          %3715 = vdwg.mxu0
          %v3716 = vadd.f32 %v3335, %v3694
          %v3717 = vadd.f32 %v3336, %v3697
          %v3718 = vadd.f32 %v3337, %v3702
          %v3719 = vadd.f32 %v3338, %v3705
          %v3720 = vadd.f32 %v3339, %v3710
          %v3721 = vadd.f32 %v3340, %v3713
          %v3722 = vld [vmem:[%s17] sm:$0x1]
          %v3723 = vld [vmem:[%s18] sm:$0x1]
          %v3724 = vld [vmem:[%s19] sm:$0xf]
          %v3725 = vld [vmem:[%s19 + $0x4] sm:$0xf]
          %v3726 = vld [vmem:[%s19 + $0x8] sm:$0xf]
          %v3727 = vld [vmem:[%s19 + $0xc] sm:$0xf]
          %v3728 = vsel %vm1107, %v3716, 0.0
          %3729 = vadd.xlane.f32.xlu0 %v3728
          %v3730 = vpop.xlane.xlu0 %3729
          %v3731 = vsel %vm1107, %v3717, 0.0
          %3732 = vadd.xlane.f32.xlu0 %v3731
          %v3733 = vpop.xlane.xlu0 %3732
          %v3734 = vsel %vm1107, %v3718, 0.0
          %3735 = vadd.xlane.f32.xlu0 %v3734
          %v3736 = vpop.xlane.xlu0 %3735
          %v3737 = vsel %vm1107, %v3719, 0.0
          %3738 = vadd.xlane.f32.xlu0 %v3737
          %v3739 = vpop.xlane.xlu0 %3738
          %v3740 = vsel %vm1107, %v3720, 0.0
          %3741 = vadd.xlane.f32.xlu0 %v3740
          %v3742 = vpop.xlane.xlu0 %3741
          %v3743 = vsel %vm1107, %v3721, 0.0
          %3744 = vadd.xlane.f32.xlu0 %v3743
          %v3745 = vpop.xlane.xlu0 %3744
          %v3746 = vmul.f32 %v3730, %v1126
          %v3747 = vmul.f32 %v3733, %v1126
          %v3748 = vmul.f32 %v3736, %v1126
          %v3749 = vmul.f32 %v3739, %v1126
          %v3750 = vmul.f32 %v3742, %v1126
          %v3751 = vmul.f32 %v3745, %v1126
          %v3752 = vsub.f32 %v3716, %v3746
          %v3753 = vsub.f32 %v3717, %v3747
          %v3754 = vsub.f32 %v3718, %v3748
          %v3755 = vsub.f32 %v3719, %v3749
          %v3756 = vsub.f32 %v3720, %v3750
          %v3757 = vsub.f32 %v3721, %v3751
          %v3758 = vmul.f32 %v3752, %v3752
          %v3759 = vmul.f32 %v3753, %v3753
          %v3760 = vmul.f32 %v3754, %v3754
          %v3761 = vmul.f32 %v3755, %v3755
          %v3762 = vmul.f32 %v3756, %v3756
          %v3763 = vmul.f32 %v3757, %v3757
          %v3764 = vsel %vm1107, %v3758, 0.0
          %3765 = vadd.xlane.f32.xlu0 %v3764
          %v3766 = vpop.xlane.xlu0 %3765
          %v3767 = vsel %vm1107, %v3759, 0.0
          %3768 = vadd.xlane.f32.xlu0 %v3767
          %v3769 = vpop.xlane.xlu0 %3768
          %v3770 = vsel %vm1107, %v3760, 0.0
          %3771 = vadd.xlane.f32.xlu0 %v3770
          %v3772 = vpop.xlane.xlu0 %3771
          %v3773 = vsel %vm1107, %v3761, 0.0
          %3774 = vadd.xlane.f32.xlu0 %v3773
          %v3775 = vpop.xlane.xlu0 %3774
          %v3776 = vsel %vm1107, %v3762, 0.0
          %3777 = vadd.xlane.f32.xlu0 %v3776
          %v3778 = vpop.xlane.xlu0 %3777
          %v3779 = vsel %vm1107, %v3763, 0.0
          %3780 = vadd.xlane.f32.xlu0 %v3779
          %v3781 = vpop.xlane.xlu0 %3780
          %v3782 = vmul.f32 %v3766, %v1126
          %v3783 = vmul.f32 %v3769, %v1126
          %v3784 = vmul.f32 %v3772, %v1126
          %v3785 = vmul.f32 %v3775, %v1126
          %v3786 = vmul.f32 %v3778, %v1126
          %v3787 = vmul.f32 %v3781, %v1126
          %v3788 = vadd.f32 %v3782, 1e-05
          %v3789 = vadd.f32 %v3783, 1e-05
          %v3790 = vadd.f32 %v3784, 1e-05
          %v3791 = vadd.f32 %v3785, 1e-05
          %v3792 = vadd.f32 %v3786, 1e-05
          %v3793 = vadd.f32 %v3787, 1e-05
          %v3794 = vrsqrt.pop %v3788
          %v3795 = vrsqrt.pop %v3789
          %v3796 = vrsqrt.pop %v3790
          %v3797 = vrsqrt.pop %v3791
          %v3798 = vrsqrt.pop %v3792
          %v3799 = vrsqrt.pop %v3793
          %v3800 = vmul.f32 %v3752, %v3794
          %v3801 = vmul.f32 %v3753, %v3795
          %v3802 = vmul.f32 %v3754, %v3796
          %v3803 = vmul.f32 %v3755, %v3797
          %v3804 = vmul.f32 %v3756, %v3798
          %v3805 = vmul.f32 %v3757, %v3799
          %v3807 = vlaneseq
          %v3808 = vshrl.u32 %v3807, 7
          %v3809 = vsub.s32 0, %v3808
          %v3810 = vrot.slane %v3722, %v3809
          %v3812 = vmul.f32 %v3800, %v3810
          %v3813 = vmul.f32 %v3801, %v3810
          %v3814 = vmul.f32 %v3802, %v3810
          %v3815 = vmul.f32 %v3803, %v3810
          %v3816 = vmul.f32 %v3804, %v3810
          %v3817 = vmul.f32 %v3805, %v3810
          %v3819 = vlaneseq
          %v3820 = vshrl.u32 %v3819, 7
          %v3821 = vsub.s32 0, %v3820
          %v3822 = vrot.slane %v3723, %v3821
          %v3824 = vadd.f32 %v3812, %v3822
          %v3825 = vadd.f32 %v3813, %v3822
          %v3826 = vadd.f32 %v3814, %v3822
          %v3827 = vadd.f32 %v3815, %v3822
          %v3828 = vadd.f32 %v3816, %v3822
          %v3829 = vadd.f32 %v3817, %v3822
          %v3830 = vpack.c.bf16 %v3825, %v3824
          %v3831 = vpack.c.bf16 %v3827, %v3826
          %v3832 = vpack.c.bf16 %v3829, %v3828
          %v3837 = vunpack.c.l.b16 %v3724
          %v3838 = vunpack.c.l.b16 %v3725
          %v3839 = vunpack.c.l.b16 %v3726
          %v3840 = vunpack.c.l.b16 %v3727
          %v3841 = vpack.c.b16 %v3838, %v3837
          %v3842 = vpack.c.b16 %v3840, %v3839
          %v3846 = vsel %vm1107, %v3830, 0
          %v3849 = vsel %vm1107, %v3831, 0
          %v3852 = vsel %vm1107, %v3832, 0
          %3854 = vmatprep.subr.bf16.mxu0 0
          %3855 = vmatpush1.bf16.msra.mxu0 %v3841
          %3856 = vmatprep.subr.bf16.mxu0 0
          %3857 = vmatpush1.bf16.msra.mxu0 %v3842
          %3858 = vmatprep.subr.bf16.mxu0 0
          %3859 = vmatpush1.bf16.msra.mxu0 0
          %3860 = vmatprep.subr.bf16.mxu0 0
          %3861 = vmatpush1.bf16.msra.mxu0 0
          %3862 = vmatprep.subr.bf16.mxu0 0
          %3863 = vmatpush1.bf16.msra.mxu0 0
          %3864 = vmatprep.subr.bf16.mxu0 0
          %3865 = vmatpush1.bf16.msra.mxu0 0
          %3866 = vmatprep.subr.bf16.mxu0 0
          %3867 = vmatpush1.bf16.msra.mxu0 0
          %3868 = vmatprep.subr.bf16.mxu0 0
          %3869 = vmatpush1.bf16.msra.mxu0 0
          %3870 = vmatprep.subr.bf16.mxu0 0
          %3871 = vmatpush1.bf16.msra.mxu0 0
          %3872 = vmatprep.subr.bf16.mxu0 0
          %3873 = vmatpush1.bf16.msra.mxu0 0
          %3874 = vmatprep.subr.bf16.mxu0 0
          %3875 = vmatpush1.bf16.msra.mxu0 0
          %3876 = vmatprep.subr.bf16.mxu0 0
          %3877 = vmatpush1.bf16.msra.mxu0 0
          %3878 = vmatprep.subr.bf16.mxu0 0
          %3879 = vmatpush1.bf16.msra.mxu0 0
          %3880 = vmatprep.subr.bf16.mxu0 0
          %3881 = vmatpush1.bf16.msra.mxu0 0
          %3882 = vmatprep.subr.bf16.mxu0 0
          %3883 = vmatpush1.bf16.msra.mxu0 0
          %3884 = vmatprep.subr.bf16.mxu0 0
          %3885 = vmatpush1.bf16.msra.mxu0 0
          %3886 = vmatprep.mubr.bf16.mxu0 0
          %3887 = vmatmul.mubr.bf16.gmra.mrb[0].mxu0 %v3846
          %v3888 = vpop.f32.mrb[0].mxu0
          %v3889 = vadd.f32 0.0, %v3888
          %v3890 = vpop.f32.mrb[0].mxu0
          %v3891 = vpop.f32.mrb[0].mxu0
          %v3892 = vadd.f32 0.0, %v3891
          %v3893 = vpop.f32.mrb[0].mxu0
          %3894 = vmatprep.mubr.bf16.mxu0 0
          %3895 = vmatmul.mubr.bf16.gmra.mrb[0].mxu0 %v3849
          %v3896 = vpop.f32.mrb[0].mxu0
          %v3897 = vadd.f32 0.0, %v3896
          %v3898 = vpop.f32.mrb[0].mxu0
          %v3899 = vpop.f32.mrb[0].mxu0
          %v3900 = vadd.f32 0.0, %v3899
          %v3901 = vpop.f32.mrb[0].mxu0
          %3902 = vmatprep.mubr.bf16.mxu0 0
          %3903 = vmatmul.mubr.bf16.gmra.mrb[0].mxu0 %v3852
          %v3904 = vpop.f32.mrb[0].mxu0
          %v3905 = vadd.f32 0.0, %v3904
          %v3906 = vpop.f32.mrb[0].mxu0
          %v3907 = vpop.f32.mrb[0].mxu0
          %v3908 = vadd.f32 0.0, %v3907
          %v3909 = vpop.f32.mrb[0].mxu0
          %3910 = vdwg.mxu0
          %3911 = vst.msk [vmem:[%s864] sm:$0xff] %vm2012, %v3889
          %3912 = vst.msk [vmem:[%s864 + $0x8] sm:$0xff] %vm2012, %v3892
          %3913 = vst.msk [vmem:[%s864 + $0x10] sm:$0xff] %vm2012, %v3897
          %3914 = vst.msk [vmem:[%s864 + $0x18] sm:$0xff] %vm2012, %v3900
          %3915 = vst.msk [vmem:[%s864 + $0x20] sm:$0xff] %vm2012, %v3905
          %3916 = vst.msk [vmem:[%s864 + $0x28] sm:$0xff] %vm2012, %v3908
          %vm3917 = vcmask 253952
          %v3918 = vsel %vm3917, %v3224, 0.0
          %3919 = vadd.xlane.f32.xlu0 %v3918
          %v3920 = vpop.xlane.xlu0 %3919
          %v3921 = vmul.f32 %v3920, %v1126
          %v3922 = vsub.f32 %v3224, %v3921
          %v3923 = vmul.f32 %v3922, %v3922
          %v3924 = vsel %vm3917, %v3923, 0.0
          %3925 = vadd.xlane.f32.xlu0 %v3924
          %v3926 = vpop.xlane.xlu0 %3925
          %v3927 = vmul.f32 %v3926, %v1126
          %v3928 = vadd.f32 %v3927, 1e-05
          %v3929 = vrsqrt.pop %v3928
          %v3930 = vmul.f32 %v3922, %v3929
          %v3931 = vmul.f32 %v3930, %v3722
          %v3932 = vadd.f32 %v3931, %v3723
          %v3933 = vpack.c.bf16 %v3932, %v3932
          %v3935 = vsel %vm1107, %v3933, 0
          %3937 = vmatprep.subr.bf16.mxu0 0
          %3938 = vmatpush1.bf16.msra.mxu0 %v3841
          %3939 = vmatprep.subr.bf16.mxu0 0
          %3940 = vmatpush1.bf16.msra.mxu0 %v3842
          %3941 = vmatprep.subr.bf16.mxu0 0
          %3942 = vmatpush1.bf16.msra.mxu0 0
          %3943 = vmatprep.subr.bf16.mxu0 0
          %3944 = vmatpush1.bf16.msra.mxu0 0
          %3945 = vmatprep.subr.bf16.mxu0 0
          %3946 = vmatpush1.bf16.msra.mxu0 0
          %3947 = vmatprep.subr.bf16.mxu0 0
          %3948 = vmatpush1.bf16.msra.mxu0 0
          %3949 = vmatprep.subr.bf16.mxu0 0
          %3950 = vmatpush1.bf16.msra.mxu0 0
          %3951 = vmatprep.subr.bf16.mxu0 0
          %3952 = vmatpush1.bf16.msra.mxu0 0
          %3953 = vmatprep.subr.bf16.mxu0 0
          %3954 = vmatpush1.bf16.msra.mxu0 0
          %3955 = vmatprep.subr.bf16.mxu0 0
          %3956 = vmatpush1.bf16.msra.mxu0 0
          %3957 = vmatprep.subr.bf16.mxu0 0
          %3958 = vmatpush1.bf16.msra.mxu0 0
          %3959 = vmatprep.subr.bf16.mxu0 0
          %3960 = vmatpush1.bf16.msra.mxu0 0
          %3961 = vmatprep.subr.bf16.mxu0 0
          %3962 = vmatpush1.bf16.msra.mxu0 0
          %3963 = vmatprep.subr.bf16.mxu0 0
          %3964 = vmatpush1.bf16.msra.mxu0 0
          %3965 = vmatprep.subr.bf16.mxu0 0
          %3966 = vmatpush1.bf16.msra.mxu0 0
          %3967 = vmatprep.subr.bf16.mxu0 0
          %3968 = vmatpush1.bf16.msra.mxu0 0
          %3969 = vmatprep.mubr.bf16.mxu0 0
          %3970 = vmatmul.mubr.bf16.gmra.mrb[0].mxu0 %v3935
          %v3971 = vpop.f32.mrb[0].mxu0
          %v3972 = vadd.f32 0.0, %v3971
          %v3973 = vpop.f32.mrb[0].mxu0
          %v3974 = vpop.f32.mrb[0].mxu0
          %v3975 = vpop.f32.mrb[0].mxu0
          %3976 = vdwg.mxu0
          %v3977 = vsel %vm3917, %v3227, 0.0
          %3978 = vadd.xlane.f32.xlu0 %v3977
          %v3979 = vpop.xlane.xlu0 %3978
          %v3980 = vmul.f32 %v3979, %v1126
          %v3981 = vsub.f32 %v3227, %v3980
          %v3982 = vmul.f32 %v3981, %v3981
          %v3983 = vsel %vm3917, %v3982, 0.0
          %3984 = vadd.xlane.f32.xlu0 %v3983
          %v3985 = vpop.xlane.xlu0 %3984
          %v3986 = vmul.f32 %v3985, %v1126
          %v3987 = vadd.f32 %v3986, 1e-05
          %v3988 = vrsqrt.pop %v3987
          %v3989 = vmul.f32 %v3981, %v3988
          %v3990 = vmul.f32 %v3989, %v3722
          %v3991 = vadd.f32 %v3990, %v3723
          %v3992 = vpack.c.bf16 %v3991, %v3991
          %v3994 = vsel %vm1107, %v3992, 0
          %3996 = vmatprep.subr.bf16.mxu0 0
          %3997 = vmatpush1.bf16.msra.mxu0 %v3841
          %3998 = vmatprep.subr.bf16.mxu0 0
          %3999 = vmatpush1.bf16.msra.mxu0 %v3842
          %4000 = vmatprep.subr.bf16.mxu0 0
          %4001 = vmatpush1.bf16.msra.mxu0 0
          %4002 = vmatprep.subr.bf16.mxu0 0
          %4003 = vmatpush1.bf16.msra.mxu0 0
          %4004 = vmatprep.subr.bf16.mxu0 0
          %4005 = vmatpush1.bf16.msra.mxu0 0
          %4006 = vmatprep.subr.bf16.mxu0 0
          %4007 = vmatpush1.bf16.msra.mxu0 0
          %4008 = vmatprep.subr.bf16.mxu0 0
          %4009 = vmatpush1.bf16.msra.mxu0 0
          %4010 = vmatprep.subr.bf16.mxu0 0
          %4011 = vmatpush1.bf16.msra.mxu0 0
          %4012 = vmatprep.subr.bf16.mxu0 0
          %4013 = vmatpush1.bf16.msra.mxu0 0
          %4014 = vmatprep.subr.bf16.mxu0 0
          %4015 = vmatpush1.bf16.msra.mxu0 0
          %4016 = vmatprep.subr.bf16.mxu0 0
          %4017 = vmatpush1.bf16.msra.mxu0 0
          %4018 = vmatprep.subr.bf16.mxu0 0
          %4019 = vmatpush1.bf16.msra.mxu0 0
          %4020 = vmatprep.subr.bf16.mxu0 0
          %4021 = vmatpush1.bf16.msra.mxu0 0
          %4022 = vmatprep.subr.bf16.mxu0 0
          %4023 = vmatpush1.bf16.msra.mxu0 0
          %4024 = vmatprep.subr.bf16.mxu0 0
          %4025 = vmatpush1.bf16.msra.mxu0 0
          %4026 = vmatprep.subr.bf16.mxu0 0
          %4027 = vmatpush1.bf16.msra.mxu0 0
          %4028 = vmatprep.mubr.bf16.mxu0 0
          %4029 = vmatmul.mubr.bf16.gmra.mrb[0].mxu0 %v3994
          %v4030 = vpop.f32.mrb[0].mxu0
          %v4031 = vadd.f32 0.0, %v4030
          %v4032 = vpop.f32.mrb[0].mxu0
          %v4033 = vpop.f32.mrb[0].mxu0
          %v4034 = vpop.f32.mrb[0].mxu0
          %4035 = vdwg.mxu0
          %v4037 = vrot.slane %v4031, 7
          %vm4039 = vcmask 1040384
          %v4040 = vsel %vm4039, %v3972, %v4037
          %vm4041 = vcmask 123904
          %4042 = vst.msk [vmem:[#allocation4] sm:$0x3] %vm4041, %v4040
        $region108: #{vit_forward_pallas.1} parent=99 // pred_fallthru
          _
        %p4043 = scmp.lt.s32.totalorder %s38, 0
        %s4044 = scalar_select %p4043, %s38, 0
        %s4045 = smul.addr %s4044, 6
        %s4046 = smul.addr %s4045, 8
        %s4047 = scalar_lea.vmem %s21, %s4046
        // Predicated region
        $region109: #{vit_forward_pallas.1} parent=99 // pred_check
          %p4048 = pneg %p549
        $region110: #{vit_forward_pallas.1} parent=99 // pred_check_branch
          %4050 = sbr.rel (%p4048) target = $region112
        $region111: #{vit_forward_pallas.1} parent=99 // pred_region
          %s4052 = ssub.s32 32, 32
          %4053 = vsyncadd [#allocation5], %s4052
          %s4054 = smul.addr %s38, 32
          %s4055 = scalar_lea.hbm %s20, %s4054
          %s4057 = sshll.u32 [#allocation4], 4
          %s4058 = int_to_ptr.vmem [resolvable:$true] %s4057
          %4060 = dma.vmem_to_hbm [thread:$0]  %s4058, 32, %s4055, [#allocation5]
        $region112: #{vit_forward_pallas.1} parent=99 // pred_fallthru
          _
        // Predicated region
        $region113: #{vit_forward_pallas.1} parent=99 // pred_check
          %p4061 = pneg %p575
        $region114: #{vit_forward_pallas.1} parent=99 // pred_check_branch
          %4063 = sbr.rel (%p4061) target = $region116
        $region115: #{vit_forward_pallas.1} parent=99 // pred_region
          _
        $region116: #{vit_forward_pallas.1} parent=99 // pred_fallthru
          _
        // Predicated region
        $region117: #{vit_forward_pallas.1} parent=99 // pred_check
          %p4064 = pneg %p549
        $region118: #{vit_forward_pallas.1} parent=99 // pred_check_branch
          %4066 = sbr.rel (%p4064) target = $region120
        $region119: #{vit_forward_pallas.1} parent=99 // pred_region
          %4067 = dma.done [#allocation5], 32
        $region120: #{vit_forward_pallas.1} parent=99 // pred_fallthru
          _
        // Predicated region
        $region121: #{vit_forward_pallas.1} parent=99 // pred_check
          %p4068 = pneg %p575
        $region122: #{vit_forward_pallas.1} parent=99 // pred_check_branch
          %4070 = sbr.rel (%p4068) target = $region124
        $region123: #{vit_forward_pallas.1} parent=99 // pred_region
          %p4071 = scmp.lt.s32.totalorder %s38, 0
          %s4072 = scalar_select %p4071, %s38, 0
          %s4073 = smul.addr %s4072, 6
          %s4074 = smul.addr %s4073, 8
          %s4075 = scalar_lea.vmem %s21, %s4074
        $region124: #{vit_forward_pallas.1} parent=99 // pred_fallthru
          _
      $region100: #{vit_forward_pallas.1} parent=5 // pred_fallthru
        _
      %p4076 = scmp.le.s32.totalorder 2, %s29
      // Predicated region
      $region125: #{vit_forward_pallas.1} parent=5 // pred_check
        %p4077 = pneg %p4076
      $region126: #{vit_forward_pallas.1} parent=5 // pred_check_branch
        %4079 = sbr.rel (%p4077) target = $region128
      $region127: #{vit_forward_pallas.1} parent=5 // pred_region
        %s4080 = ssub.s32 %s29, 2
      $region128: #{vit_forward_pallas.1} parent=5 // pred_fallthru
        _
    $region6: #{vit_forward_pallas.1} parent=1 // loop_footer
      %s33 = sadd.s32 1, %s29
    $region7: #{vit_forward_pallas.1} parent=1 // loop_footer_branch
      %28 = sbr.rel target = $region3
    $region8: #{vit_forward_pallas.1} parent=1 // loop_exit
      _
    %4081 = vsyncpa [#allocation5], 1
    %s4082 = scalar_lea.sflag [#allocation5], 1
    %4083 = vsyncpa %s4082, 1

</llo_original>
